<compile_context>
chip_gen: v7x
topology: tpu7x:2x2x1
jax: 0.10.0
libtpu: 0.0.40
codegen_flags: <defaults>
</compile_context>

<pallas_src>
import functools

import jax
import jax.numpy as jnp
from jax.experimental import pallas as pl
from jax.experimental.pallas import tpu as pltpu

FFT_CONV1D_KERNEL_SIZE = (9, 1)   # hp.fft_conv1d_kernel_size (FastSpeech default)
LN_EPS = 1e-5                     # nn.LayerNorm default eps


def _round_up(a, m):
    return ((a + m - 1) // m) * m


def _vmem_capacity_bytes():
    try:
        return int(pltpu.get_tpu_info().vmem_capacity_bytes)
    except Exception:
        return 64 * 1024 * 1024   # conservative (v7x-sized) fallback


def pwff_kernel(xp_ref, xa_ref, xn_ref, w1_ref, b1_ref, w2_ref, b2_ref,
                gamma_ref, beta_ref, o_ref, *, k1, k2, tile_t, halo_rows, seq_len):
    """One (batch, time-tile) step: conv1 -> relu -> conv2 -> +res -> LN."""
    pad1 = (k1 - 1) // 2
    pad2 = (k2 - 1) // 2
    lpad = pad1 + pad2
    off = halo_rows - lpad            # first row of the fetched window the convs use
    th = tile_t + k2 - 1              # conv1 output rows needed (incl. conv2 halo)
    t = pl.program_id(1)

    # Small halo blocks; rows outside the valid sequence are the convs' zero padding.
    xp = xp_ref[...]
    xp = jnp.where(t == 0, jnp.zeros_like(xp), xp)
    xn = xn_ref[...]
    xn = jnp.where(t == pl.num_programs(1) - 1, jnp.zeros_like(xn), xn)
    xa = xa_ref[...].astype(jnp.float32)           # residual, sublane-aligned, f32

    # bf16 MXU feed: (tile_t + 2*halo_rows, d_in).
    xw = jnp.concatenate(
        [xp.astype(jnp.bfloat16), xa.astype(jnp.bfloat16), xn.astype(jnp.bfloat16)],
        axis=0)

    # ---- w_1 : Conv1d(d_in -> d_hid, kernel k1) as ONE im2col matmul ----
    # xcol[m, k*d_in + c] = x[tile_start - pad2 + m - pad1 + k, c]
    xcol = jnp.concatenate([xw[k + off:k + off + th] for k in range(k1)], axis=-1)
    h = jnp.dot(xcol, w1_ref[...], preferred_element_type=jnp.float32) + b1_ref[...]
    h = jnp.maximum(h, 0.0)                         # (th, d_hid) f32

    if k2 > 1:
        # conv2's zero padding pads h (not x): h rows outside [0, seq_len) are zero.
        j = jax.lax.broadcasted_iota(jnp.int32, (th, 1), 0) + t * tile_t - pad2
        h = jnp.where((j >= 0) & (j < seq_len), h, 0.0)
    hb = h.astype(jnp.bfloat16)

    # ---- w_2 : Conv1d(d_hid -> d_in, kernel k2) as ONE im2col matmul ----
    hcol = jnp.concatenate([hb[k:k + tile_t] for k in range(k2)], axis=-1)
    y = jnp.dot(hcol, w2_ref[...], preferred_element_type=jnp.float32) + b2_ref[...]

    # TODO(synk): dropout is stochastic training-only; eval-mode identity here.

    # ---- residual + LayerNorm over last dim (f32) ----
    z = y + xa
    mean = jnp.mean(z, axis=-1, keepdims=True)
    var = jnp.mean((z - mean) ** 2, axis=-1, keepdims=True)
    zn = (z - mean) * jax.lax.rsqrt(var + LN_EPS)
    o_ref[...] = (zn * gamma_ref[...] + beta_ref[...]).astype(o_ref.dtype)


def positionwise_feed_forward(x, w1, b1, w2, b2, gamma, beta, *, tile_t=None):
    """x: (B, T, d_in).  w1: (k1, d_in, d_hid), w2: (k2, d_hid, d_in)."""
    B, T, d_in = x.shape
    k1, _, d_hid = w1.shape
    k2 = w2.shape[0]
    assert k1 % 2 == 1 and k2 % 2 == 1, "odd conv kernel sizes expected ('same' conv)"
    pad1, pad2 = (k1 - 1) // 2, (k2 - 1) // 2
    lpad = pad1 + pad2

    vmem_cap = _vmem_capacity_bytes()
    if tile_t is None:
        # Bigger time tiles on 128 MiB parts (v5e/v6e); stay tighter on v7x (64 MiB).
        tile_t = 512 if vmem_cap >= 128 * 1024 * 1024 else 256

    # Halo block: sublane-aligned and big enough for both convs' receptive field.
    halo_rows = max(8, _round_up(lpad, 8))
    tile_t = max(halo_rows, min(tile_t, _round_up(T, halo_rows)))
    tile_t = _round_up(tile_t, halo_rows)
    T_pad = _round_up(T, tile_t)

    # Only pad if T doesn't divide the tile (appended zeros == conv zero padding).
    x_in = x if T_pad == T else jnp.pad(x, ((0, 0), (0, T_pad - T), (0, 0)))
    nt = T_pad // tile_t
    bpr = tile_t // halo_rows          # halo blocks per tile
    nblk = T_pad // halo_rows          # total halo-sized blocks along time

    # Weights streamed in bf16, pre-reshaped for the im2col matmuls.
    w1_r = w1.astype(jnp.bfloat16).reshape(k1 * d_in, d_hid)
    w2_r = w2.astype(jnp.bfloat16).reshape(k2 * d_hid, d_in)
    b1_r = b1.reshape(1, d_hid).astype(jnp.float32)
    b2_r = b2.reshape(1, d_in).astype(jnp.float32)
    g_r = gamma.reshape(1, d_in).astype(jnp.float32)
    be_r = beta.reshape(1, d_in).astype(jnp.float32)

    kernel = functools.partial(pwff_kernel, k1=k1, k2=k2, tile_t=tile_t,
                               halo_rows=halo_rows, seq_len=T)

    prev_map = lambda b, t: (b, jnp.maximum(t * bpr - 1, 0), 0)
    main_map = lambda b, t: (b, t, 0)
    next_map = lambda b, t: (b, jnp.minimum((t + 1) * bpr, nblk - 1), 0)

    def call(single_buffer_weights):
        def wspec(shape):
            imap = lambda b, t, _n=len(shape): (0,) * _n
            if single_buffer_weights:
                return pl.BlockSpec(shape, imap, pipeline_mode=pl.Buffered(1))
            return pl.BlockSpec(shape, imap)

        return pl.pallas_call(
            kernel,
            out_shape=jax.ShapeDtypeStruct((B, T_pad, d_in), x.dtype),
            grid=(B, nt),
            in_specs=[
                pl.BlockSpec((None, halo_rows, d_in), prev_map),   # left halo (8 rows)
                pl.BlockSpec((None, tile_t, d_in), main_map),      # main tile / residual
                pl.BlockSpec((None, halo_rows, d_in), next_map),   # right halo (8 rows)
                wspec((k1 * d_in, d_hid)),                         # W1 (bf16, im2col layout)
                wspec((1, d_hid)),                                 # b1
                wspec((k2 * d_hid, d_in)),                         # W2 (bf16, im2col layout)
                wspec((1, d_in)),                                  # b2
                wspec((1, d_in)),                                  # gamma
                wspec((1, d_in)),                                  # beta
            ],
            out_specs=pl.BlockSpec((None, tile_t, d_in), main_map),
            compiler_params=pltpu.CompilerParams(
                dimension_semantics=("parallel", "parallel"),
                vmem_limit_bytes=int(min((vmem_cap * 3) // 4, 100 * 1024 * 1024))),
        )(x_in, x_in, x_in, w1_r, b1_r, w2_r, b2_r, g_r, be_r)

    try:
        out = jax.block_until_ready(call(True))   # single-buffered constant weights
    except Exception:
        out = call(False)                         # fallback: default double buffering
    return out if T_pad == T else out[:, :T, :]


def reference(x, w1, b1, w2, b2, gamma, beta):
    """Pure-JAX f32 replica of the PyTorch forward (eval mode)."""
    k1, k2 = w1.shape[0], w2.shape[0]
    xt = jnp.transpose(x, (0, 2, 1))                              # (B, d_in, T)
    h = jax.lax.conv_general_dilated(
        xt, jnp.transpose(w1, (2, 1, 0)), window_strides=(1,),
        padding=[((k1 - 1) // 2,) * 2], dimension_numbers=("NCH", "OIH", "NCH"))
    h = jax.nn.relu(h + b1.reshape(1, -1, 1))
    y = jax.lax.conv_general_dilated(
        h, jnp.transpose(w2, (2, 1, 0)), window_strides=(1,),
        padding=[((k2 - 1) // 2,) * 2], dimension_numbers=("NCH", "OIH", "NCH"))
    y = y + b2.reshape(1, -1, 1)
    z = jnp.transpose(y, (0, 2, 1)) + x
    mean = jnp.mean(z, axis=-1, keepdims=True)
    var = jnp.mean((z - mean) ** 2, axis=-1, keepdims=True)
    return (z - mean) / jnp.sqrt(var + LN_EPS) * gamma.reshape(1, 1, -1) \
        + beta.reshape(1, 1, -1)


if __name__ == "__main__":
    def run_case(seed, B, T, d_in, d_hid, k1, k2, tile_t):
        key = jax.random.PRNGKey(seed)
        kx, kw1, kb1, kw2, kb2, kg, kbt = jax.random.split(key, 7)
        x = jax.random.normal(kx, (B, T, d_in), jnp.float32)
        w1 = jax.random.normal(kw1, (k1, d_in, d_hid), jnp.float32) * 0.05
        b1 = jax.random.normal(kb1, (1, d_hid), jnp.float32) * 0.05
        w2 = jax.random.normal(kw2, (k2, d_hid, d_in), jnp.float32) * 0.05
        b2 = jax.random.normal(kb2, (1, d_in), jnp.float32) * 0.05
        gamma = 1.0 + 0.1 * jax.random.normal(kg, (1, d_in), jnp.float32)
        beta = 0.1 * jax.random.normal(kbt, (1, d_in), jnp.float32)

        out = positionwise_feed_forward(x, w1, b1, w2, b2, gamma, beta, tile_t=tile_t)
        out = jax.block_until_ready(out)
        ref = reference(x, w1, b1, w2, b2, gamma, beta)
        assert out.shape == (B, T, d_in)
        max_err = float(jnp.max(jnp.abs(out - ref)))
        # bf16 matmul inputs with f32 accumulation -> relaxed tolerance vs f32 ref.
        assert jnp.allclose(out, ref, atol=5e-2, rtol=5e-2), \
            f"mismatch vs reference (k1={k1}, k2={k2}): max abs err {max_err}"

    K1, K2 = FFT_CONV1D_KERNEL_SIZE
    # FastSpeech default kernel sizes (9, 1); small shapes, grid (2, 2).
    run_case(0, B=2, T=32, d_in=128, d_hid=256, k1=K1, k2=K2, tile_t=16)
    # Also exercise the k2 > 1 (conv2 halo + h-masking) path.
    run_case(1, B=2, T=32, d_in=128, d_hid=256, k1=9, k2=9, tile_t=16)

    print("KERNEL_OK")
</pallas_src>

<mosaic_0001>
module attributes {stable_mosaic.version = 11 : i64} {
  func.func @pwff_kernel(%arg0: i32, %arg1: i32, %arg2: memref<1x8x128xf32, #tpu.memory_space<vmem>>, %arg3: memref<1x16x128xf32, #tpu.memory_space<vmem>>, %arg4: memref<1x8x128xf32, #tpu.memory_space<vmem>>, %arg5: memref<1152x256xbf16, #tpu.memory_space<vmem>>, %arg6: memref<1x256xf32, #tpu.memory_space<vmem>>, %arg7: memref<256x128xbf16, #tpu.memory_space<vmem>>, %arg8: memref<1x128xf32, #tpu.memory_space<vmem>>, %arg9: memref<1x128xf32, #tpu.memory_space<vmem>>, %arg10: memref<1x128xf32, #tpu.memory_space<vmem>>, %arg11: memref<1x16x128xf32, #tpu.memory_space<vmem>>) attributes {dimension_semantics = [#tpu.dimension_semantics<parallel>, #tpu.dimension_semantics<parallel>], iteration_bounds = array<i64: 2, 2>, scalar_prefetch = 0 : i64, scratch_operands = 0 : i64, tpu.core_type = #tpu.core_type<tc>, window_params = [{transform_indices = @transform_0, window_bounds = array<i64: 1, 8, 128>}, {transform_indices = @transform_1, window_bounds = array<i64: 1, 16, 128>}, {transform_indices = @transform_2, window_bounds = array<i64: 1, 8, 128>}, {pipeline_mode = #tpu.pipeline_mode<synchronous>, transform_indices = @transform_3, window_bounds = array<i64: 1152, 256>}, {pipeline_mode = #tpu.pipeline_mode<synchronous>, transform_indices = @transform_4, window_bounds = array<i64: 1, 256>}, {pipeline_mode = #tpu.pipeline_mode<synchronous>, transform_indices = @transform_5, window_bounds = array<i64: 256, 128>}, {pipeline_mode = #tpu.pipeline_mode<synchronous>, transform_indices = @transform_6, window_bounds = array<i64: 1, 128>}, {pipeline_mode = #tpu.pipeline_mode<synchronous>, transform_indices = @transform_7, window_bounds = array<i64: 1, 128>}, {pipeline_mode = #tpu.pipeline_mode<synchronous>, transform_indices = @transform_8, window_bounds = array<i64: 1, 128>}, {transform_indices = @transform_9, window_bounds = array<i64: 1, 16, 128>}]} {
    %c0 = arith.constant 0 : index
    %c0_0 = arith.constant 0 : index
    %c0_1 = arith.constant 0 : index
    %0 = vector.load %arg2[%c0, %c0_0, %c0_1] : memref<1x8x128xf32, #tpu.memory_space<vmem>>, vector<1x8x128xf32>
    %1 = vector.shape_cast %0 : vector<1x8x128xf32> to vector<8x128xf32>
    %c0_i32 = arith.constant 0 : i32
    %2 = arith.cmpi eq, %arg1, %c0_i32 : i32
    %cst = arith.constant 0.000000e+00 : f32
    %3 = vector.broadcast %cst : f32 to vector<8x128xf32>
    %4 = arith.select %2, %3, %1 : vector<8x128xf32>
    %c0_2 = arith.constant 0 : index
    %c0_3 = arith.constant 0 : index
    %c0_4 = arith.constant 0 : index
    %5 = vector.load %arg4[%c0_2, %c0_3, %c0_4] : memref<1x8x128xf32, #tpu.memory_space<vmem>>, vector<1x8x128xf32>
    %6 = vector.shape_cast %5 : vector<1x8x128xf32> to vector<8x128xf32>
    %c1_i32 = arith.constant 1 : i32
    %7 = arith.cmpi eq, %arg1, %c1_i32 : i32
    %cst_5 = arith.constant 0.000000e+00 : f32
    %8 = vector.broadcast %cst_5 : f32 to vector<8x128xf32>
    %9 = arith.select %7, %8, %6 : vector<8x128xf32>
    %c0_6 = arith.constant 0 : index
    %c0_7 = arith.constant 0 : index
    %c0_8 = arith.constant 0 : index
    %10 = vector.load %arg3[%c0_6, %c0_7, %c0_8] : memref<1x16x128xf32, #tpu.memory_space<vmem>>, vector<1x16x128xf32>
    %11 = vector.shape_cast %10 : vector<1x16x128xf32> to vector<16x128xf32>
    %12 = arith.truncf %4 : vector<8x128xf32> to vector<8x128xbf16>
    %13 = arith.truncf %11 : vector<16x128xf32> to vector<16x128xbf16>
    %14 = arith.truncf %9 : vector<8x128xf32> to vector<8x128xbf16>
    %15 = tpu.concatenate %12, %13, %14 in 0 : vector<8x128xbf16>, vector<16x128xbf16>, vector<8x128xbf16> -> vector<32x128xbf16>
    %16 = vector.extract_strided_slice %15 {offsets = [4, 0], sizes = [16, 128], strides = [1, 1]} : vector<32x128xbf16> to vector<16x128xbf16>
    %17 = vector.extract_strided_slice %15 {offsets = [5, 0], sizes = [16, 128], strides = [1, 1]} : vector<32x128xbf16> to vector<16x128xbf16>
    %18 = vector.extract_strided_slice %15 {offsets = [6, 0], sizes = [16, 128], strides = [1, 1]} : vector<32x128xbf16> to vector<16x128xbf16>
    %19 = vector.extract_strided_slice %15 {offsets = [7, 0], sizes = [16, 128], strides = [1, 1]} : vector<32x128xbf16> to vector<16x128xbf16>
    %20 = vector.extract_strided_slice %15 {offsets = [8, 0], sizes = [16, 128], strides = [1, 1]} : vector<32x128xbf16> to vector<16x128xbf16>
    %21 = vector.extract_strided_slice %15 {offsets = [9, 0], sizes = [16, 128], strides = [1, 1]} : vector<32x128xbf16> to vector<16x128xbf16>
    %22 = vector.extract_strided_slice %15 {offsets = [10, 0], sizes = [16, 128], strides = [1, 1]} : vector<32x128xbf16> to vector<16x128xbf16>
    %23 = vector.extract_strided_slice %15 {offsets = [11, 0], sizes = [16, 128], strides = [1, 1]} : vector<32x128xbf16> to vector<16x128xbf16>
    %24 = vector.extract_strided_slice %15 {offsets = [12, 0], sizes = [16, 128], strides = [1, 1]} : vector<32x128xbf16> to vector<16x128xbf16>
    %25 = tpu.concatenate %16, %17, %18, %19, %20, %21, %22, %23, %24 in 1 : vector<16x128xbf16>, vector<16x128xbf16>, vector<16x128xbf16>, vector<16x128xbf16>, vector<16x128xbf16>, vector<16x128xbf16>, vector<16x128xbf16>, vector<16x128xbf16>, vector<16x128xbf16> -> vector<16x1152xbf16>
    %c0_9 = arith.constant 0 : index
    %c0_10 = arith.constant 0 : index
    %26 = vector.load %arg5[%c0_9, %c0_10] : memref<1152x256xbf16, #tpu.memory_space<vmem>>, vector<1152x256xbf16>
    %cst_11 = arith.constant dense<0.000000e+00> : vector<16x256xf32>
    %27 = tpu.matmul %25, %26, %cst_11 {dimension_numbers = #tpu.dot_dimension_numbers<[1], [0], [0], [1], [0, 0, 1, 1], [], []>} : vector<16x1152xbf16>, vector<1152x256xbf16>, vector<16x256xf32> -> vector<16x256xf32>
    %c0_12 = arith.constant 0 : index
    %c0_13 = arith.constant 0 : index
    %28 = vector.load %arg6[%c0_12, %c0_13] : memref<1x256xf32, #tpu.memory_space<vmem>>, vector<1x256xf32>
    %29 = vector.broadcast %28 : vector<1x256xf32> to vector<16x256xf32>
    %30 = arith.addf %27, %29 : vector<16x256xf32>
    %cst_14 = arith.constant 0.000000e+00 : f32
    %31 = vector.broadcast %cst_14 : f32 to vector<16x256xf32>
    %32 = arith.maximumf %30, %31 : vector<16x256xf32>
    %33 = arith.truncf %32 : vector<16x256xf32> to vector<16x256xbf16>
    %c0_15 = arith.constant 0 : index
    %c0_16 = arith.constant 0 : index
    %34 = vector.load %arg7[%c0_15, %c0_16] : memref<256x128xbf16, #tpu.memory_space<vmem>>, vector<256x128xbf16>
    %cst_17 = arith.constant dense<0.000000e+00> : vector<16x128xf32>
    %35 = tpu.matmul %33, %34, %cst_17 {dimension_numbers = #tpu.dot_dimension_numbers<[1], [0], [0], [1], [0, 0, 1, 1], [], []>} : vector<16x256xbf16>, vector<256x128xbf16>, vector<16x128xf32> -> vector<16x128xf32>
    %c0_18 = arith.constant 0 : index
    %c0_19 = arith.constant 0 : index
    %36 = vector.load %arg8[%c0_18, %c0_19] : memref<1x128xf32, #tpu.memory_space<vmem>>, vector<1x128xf32>
    %37 = vector.broadcast %36 : vector<1x128xf32> to vector<16x128xf32>
    %38 = arith.addf %35, %37 : vector<16x128xf32>
    %39 = arith.addf %38, %11 : vector<16x128xf32>
    %cst_20 = arith.constant dense<0.000000e+00> : vector<16xf32>
    %40 = vector.multi_reduction <add>, %39, %cst_20 [1] : vector<16x128xf32> to vector<16xf32>
    %41 = vector.shape_cast %40 : vector<16xf32> to vector<16x1xf32>
    %cst_21 = arith.constant 1.280000e+02 : f32
    %42 = vector.broadcast %cst_21 : f32 to vector<16x1xf32>
    %43 = arith.divf %41, %42 : vector<16x1xf32>
    %44 = vector.broadcast %43 : vector<16x1xf32> to vector<16x128xf32>
    %45 = arith.subf %39, %44 : vector<16x128xf32>
    %46 = arith.mulf %45, %45 : vector<16x128xf32>
    %cst_22 = arith.constant dense<0.000000e+00> : vector<16xf32>
    %47 = vector.multi_reduction <add>, %46, %cst_22 [1] : vector<16x128xf32> to vector<16xf32>
    %48 = vector.shape_cast %47 : vector<16xf32> to vector<16x1xf32>
    %cst_23 = arith.constant 1.280000e+02 : f32
    %49 = vector.broadcast %cst_23 : f32 to vector<16x1xf32>
    %50 = arith.divf %48, %49 : vector<16x1xf32>
    %51 = vector.broadcast %43 : vector<16x1xf32> to vector<16x128xf32>
    %52 = arith.subf %39, %51 : vector<16x128xf32>
    %cst_24 = arith.constant 9.99999974E-6 : f32
    %53 = vector.broadcast %cst_24 : f32 to vector<16x1xf32>
    %54 = arith.addf %50, %53 : vector<16x1xf32>
    %55 = math.rsqrt %54 : vector<16x1xf32>
    %56 = vector.broadcast %55 : vector<16x1xf32> to vector<16x128xf32>
    %57 = arith.mulf %52, %56 : vector<16x128xf32>
    %c0_25 = arith.constant 0 : index
    %c0_26 = arith.constant 0 : index
    %58 = vector.load %arg9[%c0_25, %c0_26] : memref<1x128xf32, #tpu.memory_space<vmem>>, vector<1x128xf32>
    %59 = vector.broadcast %58 : vector<1x128xf32> to vector<16x128xf32>
    %60 = arith.mulf %57, %59 : vector<16x128xf32>
    %c0_27 = arith.constant 0 : index
    %c0_28 = arith.constant 0 : index
    %61 = vector.load %arg10[%c0_27, %c0_28] : memref<1x128xf32, #tpu.memory_space<vmem>>, vector<1x128xf32>
    %62 = vector.broadcast %61 : vector<1x128xf32> to vector<16x128xf32>
    %63 = arith.addf %60, %62 : vector<16x128xf32>
    %c0_29 = arith.constant 0 : index
    %c0_30 = arith.constant 0 : index
    %c0_31 = arith.constant 0 : index
    %64 = vector.load %arg11[%c0_29, %c0_30, %c0_31] : memref<1x16x128xf32, #tpu.memory_space<vmem>>, vector<1x16x128xf32>
    %65 = vector.shape_cast %64 : vector<1x16x128xf32> to vector<16x128xf32>
    %66 = vector.shape_cast %63 : vector<16x128xf32> to vector<1x16x128xf32>
    tpu.vector_store %arg11[%c0_29, %c0_30, %c0_31], %66 {strides = array<i32>} : memref<1x16x128xf32, #tpu.memory_space<vmem>>, vector<1x16x128xf32>,
    return
  }
  func.func @transform_0(%arg0: i32, %arg1: i32) -> (i32, i32, i32) {
    %c2_i32 = arith.constant 2 : i32
    %0 = arith.muli %arg1, %c2_i32 : i32
    %c1_i32 = arith.constant 1 : i32
    %1 = arith.subi %0, %c1_i32 : i32
    %c0_i32 = arith.constant 0 : i32
    %2 = arith.maxsi %1, %c0_i32 : i32
    %c0_i32_0 = arith.constant 0 : i32
    %c0_i32_1 = arith.constant 0 : i32
    return %arg0, %2, %c0_i32_0 : i32, i32, i32
  }
  func.func @transform_1(%arg0: i32, %arg1: i32) -> (i32, i32, i32) {
    %c0_i32 = arith.constant 0 : i32
    %c0_i32_0 = arith.constant 0 : i32
    return %arg0, %arg1, %c0_i32 : i32, i32, i32
  }
  func.func @transform_2(%arg0: i32, %arg1: i32) -> (i32, i32, i32) {
    %c1_i32 = arith.constant 1 : i32
    %0 = arith.addi %arg1, %c1_i32 : i32
    %c2_i32 = arith.constant 2 : i32
    %1 = arith.muli %0, %c2_i32 : i32
    %c3_i32 = arith.constant 3 : i32
    %2 = arith.minsi %1, %c3_i32 : i32
    %c0_i32 = arith.constant 0 : i32
    %c0_i32_0 = arith.constant 0 : i32
    return %arg0, %2, %c0_i32 : i32, i32, i32
  }
  func.func @transform_3(%arg0: i32, %arg1: i32) -> (i32, i32) {
    %c0_i32 = arith.constant 0 : i32
    %c0_i32_0 = arith.constant 0 : i32
    %c0_i32_1 = arith.constant 0 : i32
    return %c0_i32, %c0_i32_0 : i32, i32
  }
  func.func @transform_4(%arg0: i32, %arg1: i32) -> (i32, i32) {
    %c0_i32 = arith.constant 0 : i32
    %c0_i32_0 = arith.constant 0 : i32
    %c0_i32_1 = arith.constant 0 : i32
    return %c0_i32, %c0_i32_0 : i32, i32
  }
  func.func @transform_5(%arg0: i32, %arg1: i32) -> (i32, i32) {
    %c0_i32 = arith.constant 0 : i32
    %c0_i32_0 = arith.constant 0 : i32
    %c0_i32_1 = arith.constant 0 : i32
    return %c0_i32, %c0_i32_0 : i32, i32
  }
  func.func @transform_6(%arg0: i32, %arg1: i32) -> (i32, i32) {
    %c0_i32 = arith.constant 0 : i32
    %c0_i32_0 = arith.constant 0 : i32
    %c0_i32_1 = arith.constant 0 : i32
    return %c0_i32, %c0_i32_0 : i32, i32
  }
  func.func @transform_7(%arg0: i32, %arg1: i32) -> (i32, i32) {
    %c0_i32 = arith.constant 0 : i32
    %c0_i32_0 = arith.constant 0 : i32
    %c0_i32_1 = arith.constant 0 : i32
    return %c0_i32, %c0_i32_0 : i32, i32
  }
  func.func @transform_8(%arg0: i32, %arg1: i32) -> (i32, i32) {
    %c0_i32 = arith.constant 0 : i32
    %c0_i32_0 = arith.constant 0 : i32
    %c0_i32_1 = arith.constant 0 : i32
    return %c0_i32, %c0_i32_0 : i32, i32
  }
  func.func @transform_9(%arg0: i32, %arg1: i32) -> (i32, i32, i32) {
    %c0_i32 = arith.constant 0 : i32
    %c0_i32_0 = arith.constant 0 : i32
    return %arg0, %arg1, %c0_i32 : i32, i32, i32
  }
}

module attributes {stable_mosaic.version = 11 : i64} {
  func.func @pwff_kernel(%arg0: i32, %arg1: i32, %arg2: memref<1x8x128xf32, #tpu.memory_space<vmem>>, %arg3: memref<1x16x128xf32, #tpu.memory_space<vmem>>, %arg4: memref<1x8x128xf32, #tpu.memory_space<vmem>>, %arg5: memref<1152x256xbf16, #tpu.memory_space<vmem>>, %arg6: memref<1x256xf32, #tpu.memory_space<vmem>>, %arg7: memref<256x128xbf16, #tpu.memory_space<vmem>>, %arg8: memref<1x128xf32, #tpu.memory_space<vmem>>, %arg9: memref<1x128xf32, #tpu.memory_space<vmem>>, %arg10: memref<1x128xf32, #tpu.memory_space<vmem>>, %arg11: memref<1x16x128xf32, #tpu.memory_space<vmem>>) attributes {dimension_semantics = [#tpu.dimension_semantics<parallel>, #tpu.dimension_semantics<parallel>], iteration_bounds = array<i64: 2, 2>, scalar_prefetch = 0 : i64, scratch_operands = 0 : i64, tpu.core_type = #tpu.core_type<tc>, window_params = [{transform_indices = @transform_0, window_bounds = array<i64: 1, 8, 128>}, {transform_indices = @transform_1, window_bounds = array<i64: 1, 16, 128>}, {transform_indices = @transform_2, window_bounds = array<i64: 1, 8, 128>}, {pipeline_mode = #tpu.pipeline_mode<synchronous>, transform_indices = @transform_3, window_bounds = array<i64: 1152, 256>}, {pipeline_mode = #tpu.pipeline_mode<synchronous>, transform_indices = @transform_4, window_bounds = array<i64: 1, 256>}, {pipeline_mode = #tpu.pipeline_mode<synchronous>, transform_indices = @transform_5, window_bounds = array<i64: 256, 128>}, {pipeline_mode = #tpu.pipeline_mode<synchronous>, transform_indices = @transform_6, window_bounds = array<i64: 1, 128>}, {pipeline_mode = #tpu.pipeline_mode<synchronous>, transform_indices = @transform_7, window_bounds = array<i64: 1, 128>}, {pipeline_mode = #tpu.pipeline_mode<synchronous>, transform_indices = @transform_8, window_bounds = array<i64: 1, 128>}, {transform_indices = @transform_9, window_bounds = array<i64: 1, 16, 128>}]} {
    %c0 = arith.constant 0 : index
    %c0_0 = arith.constant 0 : index
    %c0_1 = arith.constant 0 : index
    %0 = vector.load %arg2[%c0, %c0_0, %c0_1] : memref<1x8x128xf32, #tpu.memory_space<vmem>>, vector<1x8x128xf32>
    %1 = vector.shape_cast %0 : vector<1x8x128xf32> to vector<8x128xf32>
    %c0_i32 = arith.constant 0 : i32
    %2 = arith.cmpi eq, %arg1, %c0_i32 : i32
    %cst = arith.constant 0.000000e+00 : f32
    %3 = vector.broadcast %cst : f32 to vector<8x128xf32>
    %4 = arith.select %2, %3, %1 : vector<8x128xf32>
    %c0_2 = arith.constant 0 : index
    %c0_3 = arith.constant 0 : index
    %c0_4 = arith.constant 0 : index
    %5 = vector.load %arg4[%c0_2, %c0_3, %c0_4] : memref<1x8x128xf32, #tpu.memory_space<vmem>>, vector<1x8x128xf32>
    %6 = vector.shape_cast %5 : vector<1x8x128xf32> to vector<8x128xf32>
    %c1_i32 = arith.constant 1 : i32
    %7 = arith.cmpi eq, %arg1, %c1_i32 : i32
    %cst_5 = arith.constant 0.000000e+00 : f32
    %8 = vector.broadcast %cst_5 : f32 to vector<8x128xf32>
    %9 = arith.select %7, %8, %6 : vector<8x128xf32>
    %c0_6 = arith.constant 0 : index
    %c0_7 = arith.constant 0 : index
    %c0_8 = arith.constant 0 : index
    %10 = vector.load %arg3[%c0_6, %c0_7, %c0_8] : memref<1x16x128xf32, #tpu.memory_space<vmem>>, vector<1x16x128xf32>
    %11 = vector.shape_cast %10 : vector<1x16x128xf32> to vector<16x128xf32>
    %12 = arith.truncf %4 : vector<8x128xf32> to vector<8x128xbf16>
    %13 = arith.truncf %11 : vector<16x128xf32> to vector<16x128xbf16>
    %14 = arith.truncf %9 : vector<8x128xf32> to vector<8x128xbf16>
    %15 = tpu.concatenate %12, %13, %14 in 0 : vector<8x128xbf16>, vector<16x128xbf16>, vector<8x128xbf16> -> vector<32x128xbf16>
    %16 = vector.extract_strided_slice %15 {offsets = [4, 0], sizes = [16, 128], strides = [1, 1]} : vector<32x128xbf16> to vector<16x128xbf16>
    %17 = vector.extract_strided_slice %15 {offsets = [5, 0], sizes = [16, 128], strides = [1, 1]} : vector<32x128xbf16> to vector<16x128xbf16>
    %18 = vector.extract_strided_slice %15 {offsets = [6, 0], sizes = [16, 128], strides = [1, 1]} : vector<32x128xbf16> to vector<16x128xbf16>
    %19 = vector.extract_strided_slice %15 {offsets = [7, 0], sizes = [16, 128], strides = [1, 1]} : vector<32x128xbf16> to vector<16x128xbf16>
    %20 = vector.extract_strided_slice %15 {offsets = [8, 0], sizes = [16, 128], strides = [1, 1]} : vector<32x128xbf16> to vector<16x128xbf16>
    %21 = vector.extract_strided_slice %15 {offsets = [9, 0], sizes = [16, 128], strides = [1, 1]} : vector<32x128xbf16> to vector<16x128xbf16>
    %22 = vector.extract_strided_slice %15 {offsets = [10, 0], sizes = [16, 128], strides = [1, 1]} : vector<32x128xbf16> to vector<16x128xbf16>
    %23 = vector.extract_strided_slice %15 {offsets = [11, 0], sizes = [16, 128], strides = [1, 1]} : vector<32x128xbf16> to vector<16x128xbf16>
    %24 = vector.extract_strided_slice %15 {offsets = [12, 0], sizes = [16, 128], strides = [1, 1]} : vector<32x128xbf16> to vector<16x128xbf16>
    %25 = tpu.concatenate %16, %17, %18, %19, %20, %21, %22, %23, %24 in 1 : vector<16x128xbf16>, vector<16x128xbf16>, vector<16x128xbf16>, vector<16x128xbf16>, vector<16x128xbf16>, vector<16x128xbf16>, vector<16x128xbf16>, vector<16x128xbf16>, vector<16x128xbf16> -> vector<16x1152xbf16>
    %c0_9 = arith.constant 0 : index
    %c0_10 = arith.constant 0 : index
    %26 = vector.load %arg5[%c0_9, %c0_10] : memref<1152x256xbf16, #tpu.memory_space<vmem>>, vector<1152x256xbf16>
    %cst_11 = arith.constant dense<0.000000e+00> : vector<16x256xf32>
    %27 = tpu.matmul %25, %26, %cst_11 {dimension_numbers = #tpu.dot_dimension_numbers<[1], [0], [0], [1], [0, 0, 1, 1], [], []>} : vector<16x1152xbf16>, vector<1152x256xbf16>, vector<16x256xf32> -> vector<16x256xf32>
    %c0_12 = arith.constant 0 : index
    %c0_13 = arith.constant 0 : index
    %28 = vector.load %arg6[%c0_12, %c0_13] : memref<1x256xf32, #tpu.memory_space<vmem>>, vector<1x256xf32>
    %29 = vector.broadcast %28 : vector<1x256xf32> to vector<16x256xf32>
    %30 = arith.addf %27, %29 : vector<16x256xf32>
    %cst_14 = arith.constant 0.000000e+00 : f32
    %31 = vector.broadcast %cst_14 : f32 to vector<16x256xf32>
    %32 = arith.maximumf %30, %31 : vector<16x256xf32>
    %33 = arith.truncf %32 : vector<16x256xf32> to vector<16x256xbf16>
    %c0_15 = arith.constant 0 : index
    %c0_16 = arith.constant 0 : index
    %34 = vector.load %arg7[%c0_15, %c0_16] : memref<256x128xbf16, #tpu.memory_space<vmem>>, vector<256x128xbf16>
    %cst_17 = arith.constant dense<0.000000e+00> : vector<16x128xf32>
    %35 = tpu.matmul %33, %34, %cst_17 {dimension_numbers = #tpu.dot_dimension_numbers<[1], [0], [0], [1], [0, 0, 1, 1], [], []>} : vector<16x256xbf16>, vector<256x128xbf16>, vector<16x128xf32> -> vector<16x128xf32>
    %c0_18 = arith.constant 0 : index
    %c0_19 = arith.constant 0 : index
    %36 = vector.load %arg8[%c0_18, %c0_19] : memref<1x128xf32, #tpu.memory_space<vmem>>, vector<1x128xf32>
    %37 = vector.broadcast %36 : vector<1x128xf32> to vector<16x128xf32>
    %38 = arith.addf %35, %37 : vector<16x128xf32>
    %39 = arith.addf %38, %11 : vector<16x128xf32>
    %cst_20 = arith.constant dense<0.000000e+00> : vector<16xf32>
    %40 = vector.multi_reduction <add>, %39, %cst_20 [1] : vector<16x128xf32> to vector<16xf32>
    %41 = vector.shape_cast %40 : vector<16xf32> to vector<16x1xf32>
    %cst_21 = arith.constant 1.280000e+02 : f32
    %42 = vector.broadcast %cst_21 : f32 to vector<16x1xf32>
    %43 = arith.divf %41, %42 : vector<16x1xf32>
    %44 = vector.broadcast %43 : vector<16x1xf32> to vector<16x128xf32>
    %45 = arith.subf %39, %44 : vector<16x128xf32>
    %46 = arith.mulf %45, %45 : vector<16x128xf32>
    %cst_22 = arith.constant dense<0.000000e+00> : vector<16xf32>
    %47 = vector.multi_reduction <add>, %46, %cst_22 [1] : vector<16x128xf32> to vector<16xf32>
    %48 = vector.shape_cast %47 : vector<16xf32> to vector<16x1xf32>
    %cst_23 = arith.constant 1.280000e+02 : f32
    %49 = vector.broadcast %cst_23 : f32 to vector<16x1xf32>
    %50 = arith.divf %48, %49 : vector<16x1xf32>
    %51 = vector.broadcast %43 : vector<16x1xf32> to vector<16x128xf32>
    %52 = arith.subf %39, %51 : vector<16x128xf32>
    %cst_24 = arith.constant 9.99999974E-6 : f32
    %53 = vector.broadcast %cst_24 : f32 to vector<16x1xf32>
    %54 = arith.addf %50, %53 : vector<16x1xf32>
    %55 = math.rsqrt %54 : vector<16x1xf32>
    %56 = vector.broadcast %55 : vector<16x1xf32> to vector<16x128xf32>
    %57 = arith.mulf %52, %56 : vector<16x128xf32>
    %c0_25 = arith.constant 0 : index
    %c0_26 = arith.constant 0 : index
    %58 = vector.load %arg9[%c0_25, %c0_26] : memref<1x128xf32, #tpu.memory_space<vmem>>, vector<1x128xf32>
    %59 = vector.broadcast %58 : vector<1x128xf32> to vector<16x128xf32>
    %60 = arith.mulf %57, %59 : vector<16x128xf32>
    %c0_27 = arith.constant 0 : index
    %c0_28 = arith.constant 0 : index
    %61 = vector.load %arg10[%c0_27, %c0_28] : memref<1x128xf32, #tpu.memory_space<vmem>>, vector<1x128xf32>
    %62 = vector.broadcast %61 : vector<1x128xf32> to vector<16x128xf32>
    %63 = arith.addf %60, %62 : vector<16x128xf32>
    %c0_29 = arith.constant 0 : index
    %c0_30 = arith.constant 0 : index
    %c0_31 = arith.constant 0 : index
    %64 = vector.load %arg11[%c0_29, %c0_30, %c0_31] : memref<1x16x128xf32, #tpu.memory_space<vmem>>, vector<1x16x128xf32>
    %65 = vector.shape_cast %64 : vector<1x16x128xf32> to vector<16x128xf32>
    %66 = vector.shape_cast %63 : vector<16x128xf32> to vector<1x16x128xf32>
    tpu.vector_store %arg11[%c0_29, %c0_30, %c0_31], %66 {strides = array<i32>} : memref<1x16x128xf32, #tpu.memory_space<vmem>>, vector<1x16x128xf32>,
    return
  }
  func.func @transform_0(%arg0: i32, %arg1: i32) -> (i32, i32, i32) {
    %c2_i32 = arith.constant 2 : i32
    %0 = arith.muli %arg1, %c2_i32 : i32
    %c1_i32 = arith.constant 1 : i32
    %1 = arith.subi %0, %c1_i32 : i32
    %c0_i32 = arith.constant 0 : i32
    %2 = arith.maxsi %1, %c0_i32 : i32
    %c0_i32_0 = arith.constant 0 : i32
    %c0_i32_1 = arith.constant 0 : i32
    return %arg0, %2, %c0_i32_0 : i32, i32, i32
  }
  func.func @transform_1(%arg0: i32, %arg1: i32) -> (i32, i32, i32) {
    %c0_i32 = arith.constant 0 : i32
    %c0_i32_0 = arith.constant 0 : i32
    return %arg0, %arg1, %c0_i32 : i32, i32, i32
  }
  func.func @transform_2(%arg0: i32, %arg1: i32) -> (i32, i32, i32) {
    %c1_i32 = arith.constant 1 : i32
    %0 = arith.addi %arg1, %c1_i32 : i32
    %c2_i32 = arith.constant 2 : i32
    %1 = arith.muli %0, %c2_i32 : i32
    %c3_i32 = arith.constant 3 : i32
    %2 = arith.minsi %1, %c3_i32 : i32
    %c0_i32 = arith.constant 0 : i32
    %c0_i32_0 = arith.constant 0 : i32
    return %arg0, %2, %c0_i32 : i32, i32, i32
  }
  func.func @transform_3(%arg0: i32, %arg1: i32) -> (i32, i32) {
    %c0_i32 = arith.constant 0 : i32
    %c0_i32_0 = arith.constant 0 : i32
    %c0_i32_1 = arith.constant 0 : i32
    return %c0_i32, %c0_i32_0 : i32, i32
  }
  func.func @transform_4(%arg0: i32, %arg1: i32) -> (i32, i32) {
    %c0_i32 = arith.constant 0 : i32
    %c0_i32_0 = arith.constant 0 : i32
    %c0_i32_1 = arith.constant 0 : i32
    return %c0_i32, %c0_i32_0 : i32, i32
  }
  func.func @transform_5(%arg0: i32, %arg1: i32) -> (i32, i32) {
    %c0_i32 = arith.constant 0 : i32
    %c0_i32_0 = arith.constant 0 : i32
    %c0_i32_1 = arith.constant 0 : i32
    return %c0_i32, %c0_i32_0 : i32, i32
  }
  func.func @transform_6(%arg0: i32, %arg1: i32) -> (i32, i32) {
    %c0_i32 = arith.constant 0 : i32
    %c0_i32_0 = arith.constant 0 : i32
    %c0_i32_1 = arith.constant 0 : i32
    return %c0_i32, %c0_i32_0 : i32, i32
  }
  func.func @transform_7(%arg0: i32, %arg1: i32) -> (i32, i32) {
    %c0_i32 = arith.constant 0 : i32
    %c0_i32_0 = arith.constant 0 : i32
    %c0_i32_1 = arith.constant 0 : i32
    return %c0_i32, %c0_i32_0 : i32, i32
  }
  func.func @transform_8(%arg0: i32, %arg1: i32) -> (i32, i32) {
    %c0_i32 = arith.constant 0 : i32
    %c0_i32_0 = arith.constant 0 : i32
    %c0_i32_1 = arith.constant 0 : i32
    return %c0_i32, %c0_i32_0 : i32, i32
  }
  func.func @transform_9(%arg0: i32, %arg1: i32) -> (i32, i32, i32) {
    %c0_i32 = arith.constant 0 : i32
    %c0_i32_0 = arith.constant 0 : i32
    return %arg0, %arg1, %c0_i32 : i32, i32, i32
  }
}

</mosaic_0001>

<llo_original>
// kernel: tpu_custom_call.1
$region0: #{tpu_custom_call.1}
  #allocation0 [shape = 'u32[]', space=smem, size = 0x4, offset = 0x4, fixed_abs, tag = 'smem constant byte address 0x4 - core index']
  #allocation1 [shape = 'u32[144,128]{1,0:T(1,128)}', space=vmem, size = 0x12000, scoped, tag = 'internal scratch']
  %s0 = inlined_call_operand.hbm [shape: f32[2,32,128], index: 0, kind: input, shape index: {}]
  %s1 = inlined_call_operand.hbm [shape: f32[2,32,128], index: 1, kind: input, shape index: {}]
  %s2 = inlined_call_operand.hbm [shape: f32[2,32,128], index: 2, kind: input, shape index: {}]
  %s3 = inlined_call_operand.hbm [shape: bf16[1152,256], index: 3, kind: input, shape index: {}]
  %s4 = inlined_call_operand.vmem [shape: f32[1,256], index: 4, kind: input, shape index: {}]
  %s5 = inlined_call_operand.hbm [shape: bf16[256,128], index: 5, kind: input, shape index: {}]
  %s6 = inlined_call_operand.vmem [shape: f32[1,128], index: 6, kind: input, shape index: {}]
  %s7 = inlined_call_operand.vmem [shape: f32[1,128], index: 7, kind: input, shape index: {}]
  %s8 = inlined_call_operand.vmem [shape: f32[1,128], index: 8, kind: input, shape index: {}]
  %s9 = inlined_call_operand.hbm [shape: f32[2,32,128], index: 9, kind: output, shape index: {}]
  %s10 = sld [smem:[#allocation0]]
  $region89: #{tpu_custom_call.1} parent=0
    _
  %s12 = ssub.s32 1, %s10
  %s13 = scalar_select 0, %s12, %s10
  $region1: #{tpu_custom_call.1} parent=0
    #allocation2 [shape = 'u8[8192]{0}', space=vmem, size = 0x2000, scoped, tag = 'input window, operand 0']
    #allocation3 [shape = 's32[2]{0}', space=sflag, size = 0x8, scoped, tag = 'scoped memory for tpu_custom_call.1']
    #allocation4 [shape = 's32[2]{0}', space=sflag, size = 0x8, scoped, tag = 'scoped memory for tpu_custom_call.1']
    #allocation5 [shape = 'u8[16384]{0}', space=vmem, size = 0x4000, scoped, tag = 'input window, operand 1']
    #allocation6 [shape = 's32[2]{0}', space=sflag, size = 0x8, scoped, tag = 'scoped memory for tpu_custom_call.1']
    #allocation7 [shape = 'u8[8192]{0}', space=vmem, size = 0x2000, scoped, tag = 'input window, operand 2']
    #allocation8 [shape = 'u8[589824]{0}', space=vmem, size = 0x90000, scoped, tag = 'input window, operand 3, single buffered']
    #allocation9 [shape = 's32[1]{0}', space=sflag, size = 0x4, scoped, tag = 'scoped memory for tpu_custom_call.1']
    #allocation10 [shape = 'u8[65536]{0}', space=vmem, size = 0x10000, scoped, tag = 'input window, operand 5, single buffered']
    #allocation11 [shape = 'u8[16384]{0}', space=vmem, size = 0x4000, scoped, tag = 'output window, operand 0']
    %14 = vsyncpa [#allocation3], 0
    %s15 = scalar_lea.sflag [#allocation3], 1
    %16 = vsyncpa %s15, 0
    %17 = vsyncpa [#allocation6], 0
    %s18 = scalar_lea.sflag [#allocation6], 1
    %19 = vsyncpa %s18, 0
    %20 = vsyncpa [#allocation9], 0
    %21 = vsyncpa [#allocation4], 0
    %s22 = scalar_lea.sflag [#allocation4], 1
    %23 = vsyncpa %s22, 0
    loop: start=0, step=1, limit=6
    $region2: #{tpu_custom_call.1} parent=1 // loop_pre_header
      _
    $region3: #{tpu_custom_call.1} parent=1 // loop_header
      %s25 = sphi 0, %s29
      %p26 = scmp.ge.s32.totalorder %s25, 6
      %s32 = sphi 0, %s44
      %s33 = sphi 0, %s40
      %s34 = sphi 0, %s32
      %s35 = sphi 0, %s33
      %s36 = sphi 0, %s34
      %s37 = sphi 0, %s35
      %s57 = sphi 0, %s59
      %s60 = sphi 0, %s57
      %s61 = sphi 0, %s60
      %s77 = sphi 0, %s61
      %s85 = sphi 0, %s87
      %s88 = sphi 0, %s85
      %s89 = sphi 0, %s88
      %s105 = sphi 0, %s89
      %s121 = sphi 0, %s123
      %s124 = sphi 0, %s121
      %s125 = sphi 0, %s124
      %s141 = sphi 0, %s125
      %s145 = sphi 0, %s145
      %s147 = sphi 0, %s145
      %s148 = sphi 0, %s147
      %s162 = sphi 0, %s148
      %s166 = sphi 0, %s166
      %s168 = sphi 0, %s166
      %s169 = sphi 0, %s168
      %s183 = sphi 0, %s169
      %s187 = sphi 0, %s187
      %s189 = sphi 0, %s187
      %s190 = sphi 0, %s189
      %s204 = sphi 0, %s190
      %s208 = sphi 0, %s208
      %s210 = sphi 0, %s208
      %s211 = sphi 0, %s210
      %s225 = sphi 0, %s211
      %s229 = sphi 0, %s229
      %s231 = sphi 0, %s229
      %s232 = sphi 0, %s231
      %s246 = sphi 0, %s232
      %s250 = sphi 0, %s250
      %s252 = sphi 0, %s250
      %s253 = sphi 0, %s252
      %s267 = sphi 0, %s253
      %s275 = sphi 0, %s277
      %s278 = sphi 0, %s275
      %s279 = sphi 0, %s278
      %s295 = sphi 0, %s279
    $region4: #{tpu_custom_call.1} parent=1 // loop_header_branch
      %28 = sbr.rel (%p26) target = $region8
    $region5: #{tpu_custom_call.1} parent=1 // loop_body
      %s30 = ssub.s32 %s25, 1
      %s31 = ssub.s32 %s25, 2
      %s38 = sadd.s32 1, %s33
      %p39 = scmp.ge.s32.totalorder %s38, 2
      %s40 = scalar_select %p39, 0, %s38
      %s41 = sadd.s32 1, %s32
      %s42 = scalar_select %p39, %s41, %s32
      %p43 = scmp.ge.s32.totalorder %s42, 2
      %s44 = scalar_select %p43, 0, %s42
      %s45 = smul.u32 %s33, 2
      %s46 = ssub.s32 %s45, 1
      %p47 = scmp.gt.s32.totalorder %s46, 0
      %s48 = scalar_select %p47, %s46, 0
      %s49 = smul.u32 %s40, 2
      %s50 = ssub.s32 %s49, 1
      %p51 = scmp.gt.s32.totalorder %s50, 0
      %s52 = scalar_select %p51, %s50, 0
      %s53 = ssub.s32 %s32, %s44
      %s54 = ssub.s32 %s48, %s52
      %s55 = sor.u32 %s53, %s54
      %p56 = scmp.eq.s32.totalorder %s55, 0
      %s58 = sadd.s32 %s57, 1
      %s59 = scalar_select %p56, %s57, %s58
      %p62 = pneg %p56
      %p63 = scmp.eq.s32.totalorder %s25, 3
      %p64 = por %p62, %p63
      %p65 = scmp.ne.s32.totalorder %s57, %s60
      %p66 = scmp.eq.s32.totalorder %s25, 0
      %p67 = por %p65, %p66
      %p68 = scmp.ne.s32.totalorder %s57, %s60
      %p69 = scmp.eq.s32.totalorder %s30, 3
      %p70 = por %p68, %p69
      %p71 = scmp.ne.s32.totalorder %s60, %s61
      %p72 = scmp.eq.s32.totalorder %s30, 0
      %p73 = por %p71, %p72
      %p74 = scmp.ne.s32.totalorder %s60, %s61
      %p75 = scmp.eq.s32.totalorder %s31, 3
      %p76 = por %p74, %p75
      %p78 = scmp.ne.s32.totalorder %s61, %s77
      %p79 = scmp.eq.s32.totalorder %s31, 0
      %p80 = por %p78, %p79
      %s81 = ssub.s32 %s32, %s44
      %s82 = ssub.s32 %s33, %s40
      %s83 = sor.u32 %s81, %s82
      %p84 = scmp.eq.s32.totalorder %s83, 0
      %s86 = sadd.s32 %s85, 1
      %s87 = scalar_select %p84, %s85, %s86
      %p90 = pneg %p84
      %p91 = scmp.eq.s32.totalorder %s25, 3
      %p92 = por %p90, %p91
      %p93 = scmp.ne.s32.totalorder %s85, %s88
      %p94 = scmp.eq.s32.totalorder %s25, 0
      %p95 = por %p93, %p94
      %p96 = scmp.ne.s32.totalorder %s85, %s88
      %p97 = scmp.eq.s32.totalorder %s30, 3
      %p98 = por %p96, %p97
      %p99 = scmp.ne.s32.totalorder %s88, %s89
      %p100 = scmp.eq.s32.totalorder %s30, 0
      %p101 = por %p99, %p100
      %p102 = scmp.ne.s32.totalorder %s88, %s89
      %p103 = scmp.eq.s32.totalorder %s31, 3
      %p104 = por %p102, %p103
      %p106 = scmp.ne.s32.totalorder %s89, %s105
      %p107 = scmp.eq.s32.totalorder %s31, 0
      %p108 = por %p106, %p107
      %s109 = sadd.s32 %s33, 1
      %s110 = smul.u32 %s109, 2
      %p111 = scmp.lt.s32.totalorder %s110, 3
      %s112 = scalar_select %p111, %s110, 3
      %s113 = sadd.s32 %s40, 1
      %s114 = smul.u32 %s113, 2
      %p115 = scmp.lt.s32.totalorder %s114, 3
      %s116 = scalar_select %p115, %s114, 3
      %s117 = ssub.s32 %s32, %s44
      %s118 = ssub.s32 %s112, %s116
      %s119 = sor.u32 %s117, %s118
      %p120 = scmp.eq.s32.totalorder %s119, 0
      %s122 = sadd.s32 %s121, 1
      %s123 = scalar_select %p120, %s121, %s122
      %p126 = pneg %p120
      %p127 = scmp.eq.s32.totalorder %s25, 3
      %p128 = por %p126, %p127
      %p129 = scmp.ne.s32.totalorder %s121, %s124
      %p130 = scmp.eq.s32.totalorder %s25, 0
      %p131 = por %p129, %p130
      %p132 = scmp.ne.s32.totalorder %s121, %s124
      %p133 = scmp.eq.s32.totalorder %s30, 3
      %p134 = por %p132, %p133
      %p135 = scmp.ne.s32.totalorder %s124, %s125
      %p136 = scmp.eq.s32.totalorder %s30, 0
      %p137 = por %p135, %p136
      %p138 = scmp.ne.s32.totalorder %s124, %s125
      %p139 = scmp.eq.s32.totalorder %s31, 3
      %p140 = por %p138, %p139
      %p142 = scmp.ne.s32.totalorder %s125, %s141
      %p143 = scmp.eq.s32.totalorder %s31, 0
      %p144 = por %p142, %p143
      %s146 = sadd.s32 %s145, 1
      %p149 = scmp.eq.s32.totalorder %s25, 3
      %p150 = scmp.ne.s32.totalorder %s145, %s147
      %p151 = scmp.eq.s32.totalorder %s25, 0
      %p152 = por %p150, %p151
      %p153 = scmp.ne.s32.totalorder %s145, %s147
      %p154 = scmp.eq.s32.totalorder %s30, 3
      %p155 = por %p153, %p154
      %p156 = scmp.ne.s32.totalorder %s147, %s148
      %p157 = scmp.eq.s32.totalorder %s30, 0
      %p158 = por %p156, %p157
      %p159 = scmp.ne.s32.totalorder %s147, %s148
      %p160 = scmp.eq.s32.totalorder %s31, 3
      %p161 = por %p159, %p160
      %p163 = scmp.ne.s32.totalorder %s148, %s162
      %p164 = scmp.eq.s32.totalorder %s31, 0
      %p165 = por %p163, %p164
      %s167 = sadd.s32 %s166, 1
      %p170 = scmp.eq.s32.totalorder %s25, 3
      %p171 = scmp.ne.s32.totalorder %s166, %s168
      %p172 = scmp.eq.s32.totalorder %s25, 0
      %p173 = por %p171, %p172
      %p174 = scmp.ne.s32.totalorder %s166, %s168
      %p175 = scmp.eq.s32.totalorder %s30, 3
      %p176 = por %p174, %p175
      %p177 = scmp.ne.s32.totalorder %s168, %s169
      %p178 = scmp.eq.s32.totalorder %s30, 0
      %p179 = por %p177, %p178
      %p180 = scmp.ne.s32.totalorder %s168, %s169
      %p181 = scmp.eq.s32.totalorder %s31, 3
      %p182 = por %p180, %p181
      %p184 = scmp.ne.s32.totalorder %s169, %s183
      %p185 = scmp.eq.s32.totalorder %s31, 0
      %p186 = por %p184, %p185
      %s188 = sadd.s32 %s187, 1
      %p191 = scmp.eq.s32.totalorder %s25, 3
      %p192 = scmp.ne.s32.totalorder %s187, %s189
      %p193 = scmp.eq.s32.totalorder %s25, 0
      %p194 = por %p192, %p193
      %p195 = scmp.ne.s32.totalorder %s187, %s189
      %p196 = scmp.eq.s32.totalorder %s30, 3
      %p197 = por %p195, %p196
      %p198 = scmp.ne.s32.totalorder %s189, %s190
      %p199 = scmp.eq.s32.totalorder %s30, 0
      %p200 = por %p198, %p199
      %p201 = scmp.ne.s32.totalorder %s189, %s190
      %p202 = scmp.eq.s32.totalorder %s31, 3
      %p203 = por %p201, %p202
      %p205 = scmp.ne.s32.totalorder %s190, %s204
      %p206 = scmp.eq.s32.totalorder %s31, 0
      %p207 = por %p205, %p206
      %s209 = sadd.s32 %s208, 1
      %p212 = scmp.eq.s32.totalorder %s25, 3
      %p213 = scmp.ne.s32.totalorder %s208, %s210
      %p214 = scmp.eq.s32.totalorder %s25, 0
      %p215 = por %p213, %p214
      %p216 = scmp.ne.s32.totalorder %s208, %s210
      %p217 = scmp.eq.s32.totalorder %s30, 3
      %p218 = por %p216, %p217
      %p219 = scmp.ne.s32.totalorder %s210, %s211
      %p220 = scmp.eq.s32.totalorder %s30, 0
      %p221 = por %p219, %p220
      %p222 = scmp.ne.s32.totalorder %s210, %s211
      %p223 = scmp.eq.s32.totalorder %s31, 3
      %p224 = por %p222, %p223
      %p226 = scmp.ne.s32.totalorder %s211, %s225
      %p227 = scmp.eq.s32.totalorder %s31, 0
      %p228 = por %p226, %p227
      %s230 = sadd.s32 %s229, 1
      %p233 = scmp.eq.s32.totalorder %s25, 3
      %p234 = scmp.ne.s32.totalorder %s229, %s231
      %p235 = scmp.eq.s32.totalorder %s25, 0
      %p236 = por %p234, %p235
      %p237 = scmp.ne.s32.totalorder %s229, %s231
      %p238 = scmp.eq.s32.totalorder %s30, 3
      %p239 = por %p237, %p238
      %p240 = scmp.ne.s32.totalorder %s231, %s232
      %p241 = scmp.eq.s32.totalorder %s30, 0
      %p242 = por %p240, %p241
      %p243 = scmp.ne.s32.totalorder %s231, %s232
      %p244 = scmp.eq.s32.totalorder %s31, 3
      %p245 = por %p243, %p244
      %p247 = scmp.ne.s32.totalorder %s232, %s246
      %p248 = scmp.eq.s32.totalorder %s31, 0
      %p249 = por %p247, %p248
      %s251 = sadd.s32 %s250, 1
      %p254 = scmp.eq.s32.totalorder %s25, 3
      %p255 = scmp.ne.s32.totalorder %s250, %s252
      %p256 = scmp.eq.s32.totalorder %s25, 0
      %p257 = por %p255, %p256
      %p258 = scmp.ne.s32.totalorder %s250, %s252
      %p259 = scmp.eq.s32.totalorder %s30, 3
      %p260 = por %p258, %p259
      %p261 = scmp.ne.s32.totalorder %s252, %s253
      %p262 = scmp.eq.s32.totalorder %s30, 0
      %p263 = por %p261, %p262
      %p264 = scmp.ne.s32.totalorder %s252, %s253
      %p265 = scmp.eq.s32.totalorder %s31, 3
      %p266 = por %p264, %p265
      %p268 = scmp.ne.s32.totalorder %s253, %s267
      %p269 = scmp.eq.s32.totalorder %s31, 0
      %p270 = por %p268, %p269
      %s271 = ssub.s32 %s32, %s44
      %s272 = ssub.s32 %s33, %s40
      %s273 = sor.u32 %s271, %s272
      %p274 = scmp.eq.s32.totalorder %s273, 0
      %s276 = sadd.s32 %s275, 1
      %s277 = scalar_select %p274, %s275, %s276
      %p280 = pneg %p274
      %p281 = scmp.eq.s32.totalorder %s25, 3
      %p282 = por %p280, %p281
      %p283 = scmp.ne.s32.totalorder %s275, %s278
      %p284 = scmp.eq.s32.totalorder %s25, 0
      %p285 = por %p283, %p284
      %p286 = scmp.ne.s32.totalorder %s275, %s278
      %p287 = scmp.eq.s32.totalorder %s30, 3
      %p288 = por %p286, %p287
      %p289 = scmp.ne.s32.totalorder %s278, %s279
      %p290 = scmp.eq.s32.totalorder %s30, 0
      %p291 = por %p289, %p290
      %p292 = scmp.ne.s32.totalorder %s278, %s279
      %p293 = scmp.eq.s32.totalorder %s31, 3
      %p294 = por %p292, %p293
      %p296 = scmp.ne.s32.totalorder %s279, %s295
      %p297 = scmp.eq.s32.totalorder %s31, 0
      %p298 = por %p296, %p297
      %p299 = scmp.le.s32.totalorder 1, %s25
      %p300 = scmp.lt.s32.totalorder %s25, 5
      %p301 = pnand %p299, %p300
      %p302 = pneg %p301
      // Predicated region
      $region9: #{tpu_custom_call.1} parent=5 // pred_check
        _
      $region10: #{tpu_custom_call.1} parent=5 // pred_check_branch
        %304 = sbr.rel (%p301) target = $region12
      $region11: #{tpu_custom_call.1} parent=5 // pred_region
        %s305 = ssub.s32 %s25, 1
        // Predicated region
        $region13: #{tpu_custom_call.1} parent=11 // pred_check
          %p306 = pneg %p158
        $region14: #{tpu_custom_call.1} parent=11 // pred_check_branch
          %308 = sbr.rel (%p306) target = $region16
        $region15: #{tpu_custom_call.1} parent=11 // pred_region
          %s310 = ssub.s32 18432, 18432
          %311 = vsyncadd [#allocation9], %s310
          %s312 = sshll.u32 [#allocation8], 4
          %s313 = int_to_ptr.vmem [resolvable:$true] %s312
          %318 = dma.hbm_to_vmem [thread:$0]  %s3, 18432, %s313, [#allocation9], 128, 128, 8
        $region16: #{tpu_custom_call.1} parent=11 // pred_fallthru
          _
        // Predicated region
        $region17: #{tpu_custom_call.1} parent=11 // pred_check
          %p319 = pneg %p179
        $region18: #{tpu_custom_call.1} parent=11 // pred_check_branch
          %321 = sbr.rel (%p319) target = $region20
        $region19: #{tpu_custom_call.1} parent=11 // pred_region
          _
        $region20: #{tpu_custom_call.1} parent=11 // pred_fallthru
          _
        // Predicated region
        $region21: #{tpu_custom_call.1} parent=11 // pred_check
          %p322 = pneg %p200
        $region22: #{tpu_custom_call.1} parent=11 // pred_check_branch
          %324 = sbr.rel (%p322) target = $region24
        $region23: #{tpu_custom_call.1} parent=11 // pred_region
          %s326 = ssub.s32 2048, 2048
          %327 = vsyncadd [#allocation9], %s326
          %s328 = sshll.u32 [#allocation10], 4
          %s329 = int_to_ptr.vmem [resolvable:$true] %s328
          %334 = dma.hbm_to_vmem [thread:$0]  %s5, 2048, %s329, [#allocation9], 64, 64, 4
        $region24: #{tpu_custom_call.1} parent=11 // pred_fallthru
          _
        // Predicated region
        $region25: #{tpu_custom_call.1} parent=11 // pred_check
          %p335 = pneg %p221
        $region26: #{tpu_custom_call.1} parent=11 // pred_check_branch
          %337 = sbr.rel (%p335) target = $region28
        $region27: #{tpu_custom_call.1} parent=11 // pred_region
          _
        $region28: #{tpu_custom_call.1} parent=11 // pred_fallthru
          _
        // Predicated region
        $region29: #{tpu_custom_call.1} parent=11 // pred_check
          %p338 = pneg %p242
        $region30: #{tpu_custom_call.1} parent=11 // pred_check_branch
          %340 = sbr.rel (%p338) target = $region32
        $region31: #{tpu_custom_call.1} parent=11 // pred_region
          _
        $region32: #{tpu_custom_call.1} parent=11 // pred_fallthru
          _
        // Predicated region
        $region33: #{tpu_custom_call.1} parent=11 // pred_check
          %p341 = pneg %p263
        $region34: #{tpu_custom_call.1} parent=11 // pred_check_branch
          %343 = sbr.rel (%p341) target = $region36
        $region35: #{tpu_custom_call.1} parent=11 // pred_region
          _
        $region36: #{tpu_custom_call.1} parent=11 // pred_fallthru
          _
      $region12: #{tpu_custom_call.1} parent=5 // pred_fallthru
        _
      %p344 = scmp.lt.s32.totalorder %s25, 4
      // Predicated region
      $region37: #{tpu_custom_call.1} parent=5 // pred_check
        %p345 = pneg %p344
      $region38: #{tpu_custom_call.1} parent=5 // pred_check_branch
        %347 = sbr.rel (%p345) target = $region40
      $region39: #{tpu_custom_call.1} parent=5 // pred_region
        // Predicated region
        $region41: #{tpu_custom_call.1} parent=39 // pred_check
          %p348 = pneg %p67
        $region42: #{tpu_custom_call.1} parent=39 // pred_check_branch
          %350 = sbr.rel (%p348) target = $region44
        $region43: #{tpu_custom_call.1} parent=39 // pred_region
          %s351 = sand.u32 %s57, 1
          %s352 = scalar_lea.sflag [#allocation3], %s351
          %s353 = sand.u32 %s57, 1
          %s354 = smul.addr %s353, 8
          %s355 = scalar_lea.vmem [#allocation2], %s354
          %s356 = smul.u32 %s33, 2
          %s357 = ssub.s32 %s356, 1
          %p358 = scmp.gt.s32.totalorder %s357, 0
          %s359 = scalar_select %p358, %s357, 0
          %s361 = ssub.s32 128, 128
          %362 = vsyncadd %s352, %s361
          %s363 = smul.addr %s32, 4
          %s364 = sadd.s32 %s359, %s363
          %s365 = smul.addr %s364, 128
          %s366 = scalar_lea.hbm %s0, %s365
          %s368 = sshll.u32 %s355, 4
          %s369 = int_to_ptr.vmem [resolvable:$true] %s368
          %371 = dma.hbm_to_vmem [thread:$0]  %s366, 128, %s369, %s352
        $region44: #{tpu_custom_call.1} parent=39 // pred_fallthru
          _
        // Predicated region
        $region45: #{tpu_custom_call.1} parent=39 // pred_check
          %p372 = pneg %p95
        $region46: #{tpu_custom_call.1} parent=39 // pred_check_branch
          %374 = sbr.rel (%p372) target = $region48
        $region47: #{tpu_custom_call.1} parent=39 // pred_region
          %s375 = sand.u32 %s25, 1
          %s376 = scalar_lea.sflag [#allocation6], %s375
          %s377 = sand.u32 %s85, 1
          %s378 = smul.addr %s377, 16
          %s379 = scalar_lea.vmem [#allocation5], %s378
          %s380 = smul.u32 2, %s33
          %s382 = ssub.s32 256, 256
          %383 = vsyncadd %s376, %s382
          %s384 = smul.addr %s32, 4
          %s385 = sadd.s32 %s380, %s384
          %s386 = smul.addr %s385, 128
          %s387 = scalar_lea.hbm %s1, %s386
          %s388 = sshll.u32 %s379, 4
          %s389 = int_to_ptr.vmem [resolvable:$true] %s388
          %394 = dma.hbm_to_vmem [thread:$0]  %s387, 256, %s389, %s376, 128, 128, 8
        $region48: #{tpu_custom_call.1} parent=39 // pred_fallthru
          _
        // Predicated region
        $region49: #{tpu_custom_call.1} parent=39 // pred_check
          %p395 = pneg %p131
        $region50: #{tpu_custom_call.1} parent=39 // pred_check_branch
          %397 = sbr.rel (%p395) target = $region52
        $region51: #{tpu_custom_call.1} parent=39 // pred_region
          %s398 = sand.u32 %s25, 1
          %s399 = scalar_lea.sflag [#allocation6], %s398
          %s400 = sand.u32 %s121, 1
          %s401 = smul.addr %s400, 8
          %s402 = scalar_lea.vmem [#allocation7], %s401
          %s403 = sadd.s32 %s33, 1
          %s404 = smul.u32 %s403, 2
          %p405 = scmp.lt.s32.totalorder %s404, 3
          %s406 = scalar_select %p405, %s404, 3
          %s408 = ssub.s32 128, 128
          %409 = vsyncadd %s399, %s408
          %s410 = smul.addr %s32, 4
          %s411 = sadd.s32 %s406, %s410
          %s412 = smul.addr %s411, 128
          %s413 = scalar_lea.hbm %s2, %s412
          %s415 = sshll.u32 %s402, 4
          %s416 = int_to_ptr.vmem [resolvable:$true] %s415
          %418 = dma.hbm_to_vmem [thread:$0]  %s413, 128, %s416, %s399
        $region52: #{tpu_custom_call.1} parent=39 // pred_fallthru
          _
      $region40: #{tpu_custom_call.1} parent=5 // pred_fallthru
        _
      %p419 = scmp.le.s32.totalorder 1, %s25
      %p420 = scmp.lt.s32.totalorder %s25, 5
      %p421 = pnand %p419, %p420
      %p422 = pneg %p421
      // Predicated region
      $region53: #{tpu_custom_call.1} parent=5 // pred_check
        _
      $region54: #{tpu_custom_call.1} parent=5 // pred_check_branch
        %424 = sbr.rel (%p421) target = $region56
      $region55: #{tpu_custom_call.1} parent=5 // pred_region
        %s425 = ssub.s32 %s25, 1
        %s426 = sand.u32 %s60, 1
        %s427 = scalar_lea.sflag [#allocation3], %s426
        %s428 = sand.u32 %s60, 1
        %s429 = smul.addr %s428, 8
        %s430 = scalar_lea.vmem [#allocation2], %s429
        // Predicated region
        $region57: #{tpu_custom_call.1} parent=55 // pred_check
          %p431 = pneg %p73
        $region58: #{tpu_custom_call.1} parent=55 // pred_check_branch
          %433 = sbr.rel (%p431) target = $region60
        $region59: #{tpu_custom_call.1} parent=55 // pred_region
          %434 = dma.done %s427, 128
        $region60: #{tpu_custom_call.1} parent=55 // pred_fallthru
          _
        %s435 = sand.u32 %s30, 1
        %s436 = scalar_lea.sflag [#allocation6], %s435
        %s437 = sand.u32 %s88, 1
        %s438 = smul.addr %s437, 16
        %s439 = scalar_lea.vmem [#allocation5], %s438
        // Predicated region
        $region61: #{tpu_custom_call.1} parent=55 // pred_check
          %p440 = pneg %p101
        $region62: #{tpu_custom_call.1} parent=55 // pred_check_branch
          %442 = sbr.rel (%p440) target = $region64
        $region63: #{tpu_custom_call.1} parent=55 // pred_region
          %443 = dma.done %s436, 256
        $region64: #{tpu_custom_call.1} parent=55 // pred_fallthru
          _
        %s444 = sand.u32 %s30, 1
        %s445 = scalar_lea.sflag [#allocation6], %s444
        %s446 = sand.u32 %s124, 1
        %s447 = smul.addr %s446, 8
        %s448 = scalar_lea.vmem [#allocation7], %s447
        // Predicated region
        $region65: #{tpu_custom_call.1} parent=55 // pred_check
          %p449 = pneg %p137
        $region66: #{tpu_custom_call.1} parent=55 // pred_check_branch
          %451 = sbr.rel (%p449) target = $region68
        $region67: #{tpu_custom_call.1} parent=55 // pred_region
          %452 = dma.done %s445, 128
        $region68: #{tpu_custom_call.1} parent=55 // pred_fallthru
          _
        // Predicated region
        $region69: #{tpu_custom_call.1} parent=55 // pred_check
          %p453 = pneg %p158
        $region70: #{tpu_custom_call.1} parent=55 // pred_check_branch
          %455 = sbr.rel (%p453) target = $region72
        $region71: #{tpu_custom_call.1} parent=55 // pred_region
          %456 = dma.done [#allocation9], 18432
        $region72: #{tpu_custom_call.1} parent=55 // pred_fallthru
          _
        // Predicated region
        $region73: #{tpu_custom_call.1} parent=55 // pred_check
          %p457 = pneg %p200
        $region74: #{tpu_custom_call.1} parent=55 // pred_check_branch
          %459 = sbr.rel (%p457) target = $region76
        $region75: #{tpu_custom_call.1} parent=55 // pred_region
          %460 = dma.done [#allocation9], 2048
        $region76: #{tpu_custom_call.1} parent=55 // pred_fallthru
          _
        %s461 = sand.u32 %s60, 1
        %s462 = scalar_lea.sflag [#allocation3], %s461
        %s463 = sand.u32 %s60, 1
        %s464 = smul.addr %s463, 8
        %s465 = scalar_lea.vmem [#allocation2], %s464
        %p466 = pneg %p73
        %p467 = pneg %p70
        %s468 = sand.u32 %s30, 1
        %s469 = scalar_lea.sflag [#allocation6], %s468
        %s470 = sand.u32 %s88, 1
        %s471 = smul.addr %s470, 16
        %s472 = scalar_lea.vmem [#allocation5], %s471
        %p473 = pneg %p101
        %p474 = pneg %p98
        %s475 = sand.u32 %s30, 1
        %s476 = scalar_lea.sflag [#allocation6], %s475
        %s477 = sand.u32 %s124, 1
        %s478 = smul.addr %s477, 8
        %s479 = scalar_lea.vmem [#allocation7], %s478
        %p480 = pneg %p137
        %p481 = pneg %p134
        %p482 = pneg %p158
        %p483 = pneg %p155
        %p484 = pneg %p179
        %p485 = pneg %p176
        %p486 = pneg %p200
        %p487 = pneg %p197
        %p488 = pneg %p221
        %p489 = pneg %p218
        %p490 = pneg %p242
        %p491 = pneg %p239
        %p492 = pneg %p263
        %p493 = pneg %p260
        %p494 = pneg %p291
        %p495 = pneg %p288
        %s496 = sand.u32 %s278, 1
        %s497 = scalar_lea.sflag [#allocation4], %s496
        %s498 = sand.u32 %s278, 1
        %s499 = smul.addr %s498, 16
        %s500 = scalar_lea.vmem [#allocation11], %s499
        %s501 = smul.u32 %s35, 2
        %s502 = ssub.s32 %s501, 1
        %p503 = scmp.gt.s32.totalorder %s502, 0
        %s504 = scalar_select %p503, %s502, 0
        %s505 = smul.u32 2, %s35
        %s506 = sadd.s32 %s35, 1
        %s507 = smul.u32 %s506, 2
        %p508 = scmp.lt.s32.totalorder %s507, 3
        %s509 = scalar_select %p508, %s507, 3
        %s510 = smul.u32 2, %s35
        %v512 = vld [vmem:[%s430] sm:$0xff]
        %p513 = scmp.eq.s32.totalorder %s35, 0
        %s514 = scalar_select %p513, 1, 0
        %v515 = vstv %s514
        %vm516 = vcmp.eq.s32.totalorder %v515, 1
        %v517 = vsel %vm516, 0.0, %v512
        %v518 = vld [vmem:[%s448] sm:$0xff]
        %p519 = scmp.eq.s32.totalorder %s35, 1
        %s520 = scalar_select %p519, 1, 0
        %v521 = vstv %s520
        %vm522 = vcmp.eq.s32.totalorder %v521, 1
        %v523 = vsel %vm522, 0.0, %v518
        %v524 = vld [vmem:[%s439] sm:$0xff]
        %v525 = vld [vmem:[%s439 + $0x8] sm:$0xff]
        %v526 = vpack.c.bf16 %v517, %v517
        %v527 = vpack.c.bf16 %v525, %v524
        %v528 = vpack.c.bf16 %v523, %v523
        %v530 = vrot.slane %v527, 4
        %v532 = vrot.slane %v528, 4
        %vm533 = vcmask 1043456
        %v536 = vsel %vm533, %v526, %v530
        %v538 = vsel %vm533, %v530, %v532
        %vm539 = vsmask.f32 7424
        %v540 = vshrl.u32 %v536, 16
        %v542 = vshll.u32 %v536, 16
        %v544 = vrot.slane %v542, 1
        %v545 = vor.u32 %v540, %v544
        %v546 = vshll.u32 %v538, 16
        %v548 = vrot.slane %v546, 1
        %v549 = vsel %vm539, %v545, %v548
        %v550 = vshrl.u32 %v538, 16
        %v552 = vor.u32 %v550, %v548
        %vm555 = vcmask 1046528
        %v556 = vrot.slane %v536, 1
        %v557 = vrot.slane %v538, 1
        %v558 = vsel %vm555, %v556, %v557
        %vm559 = vsmask.f32 6400
        %v560 = vrot.slane %v540, 1
        %v561 = vrot.slane %v542, 2
        %v562 = vor.u32 %v560, %v561
        %v563 = vrot.slane %v550, 1
        %v564 = vrot.slane %v546, 2
        %v565 = vor.u32 %v563, %v564
        %v566 = vsel %vm559, %v562, %v565
        %vm567 = vcmask 1045504
        %v568 = vrot.slane %v536, 2
        %v569 = vrot.slane %v538, 2
        %v570 = vsel %vm567, %v568, %v569
        %vm571 = vsmask.f32 5376
        %v572 = vrot.slane %v540, 2
        %v573 = vrot.slane %v542, 3
        %v574 = vor.u32 %v572, %v573
        %v575 = vrot.slane %v550, 2
        %v576 = vrot.slane %v546, 3
        %v577 = vor.u32 %v575, %v576
        %v578 = vsel %vm571, %v574, %v577
        %vm579 = vcmask 1044480
        %v580 = vrot.slane %v536, 3
        %v581 = vrot.slane %v538, 3
        %v582 = vsel %vm579, %v580, %v581
        %vm583 = vsmask.f32 4352
        %v584 = vrot.slane %v540, 3
        %v585 = vrot.slane %v542, 4
        %v586 = vor.u32 %v584, %v585
        %v587 = vrot.slane %v550, 3
        %v588 = vrot.slane %v546, 4
        %v589 = vor.u32 %v587, %v588
        %v590 = vsel %vm583, %v586, %v589
        %vm591 = vcmask 1043456
        %v592 = vrot.slane %v536, 4
        %v593 = vrot.slane %v538, 4
        %v594 = vsel %vm591, %v592, %v593
        %v595 = vld [vmem:[#allocation8] sm:$0xff]
        %v596 = vld [vmem:[#allocation8 + $0x8] sm:$0xff]
        %v597 = vld [vmem:[#allocation8 + $0x10] sm:$0xff]
        %v598 = vld [vmem:[#allocation8 + $0x18] sm:$0xff]
        %v599 = vld [vmem:[#allocation8 + $0x20] sm:$0xff]
        %v600 = vld [vmem:[#allocation8 + $0x28] sm:$0xff]
        %v601 = vld [vmem:[#allocation8 + $0x30] sm:$0xff]
        %v602 = vld [vmem:[#allocation8 + $0x38] sm:$0xff]
        %v603 = vld [vmem:[#allocation8 + $0x40] sm:$0xff]
        %v604 = vld [vmem:[#allocation8 + $0x48] sm:$0xff]
        %v605 = vld [vmem:[#allocation8 + $0x50] sm:$0xff]
        %v606 = vld [vmem:[#allocation8 + $0x58] sm:$0xff]
        %v607 = vld [vmem:[#allocation8 + $0x60] sm:$0xff]
        %v608 = vld [vmem:[#allocation8 + $0x68] sm:$0xff]
        %v609 = vld [vmem:[#allocation8 + $0x70] sm:$0xff]
        %v610 = vld [vmem:[#allocation8 + $0x78] sm:$0xff]
        %v611 = vld [vmem:[#allocation8 + $0x80] sm:$0xff]
        %v612 = vld [vmem:[#allocation8 + $0x88] sm:$0xff]
        %v613 = vld [vmem:[#allocation8 + $0x90] sm:$0xff]
        %v614 = vld [vmem:[#allocation8 + $0x98] sm:$0xff]
        %v615 = vld [vmem:[#allocation8 + $0xa0] sm:$0xff]
        %v616 = vld [vmem:[#allocation8 + $0xa8] sm:$0xff]
        %v617 = vld [vmem:[#allocation8 + $0xb0] sm:$0xff]
        %v618 = vld [vmem:[#allocation8 + $0xb8] sm:$0xff]
        %v619 = vld [vmem:[#allocation8 + $0xc0] sm:$0xff]
        %v620 = vld [vmem:[#allocation8 + $0xc8] sm:$0xff]
        %v621 = vld [vmem:[#allocation8 + $0xd0] sm:$0xff]
        %v622 = vld [vmem:[#allocation8 + $0xd8] sm:$0xff]
        %v623 = vld [vmem:[#allocation8 + $0xe0] sm:$0xff]
        %v624 = vld [vmem:[#allocation8 + $0xe8] sm:$0xff]
        %v625 = vld [vmem:[#allocation8 + $0xf0] sm:$0xff]
        %v626 = vld [vmem:[#allocation8 + $0xf8] sm:$0xff]
        %v627 = vld [vmem:[#allocation8 + $0x100] sm:$0xff]
        %v628 = vld [vmem:[#allocation8 + $0x108] sm:$0xff]
        %v629 = vld [vmem:[#allocation8 + $0x110] sm:$0xff]
        %v630 = vld [vmem:[#allocation8 + $0x118] sm:$0xff]
        %v631 = vld [vmem:[#allocation8 + $0x120] sm:$0xff]
        %v632 = vld [vmem:[#allocation8 + $0x128] sm:$0xff]
        %v633 = vld [vmem:[#allocation8 + $0x130] sm:$0xff]
        %v634 = vld [vmem:[#allocation8 + $0x138] sm:$0xff]
        %v635 = vld [vmem:[#allocation8 + $0x140] sm:$0xff]
        %v636 = vld [vmem:[#allocation8 + $0x148] sm:$0xff]
        %v637 = vld [vmem:[#allocation8 + $0x150] sm:$0xff]
        %v638 = vld [vmem:[#allocation8 + $0x158] sm:$0xff]
        %v639 = vld [vmem:[#allocation8 + $0x160] sm:$0xff]
        %v640 = vld [vmem:[#allocation8 + $0x168] sm:$0xff]
        %v641 = vld [vmem:[#allocation8 + $0x170] sm:$0xff]
        %v642 = vld [vmem:[#allocation8 + $0x178] sm:$0xff]
        %v643 = vld [vmem:[#allocation8 + $0x180] sm:$0xff]
        %v644 = vld [vmem:[#allocation8 + $0x188] sm:$0xff]
        %v645 = vld [vmem:[#allocation8 + $0x190] sm:$0xff]
        %v646 = vld [vmem:[#allocation8 + $0x198] sm:$0xff]
        %v647 = vld [vmem:[#allocation8 + $0x1a0] sm:$0xff]
        %v648 = vld [vmem:[#allocation8 + $0x1a8] sm:$0xff]
        %v649 = vld [vmem:[#allocation8 + $0x1b0] sm:$0xff]
        %v650 = vld [vmem:[#allocation8 + $0x1b8] sm:$0xff]
        %v651 = vld [vmem:[#allocation8 + $0x1c0] sm:$0xff]
        %v652 = vld [vmem:[#allocation8 + $0x1c8] sm:$0xff]
        %v653 = vld [vmem:[#allocation8 + $0x1d0] sm:$0xff]
        %v654 = vld [vmem:[#allocation8 + $0x1d8] sm:$0xff]
        %v655 = vld [vmem:[#allocation8 + $0x1e0] sm:$0xff]
        %v656 = vld [vmem:[#allocation8 + $0x1e8] sm:$0xff]
        %v657 = vld [vmem:[#allocation8 + $0x1f0] sm:$0xff]
        %v658 = vld [vmem:[#allocation8 + $0x1f8] sm:$0xff]
        %v659 = vld [vmem:[#allocation8 + $0x200] sm:$0xff]
        %v660 = vld [vmem:[#allocation8 + $0x208] sm:$0xff]
        %v661 = vld [vmem:[#allocation8 + $0x210] sm:$0xff]
        %v662 = vld [vmem:[#allocation8 + $0x218] sm:$0xff]
        %v663 = vld [vmem:[#allocation8 + $0x220] sm:$0xff]
        %v664 = vld [vmem:[#allocation8 + $0x228] sm:$0xff]
        %v665 = vld [vmem:[#allocation8 + $0x230] sm:$0xff]
        %v666 = vld [vmem:[#allocation8 + $0x238] sm:$0xff]
        %v667 = vld [vmem:[#allocation8 + $0x240] sm:$0xff]
        %v668 = vld [vmem:[#allocation8 + $0x248] sm:$0xff]
        %v669 = vld [vmem:[#allocation8 + $0x250] sm:$0xff]
        %v670 = vld [vmem:[#allocation8 + $0x258] sm:$0xff]
        %v671 = vld [vmem:[#allocation8 + $0x260] sm:$0xff]
        %v672 = vld [vmem:[#allocation8 + $0x268] sm:$0xff]
        %v673 = vld [vmem:[#allocation8 + $0x270] sm:$0xff]
        %v674 = vld [vmem:[#allocation8 + $0x278] sm:$0xff]
        %v675 = vld [vmem:[#allocation8 + $0x280] sm:$0xff]
        %v676 = vld [vmem:[#allocation8 + $0x288] sm:$0xff]
        %v677 = vld [vmem:[#allocation8 + $0x290] sm:$0xff]
        %v678 = vld [vmem:[#allocation8 + $0x298] sm:$0xff]
        %v679 = vld [vmem:[#allocation8 + $0x2a0] sm:$0xff]
        %v680 = vld [vmem:[#allocation8 + $0x2a8] sm:$0xff]
        %v681 = vld [vmem:[#allocation8 + $0x2b0] sm:$0xff]
        %v682 = vld [vmem:[#allocation8 + $0x2b8] sm:$0xff]
        %v683 = vld [vmem:[#allocation8 + $0x2c0] sm:$0xff]
        %v684 = vld [vmem:[#allocation8 + $0x2c8] sm:$0xff]
        %v685 = vld [vmem:[#allocation8 + $0x2d0] sm:$0xff]
        %v686 = vld [vmem:[#allocation8 + $0x2d8] sm:$0xff]
        %v687 = vld [vmem:[#allocation8 + $0x2e0] sm:$0xff]
        %v688 = vld [vmem:[#allocation8 + $0x2e8] sm:$0xff]
        %v689 = vld [vmem:[#allocation8 + $0x2f0] sm:$0xff]
        %v690 = vld [vmem:[#allocation8 + $0x2f8] sm:$0xff]
        %v691 = vld [vmem:[#allocation8 + $0x300] sm:$0xff]
        %v692 = vld [vmem:[#allocation8 + $0x308] sm:$0xff]
        %v693 = vld [vmem:[#allocation8 + $0x310] sm:$0xff]
        %v694 = vld [vmem:[#allocation8 + $0x318] sm:$0xff]
        %v695 = vld [vmem:[#allocation8 + $0x320] sm:$0xff]
        %v696 = vld [vmem:[#allocation8 + $0x328] sm:$0xff]
        %v697 = vld [vmem:[#allocation8 + $0x330] sm:$0xff]
        %v698 = vld [vmem:[#allocation8 + $0x338] sm:$0xff]
        %v699 = vld [vmem:[#allocation8 + $0x340] sm:$0xff]
        %v700 = vld [vmem:[#allocation8 + $0x348] sm:$0xff]
        %v701 = vld [vmem:[#allocation8 + $0x350] sm:$0xff]
        %v702 = vld [vmem:[#allocation8 + $0x358] sm:$0xff]
        %v703 = vld [vmem:[#allocation8 + $0x360] sm:$0xff]
        %v704 = vld [vmem:[#allocation8 + $0x368] sm:$0xff]
        %v705 = vld [vmem:[#allocation8 + $0x370] sm:$0xff]
        %v706 = vld [vmem:[#allocation8 + $0x378] sm:$0xff]
        %v707 = vld [vmem:[#allocation8 + $0x380] sm:$0xff]
        %v708 = vld [vmem:[#allocation8 + $0x388] sm:$0xff]
        %v709 = vld [vmem:[#allocation8 + $0x390] sm:$0xff]
        %v710 = vld [vmem:[#allocation8 + $0x398] sm:$0xff]
        %v711 = vld [vmem:[#allocation8 + $0x3a0] sm:$0xff]
        %v712 = vld [vmem:[#allocation8 + $0x3a8] sm:$0xff]
        %v713 = vld [vmem:[#allocation8 + $0x3b0] sm:$0xff]
        %v714 = vld [vmem:[#allocation8 + $0x3b8] sm:$0xff]
        %v715 = vld [vmem:[#allocation8 + $0x3c0] sm:$0xff]
        %v716 = vld [vmem:[#allocation8 + $0x3c8] sm:$0xff]
        %v717 = vld [vmem:[#allocation8 + $0x3d0] sm:$0xff]
        %v718 = vld [vmem:[#allocation8 + $0x3d8] sm:$0xff]
        %v719 = vld [vmem:[#allocation8 + $0x3e0] sm:$0xff]
        %v720 = vld [vmem:[#allocation8 + $0x3e8] sm:$0xff]
        %v721 = vld [vmem:[#allocation8 + $0x3f0] sm:$0xff]
        %v722 = vld [vmem:[#allocation8 + $0x3f8] sm:$0xff]
        %v723 = vld [vmem:[#allocation8 + $0x400] sm:$0xff]
        %v724 = vld [vmem:[#allocation8 + $0x408] sm:$0xff]
        %v725 = vld [vmem:[#allocation8 + $0x410] sm:$0xff]
        %v726 = vld [vmem:[#allocation8 + $0x418] sm:$0xff]
        %v727 = vld [vmem:[#allocation8 + $0x420] sm:$0xff]
        %v728 = vld [vmem:[#allocation8 + $0x428] sm:$0xff]
        %v729 = vld [vmem:[#allocation8 + $0x430] sm:$0xff]
        %v730 = vld [vmem:[#allocation8 + $0x438] sm:$0xff]
        %v731 = vld [vmem:[#allocation8 + $0x440] sm:$0xff]
        %v732 = vld [vmem:[#allocation8 + $0x448] sm:$0xff]
        %v733 = vld [vmem:[#allocation8 + $0x450] sm:$0xff]
        %v734 = vld [vmem:[#allocation8 + $0x458] sm:$0xff]
        %v735 = vld [vmem:[#allocation8 + $0x460] sm:$0xff]
        %v736 = vld [vmem:[#allocation8 + $0x468] sm:$0xff]
        %v737 = vld [vmem:[#allocation8 + $0x470] sm:$0xff]
        %v738 = vld [vmem:[#allocation8 + $0x478] sm:$0xff]
        %v739 = vld [vmem:[%s4] sm:$0x3]
        %v741 = vlaneseq
        %v742 = vshrl.u32 %v741, 7
        %v743 = vsub.s32 0, %v742
        %v744 = vrot.slane %v739, %v743
        %v745 = vlaneseq
        %v746 = vshrl.u32 %v745, 7
        %v747 = vsub.s32 1, %v746
        %v748 = vrot.slane %v739, %v747
        %v751 = vrot.slane %v549, 2
        %v752 = vrot.slane %v552, 2
        %v753 = vsel %vm567, %v751, %v752
        %v754 = vrot.slane %v558, 2
        %v755 = vrot.slane %v557, 2
        %v756 = vsel %vm567, %v754, %v755
        %v757 = vrot.slane %v566, 2
        %v758 = vrot.slane %v565, 2
        %v759 = vsel %vm567, %v757, %v758
        %v760 = vrot.slane %v570, 2
        %v761 = vrot.slane %v569, 2
        %v762 = vsel %vm567, %v760, %v761
        %v763 = vrot.slane %v578, 2
        %v764 = vrot.slane %v577, 2
        %v765 = vsel %vm567, %v763, %v764
        %v766 = vrot.slane %v582, 2
        %v767 = vrot.slane %v581, 2
        %v768 = vsel %vm567, %v766, %v767
        %v769 = vrot.slane %v590, 2
        %v770 = vrot.slane %v589, 2
        %v771 = vsel %vm567, %v769, %v770
        %v772 = vrot.slane %v594, 2
        %v773 = vrot.slane %v593, 2
        %v774 = vsel %vm567, %v772, %v773
        %v928 = vunpack.c.l.b16 %v595
        %v929 = vunpack.c.h.b16 %v595
        %v930 = vunpack.c.l.b16 %v596
        %v931 = vunpack.c.h.b16 %v596
        %v932 = vunpack.c.l.b16 %v597
        %v933 = vunpack.c.h.b16 %v597
        %v934 = vunpack.c.l.b16 %v598
        %v935 = vunpack.c.h.b16 %v598
        %v936 = vunpack.c.l.b16 %v599
        %v937 = vunpack.c.h.b16 %v599
        %v938 = vunpack.c.l.b16 %v600
        %v939 = vunpack.c.h.b16 %v600
        %v940 = vunpack.c.l.b16 %v601
        %v941 = vunpack.c.h.b16 %v601
        %v942 = vunpack.c.l.b16 %v602
        %v943 = vunpack.c.h.b16 %v602
        %v944 = vunpack.c.l.b16 %v603
        %v945 = vunpack.c.h.b16 %v603
        %v946 = vunpack.c.l.b16 %v604
        %v947 = vunpack.c.h.b16 %v604
        %v948 = vunpack.c.l.b16 %v605
        %v949 = vunpack.c.h.b16 %v605
        %v950 = vunpack.c.l.b16 %v606
        %v951 = vunpack.c.h.b16 %v606
        %v952 = vunpack.c.l.b16 %v607
        %v953 = vunpack.c.h.b16 %v607
        %v954 = vunpack.c.l.b16 %v608
        %v955 = vunpack.c.h.b16 %v608
        %v956 = vunpack.c.l.b16 %v609
        %v957 = vunpack.c.h.b16 %v609
        %v958 = vunpack.c.l.b16 %v610
        %v959 = vunpack.c.h.b16 %v610
        %v960 = vunpack.c.l.b16 %v611
        %v961 = vunpack.c.h.b16 %v611
        %v962 = vunpack.c.l.b16 %v612
        %v963 = vunpack.c.h.b16 %v612
        %v964 = vunpack.c.l.b16 %v613
        %v965 = vunpack.c.h.b16 %v613
        %v966 = vunpack.c.l.b16 %v614
        %v967 = vunpack.c.h.b16 %v614
        %v968 = vunpack.c.l.b16 %v615
        %v969 = vunpack.c.h.b16 %v615
        %v970 = vunpack.c.l.b16 %v616
        %v971 = vunpack.c.h.b16 %v616
        %v972 = vunpack.c.l.b16 %v617
        %v973 = vunpack.c.h.b16 %v617
        %v974 = vunpack.c.l.b16 %v618
        %v975 = vunpack.c.h.b16 %v618
        %v976 = vunpack.c.l.b16 %v619
        %v977 = vunpack.c.h.b16 %v619
        %v978 = vunpack.c.l.b16 %v620
        %v979 = vunpack.c.h.b16 %v620
        %v980 = vunpack.c.l.b16 %v621
        %v981 = vunpack.c.h.b16 %v621
        %v982 = vunpack.c.l.b16 %v622
        %v983 = vunpack.c.h.b16 %v622
        %v984 = vunpack.c.l.b16 %v623
        %v985 = vunpack.c.h.b16 %v623
        %v986 = vunpack.c.l.b16 %v624
        %v987 = vunpack.c.h.b16 %v624
        %v988 = vunpack.c.l.b16 %v625
        %v989 = vunpack.c.h.b16 %v625
        %v990 = vunpack.c.l.b16 %v626
        %v991 = vunpack.c.h.b16 %v626
        %v992 = vunpack.c.l.b16 %v627
        %v993 = vunpack.c.h.b16 %v627
        %v994 = vunpack.c.l.b16 %v628
        %v995 = vunpack.c.h.b16 %v628
        %v996 = vunpack.c.l.b16 %v629
        %v997 = vunpack.c.h.b16 %v629
        %v998 = vunpack.c.l.b16 %v630
        %v999 = vunpack.c.h.b16 %v630
        %v1000 = vunpack.c.l.b16 %v631
        %v1001 = vunpack.c.h.b16 %v631
        %v1002 = vunpack.c.l.b16 %v632
        %v1003 = vunpack.c.h.b16 %v632
        %v1004 = vunpack.c.l.b16 %v633
        %v1005 = vunpack.c.h.b16 %v633
        %v1006 = vunpack.c.l.b16 %v634
        %v1007 = vunpack.c.h.b16 %v634
        %v1008 = vunpack.c.l.b16 %v635
        %v1009 = vunpack.c.h.b16 %v635
        %v1010 = vunpack.c.l.b16 %v636
        %v1011 = vunpack.c.h.b16 %v636
        %v1012 = vunpack.c.l.b16 %v637
        %v1013 = vunpack.c.h.b16 %v637
        %v1014 = vunpack.c.l.b16 %v638
        %v1015 = vunpack.c.h.b16 %v638
        %v1016 = vunpack.c.l.b16 %v639
        %v1017 = vunpack.c.h.b16 %v639
        %v1018 = vunpack.c.l.b16 %v640
        %v1019 = vunpack.c.h.b16 %v640
        %v1020 = vunpack.c.l.b16 %v641
        %v1021 = vunpack.c.h.b16 %v641
        %v1022 = vunpack.c.l.b16 %v642
        %v1023 = vunpack.c.h.b16 %v642
        %v1024 = vunpack.c.l.b16 %v643
        %v1025 = vunpack.c.h.b16 %v643
        %v1026 = vunpack.c.l.b16 %v644
        %v1027 = vunpack.c.h.b16 %v644
        %v1028 = vunpack.c.l.b16 %v645
        %v1029 = vunpack.c.h.b16 %v645
        %v1030 = vunpack.c.l.b16 %v646
        %v1031 = vunpack.c.h.b16 %v646
        %v1032 = vunpack.c.l.b16 %v647
        %v1033 = vunpack.c.h.b16 %v647
        %v1034 = vunpack.c.l.b16 %v648
        %v1035 = vunpack.c.h.b16 %v648
        %v1036 = vunpack.c.l.b16 %v649
        %v1037 = vunpack.c.h.b16 %v649
        %v1038 = vunpack.c.l.b16 %v650
        %v1039 = vunpack.c.h.b16 %v650
        %v1040 = vunpack.c.l.b16 %v651
        %v1041 = vunpack.c.h.b16 %v651
        %v1042 = vunpack.c.l.b16 %v652
        %v1043 = vunpack.c.h.b16 %v652
        %v1044 = vunpack.c.l.b16 %v653
        %v1045 = vunpack.c.h.b16 %v653
        %v1046 = vunpack.c.l.b16 %v654
        %v1047 = vunpack.c.h.b16 %v654
        %v1048 = vunpack.c.l.b16 %v655
        %v1049 = vunpack.c.h.b16 %v655
        %v1050 = vunpack.c.l.b16 %v656
        %v1051 = vunpack.c.h.b16 %v656
        %v1052 = vunpack.c.l.b16 %v657
        %v1053 = vunpack.c.h.b16 %v657
        %v1054 = vunpack.c.l.b16 %v658
        %v1055 = vunpack.c.h.b16 %v658
        %v1056 = vunpack.c.l.b16 %v659
        %v1057 = vunpack.c.h.b16 %v659
        %v1058 = vunpack.c.l.b16 %v660
        %v1059 = vunpack.c.h.b16 %v660
        %v1060 = vunpack.c.l.b16 %v661
        %v1061 = vunpack.c.h.b16 %v661
        %v1062 = vunpack.c.l.b16 %v662
        %v1063 = vunpack.c.h.b16 %v662
        %v1064 = vunpack.c.l.b16 %v663
        %v1065 = vunpack.c.h.b16 %v663
        %v1066 = vunpack.c.l.b16 %v664
        %v1067 = vunpack.c.h.b16 %v664
        %v1068 = vunpack.c.l.b16 %v665
        %v1069 = vunpack.c.h.b16 %v665
        %v1070 = vunpack.c.l.b16 %v666
        %v1071 = vunpack.c.h.b16 %v666
        %v1072 = vunpack.c.l.b16 %v667
        %v1073 = vunpack.c.h.b16 %v667
        %v1074 = vunpack.c.l.b16 %v668
        %v1075 = vunpack.c.h.b16 %v668
        %v1076 = vunpack.c.l.b16 %v669
        %v1077 = vunpack.c.h.b16 %v669
        %v1078 = vunpack.c.l.b16 %v670
        %v1079 = vunpack.c.h.b16 %v670
        %v1080 = vunpack.c.l.b16 %v671
        %v1081 = vunpack.c.h.b16 %v671
        %v1082 = vunpack.c.l.b16 %v672
        %v1083 = vunpack.c.h.b16 %v672
        %v1084 = vunpack.c.l.b16 %v673
        %v1085 = vunpack.c.h.b16 %v673
        %v1086 = vunpack.c.l.b16 %v674
        %v1087 = vunpack.c.h.b16 %v674
        %v1088 = vunpack.c.l.b16 %v675
        %v1089 = vunpack.c.h.b16 %v675
        %v1090 = vunpack.c.l.b16 %v676
        %v1091 = vunpack.c.h.b16 %v676
        %v1092 = vunpack.c.l.b16 %v677
        %v1093 = vunpack.c.h.b16 %v677
        %v1094 = vunpack.c.l.b16 %v678
        %v1095 = vunpack.c.h.b16 %v678
        %v1096 = vunpack.c.l.b16 %v679
        %v1097 = vunpack.c.h.b16 %v679
        %v1098 = vunpack.c.l.b16 %v680
        %v1099 = vunpack.c.h.b16 %v680
        %v1100 = vunpack.c.l.b16 %v681
        %v1101 = vunpack.c.h.b16 %v681
        %v1102 = vunpack.c.l.b16 %v682
        %v1103 = vunpack.c.h.b16 %v682
        %v1104 = vunpack.c.l.b16 %v683
        %v1105 = vunpack.c.h.b16 %v683
        %v1106 = vunpack.c.l.b16 %v684
        %v1107 = vunpack.c.h.b16 %v684
        %v1108 = vunpack.c.l.b16 %v685
        %v1109 = vunpack.c.h.b16 %v685
        %v1110 = vunpack.c.l.b16 %v686
        %v1111 = vunpack.c.h.b16 %v686
        %v1112 = vunpack.c.l.b16 %v687
        %v1113 = vunpack.c.h.b16 %v687
        %v1114 = vunpack.c.l.b16 %v688
        %v1115 = vunpack.c.h.b16 %v688
        %v1116 = vunpack.c.l.b16 %v689
        %v1117 = vunpack.c.h.b16 %v689
        %v1118 = vunpack.c.l.b16 %v690
        %v1119 = vunpack.c.h.b16 %v690
        %v1120 = vunpack.c.l.b16 %v691
        %v1121 = vunpack.c.h.b16 %v691
        %v1122 = vunpack.c.l.b16 %v692
        %v1123 = vunpack.c.h.b16 %v692
        %v1124 = vunpack.c.l.b16 %v693
        %v1125 = vunpack.c.h.b16 %v693
        %v1126 = vunpack.c.l.b16 %v694
        %v1127 = vunpack.c.h.b16 %v694
        %v1128 = vunpack.c.l.b16 %v695
        %v1129 = vunpack.c.h.b16 %v695
        %v1130 = vunpack.c.l.b16 %v696
        %v1131 = vunpack.c.h.b16 %v696
        %v1132 = vunpack.c.l.b16 %v697
        %v1133 = vunpack.c.h.b16 %v697
        %v1134 = vunpack.c.l.b16 %v698
        %v1135 = vunpack.c.h.b16 %v698
        %v1136 = vunpack.c.l.b16 %v699
        %v1137 = vunpack.c.h.b16 %v699
        %v1138 = vunpack.c.l.b16 %v700
        %v1139 = vunpack.c.h.b16 %v700
        %v1140 = vunpack.c.l.b16 %v701
        %v1141 = vunpack.c.h.b16 %v701
        %v1142 = vunpack.c.l.b16 %v702
        %v1143 = vunpack.c.h.b16 %v702
        %v1144 = vunpack.c.l.b16 %v703
        %v1145 = vunpack.c.h.b16 %v703
        %v1146 = vunpack.c.l.b16 %v704
        %v1147 = vunpack.c.h.b16 %v704
        %v1148 = vunpack.c.l.b16 %v705
        %v1149 = vunpack.c.h.b16 %v705
        %v1150 = vunpack.c.l.b16 %v706
        %v1151 = vunpack.c.h.b16 %v706
        %v1152 = vunpack.c.l.b16 %v707
        %v1153 = vunpack.c.h.b16 %v707
        %v1154 = vunpack.c.l.b16 %v708
        %v1155 = vunpack.c.h.b16 %v708
        %v1156 = vunpack.c.l.b16 %v709
        %v1157 = vunpack.c.h.b16 %v709
        %v1158 = vunpack.c.l.b16 %v710
        %v1159 = vunpack.c.h.b16 %v710
        %v1160 = vunpack.c.l.b16 %v711
        %v1161 = vunpack.c.h.b16 %v711
        %v1162 = vunpack.c.l.b16 %v712
        %v1163 = vunpack.c.h.b16 %v712
        %v1164 = vunpack.c.l.b16 %v713
        %v1165 = vunpack.c.h.b16 %v713
        %v1166 = vunpack.c.l.b16 %v714
        %v1167 = vunpack.c.h.b16 %v714
        %v1168 = vunpack.c.l.b16 %v715
        %v1169 = vunpack.c.h.b16 %v715
        %v1170 = vunpack.c.l.b16 %v716
        %v1171 = vunpack.c.h.b16 %v716
        %v1172 = vunpack.c.l.b16 %v717
        %v1173 = vunpack.c.h.b16 %v717
        %v1174 = vunpack.c.l.b16 %v718
        %v1175 = vunpack.c.h.b16 %v718
        %v1176 = vunpack.c.l.b16 %v719
        %v1177 = vunpack.c.h.b16 %v719
        %v1178 = vunpack.c.l.b16 %v720
        %v1179 = vunpack.c.h.b16 %v720
        %v1180 = vunpack.c.l.b16 %v721
        %v1181 = vunpack.c.h.b16 %v721
        %v1182 = vunpack.c.l.b16 %v722
        %v1183 = vunpack.c.h.b16 %v722
        %v1184 = vunpack.c.l.b16 %v723
        %v1185 = vunpack.c.h.b16 %v723
        %v1186 = vunpack.c.l.b16 %v724
        %v1187 = vunpack.c.h.b16 %v724
        %v1188 = vunpack.c.l.b16 %v725
        %v1189 = vunpack.c.h.b16 %v725
        %v1190 = vunpack.c.l.b16 %v726
        %v1191 = vunpack.c.h.b16 %v726
        %v1192 = vunpack.c.l.b16 %v727
        %v1193 = vunpack.c.h.b16 %v727
        %v1194 = vunpack.c.l.b16 %v728
        %v1195 = vunpack.c.h.b16 %v728
        %v1196 = vunpack.c.l.b16 %v729
        %v1197 = vunpack.c.h.b16 %v729
        %v1198 = vunpack.c.l.b16 %v730
        %v1199 = vunpack.c.h.b16 %v730
        %v1200 = vunpack.c.l.b16 %v731
        %v1201 = vunpack.c.h.b16 %v731
        %v1202 = vunpack.c.l.b16 %v732
        %v1203 = vunpack.c.h.b16 %v732
        %v1204 = vunpack.c.l.b16 %v733
        %v1205 = vunpack.c.h.b16 %v733
        %v1206 = vunpack.c.l.b16 %v734
        %v1207 = vunpack.c.h.b16 %v734
        %v1208 = vunpack.c.l.b16 %v735
        %v1209 = vunpack.c.h.b16 %v735
        %v1210 = vunpack.c.l.b16 %v736
        %v1211 = vunpack.c.h.b16 %v736
        %v1212 = vunpack.c.l.b16 %v737
        %v1213 = vunpack.c.h.b16 %v737
        %v1214 = vunpack.c.l.b16 %v738
        %v1215 = vunpack.c.h.b16 %v738
        %v1216 = vpack.c.b16 %v930, %v928
        %v1217 = vpack.c.b16 %v931, %v929
        %v1218 = vpack.c.b16 %v934, %v932
        %v1219 = vpack.c.b16 %v935, %v933
        %v1220 = vpack.c.b16 %v938, %v936
        %v1221 = vpack.c.b16 %v939, %v937
        %v1222 = vpack.c.b16 %v942, %v940
        %v1223 = vpack.c.b16 %v943, %v941
        %v1224 = vpack.c.b16 %v946, %v944
        %v1225 = vpack.c.b16 %v947, %v945
        %v1226 = vpack.c.b16 %v950, %v948
        %v1227 = vpack.c.b16 %v951, %v949
        %v1228 = vpack.c.b16 %v954, %v952
        %v1229 = vpack.c.b16 %v955, %v953
        %v1230 = vpack.c.b16 %v958, %v956
        %v1231 = vpack.c.b16 %v959, %v957
        %v1232 = vpack.c.b16 %v962, %v960
        %v1233 = vpack.c.b16 %v963, %v961
        %v1234 = vpack.c.b16 %v966, %v964
        %v1235 = vpack.c.b16 %v967, %v965
        %v1236 = vpack.c.b16 %v970, %v968
        %v1237 = vpack.c.b16 %v971, %v969
        %v1238 = vpack.c.b16 %v974, %v972
        %v1239 = vpack.c.b16 %v975, %v973
        %v1240 = vpack.c.b16 %v978, %v976
        %v1241 = vpack.c.b16 %v979, %v977
        %v1242 = vpack.c.b16 %v982, %v980
        %v1243 = vpack.c.b16 %v983, %v981
        %v1244 = vpack.c.b16 %v986, %v984
        %v1245 = vpack.c.b16 %v987, %v985
        %v1246 = vpack.c.b16 %v990, %v988
        %v1247 = vpack.c.b16 %v991, %v989
        %v1248 = vpack.c.b16 %v994, %v992
        %v1249 = vpack.c.b16 %v995, %v993
        %v1250 = vpack.c.b16 %v998, %v996
        %v1251 = vpack.c.b16 %v999, %v997
        %v1252 = vpack.c.b16 %v1002, %v1000
        %v1253 = vpack.c.b16 %v1003, %v1001
        %v1254 = vpack.c.b16 %v1006, %v1004
        %v1255 = vpack.c.b16 %v1007, %v1005
        %v1256 = vpack.c.b16 %v1010, %v1008
        %v1257 = vpack.c.b16 %v1011, %v1009
        %v1258 = vpack.c.b16 %v1014, %v1012
        %v1259 = vpack.c.b16 %v1015, %v1013
        %v1260 = vpack.c.b16 %v1018, %v1016
        %v1261 = vpack.c.b16 %v1019, %v1017
        %v1262 = vpack.c.b16 %v1022, %v1020
        %v1263 = vpack.c.b16 %v1023, %v1021
        %v1264 = vpack.c.b16 %v1026, %v1024
        %v1265 = vpack.c.b16 %v1027, %v1025
        %v1266 = vpack.c.b16 %v1030, %v1028
        %v1267 = vpack.c.b16 %v1031, %v1029
        %v1268 = vpack.c.b16 %v1034, %v1032
        %v1269 = vpack.c.b16 %v1035, %v1033
        %v1270 = vpack.c.b16 %v1038, %v1036
        %v1271 = vpack.c.b16 %v1039, %v1037
        %v1272 = vpack.c.b16 %v1042, %v1040
        %v1273 = vpack.c.b16 %v1043, %v1041
        %v1274 = vpack.c.b16 %v1046, %v1044
        %v1275 = vpack.c.b16 %v1047, %v1045
        %v1276 = vpack.c.b16 %v1050, %v1048
        %v1277 = vpack.c.b16 %v1051, %v1049
        %v1278 = vpack.c.b16 %v1054, %v1052
        %v1279 = vpack.c.b16 %v1055, %v1053
        %v1280 = vpack.c.b16 %v1058, %v1056
        %v1281 = vpack.c.b16 %v1059, %v1057
        %v1282 = vpack.c.b16 %v1062, %v1060
        %v1283 = vpack.c.b16 %v1063, %v1061
        %v1284 = vpack.c.b16 %v1066, %v1064
        %v1285 = vpack.c.b16 %v1067, %v1065
        %v1286 = vpack.c.b16 %v1070, %v1068
        %v1287 = vpack.c.b16 %v1071, %v1069
        %v1288 = vpack.c.b16 %v1074, %v1072
        %v1289 = vpack.c.b16 %v1075, %v1073
        %v1290 = vpack.c.b16 %v1078, %v1076
        %v1291 = vpack.c.b16 %v1079, %v1077
        %v1292 = vpack.c.b16 %v1082, %v1080
        %v1293 = vpack.c.b16 %v1083, %v1081
        %v1294 = vpack.c.b16 %v1086, %v1084
        %v1295 = vpack.c.b16 %v1087, %v1085
        %v1296 = vpack.c.b16 %v1090, %v1088
        %v1297 = vpack.c.b16 %v1091, %v1089
        %v1298 = vpack.c.b16 %v1094, %v1092
        %v1299 = vpack.c.b16 %v1095, %v1093
        %v1300 = vpack.c.b16 %v1098, %v1096
        %v1301 = vpack.c.b16 %v1099, %v1097
        %v1302 = vpack.c.b16 %v1102, %v1100
        %v1303 = vpack.c.b16 %v1103, %v1101
        %v1304 = vpack.c.b16 %v1106, %v1104
        %v1305 = vpack.c.b16 %v1107, %v1105
        %v1306 = vpack.c.b16 %v1110, %v1108
        %v1307 = vpack.c.b16 %v1111, %v1109
        %v1308 = vpack.c.b16 %v1114, %v1112
        %v1309 = vpack.c.b16 %v1115, %v1113
        %v1310 = vpack.c.b16 %v1118, %v1116
        %v1311 = vpack.c.b16 %v1119, %v1117
        %v1312 = vpack.c.b16 %v1122, %v1120
        %v1313 = vpack.c.b16 %v1123, %v1121
        %v1314 = vpack.c.b16 %v1126, %v1124
        %v1315 = vpack.c.b16 %v1127, %v1125
        %v1316 = vpack.c.b16 %v1130, %v1128
        %v1317 = vpack.c.b16 %v1131, %v1129
        %v1318 = vpack.c.b16 %v1134, %v1132
        %v1319 = vpack.c.b16 %v1135, %v1133
        %v1320 = vpack.c.b16 %v1138, %v1136
        %v1321 = vpack.c.b16 %v1139, %v1137
        %v1322 = vpack.c.b16 %v1142, %v1140
        %v1323 = vpack.c.b16 %v1143, %v1141
        %v1324 = vpack.c.b16 %v1146, %v1144
        %v1325 = vpack.c.b16 %v1147, %v1145
        %v1326 = vpack.c.b16 %v1150, %v1148
        %v1327 = vpack.c.b16 %v1151, %v1149
        %v1328 = vpack.c.b16 %v1154, %v1152
        %v1329 = vpack.c.b16 %v1155, %v1153
        %v1330 = vpack.c.b16 %v1158, %v1156
        %v1331 = vpack.c.b16 %v1159, %v1157
        %v1332 = vpack.c.b16 %v1162, %v1160
        %v1333 = vpack.c.b16 %v1163, %v1161
        %v1334 = vpack.c.b16 %v1166, %v1164
        %v1335 = vpack.c.b16 %v1167, %v1165
        %v1336 = vpack.c.b16 %v1170, %v1168
        %v1337 = vpack.c.b16 %v1171, %v1169
        %v1338 = vpack.c.b16 %v1174, %v1172
        %v1339 = vpack.c.b16 %v1175, %v1173
        %v1340 = vpack.c.b16 %v1178, %v1176
        %v1341 = vpack.c.b16 %v1179, %v1177
        %v1342 = vpack.c.b16 %v1182, %v1180
        %v1343 = vpack.c.b16 %v1183, %v1181
        %v1344 = vpack.c.b16 %v1186, %v1184
        %v1345 = vpack.c.b16 %v1187, %v1185
        %v1346 = vpack.c.b16 %v1190, %v1188
        %v1347 = vpack.c.b16 %v1191, %v1189
        %v1348 = vpack.c.b16 %v1194, %v1192
        %v1349 = vpack.c.b16 %v1195, %v1193
        %v1350 = vpack.c.b16 %v1198, %v1196
        %v1351 = vpack.c.b16 %v1199, %v1197
        %v1352 = vpack.c.b16 %v1202, %v1200
        %v1353 = vpack.c.b16 %v1203, %v1201
        %v1354 = vpack.c.b16 %v1206, %v1204
        %v1355 = vpack.c.b16 %v1207, %v1205
        %v1356 = vpack.c.b16 %v1210, %v1208
        %v1357 = vpack.c.b16 %v1211, %v1209
        %v1358 = vpack.c.b16 %v1214, %v1212
        %v1359 = vpack.c.b16 %v1215, %v1213
        %1504 = vmatprep.subr.bf16.mxu0 %v1217
        %1505 = vmatpush1.bf16.msra.mxu0 %v1216
        %1506 = vmatprep.subr.bf16.mxu0 %v1219
        %1507 = vmatpush1.bf16.msra.mxu0 %v1218
        %1508 = vmatprep.subr.bf16.mxu0 %v1221
        %1509 = vmatpush1.bf16.msra.mxu0 %v1220
        %1510 = vmatprep.subr.bf16.mxu0 %v1223
        %1511 = vmatpush1.bf16.msra.mxu0 %v1222
        %1512 = vmatprep.subr.bf16.mxu0 %v1225
        %1513 = vmatpush1.bf16.msra.mxu0 %v1224
        %1514 = vmatprep.subr.bf16.mxu0 %v1227
        %1515 = vmatpush1.bf16.msra.mxu0 %v1226
        %1516 = vmatprep.subr.bf16.mxu0 %v1229
        %1517 = vmatpush1.bf16.msra.mxu0 %v1228
        %1518 = vmatprep.subr.bf16.mxu0 %v1231
        %1519 = vmatpush1.bf16.msra.mxu0 %v1230
        %1520 = vmatprep.subr.bf16.mxu0 %v1233
        %1521 = vmatpush1.bf16.msra.mxu0 %v1232
        %1522 = vmatprep.subr.bf16.mxu0 %v1235
        %1523 = vmatpush1.bf16.msra.mxu0 %v1234
        %1524 = vmatprep.subr.bf16.mxu0 %v1237
        %1525 = vmatpush1.bf16.msra.mxu0 %v1236
        %1526 = vmatprep.subr.bf16.mxu0 %v1239
        %1527 = vmatpush1.bf16.msra.mxu0 %v1238
        %1528 = vmatprep.subr.bf16.mxu0 %v1241
        %1529 = vmatpush1.bf16.msra.mxu0 %v1240
        %1530 = vmatprep.subr.bf16.mxu0 %v1243
        %1531 = vmatpush1.bf16.msra.mxu0 %v1242
        %1532 = vmatprep.subr.bf16.mxu0 %v1245
        %1533 = vmatpush1.bf16.msra.mxu0 %v1244
        %1534 = vmatprep.subr.bf16.mxu0 %v1247
        %1535 = vmatpush1.bf16.msra.mxu0 %v1246
        %1536 = vmatprep.mubr.bf16.mxu0 %v753
        %1537 = vmatmul.mubr.bf16.gmra.mrb[0].mxu0 %v570
        %v1538 = vpop.f32.mrb[0].mxu0
        %v1539 = vadd.f32 %v744, %v1538
        %v1540 = vpop.f32.mrb[0].mxu0
        %v1541 = vadd.f32 %v748, %v1540
        %v1542 = vpop.f32.mrb[0].mxu0
        %v1543 = vadd.f32 %v744, %v1542
        %v1544 = vpop.f32.mrb[0].mxu0
        %v1545 = vadd.f32 %v748, %v1544
        %1546 = vdwg.mxu0
        %1547 = vmatprep.subr.bf16.mxu0 %v1249
        %1548 = vmatpush1.bf16.msra.mxu0 %v1248
        %1549 = vmatprep.subr.bf16.mxu0 %v1251
        %1550 = vmatpush1.bf16.msra.mxu0 %v1250
        %1551 = vmatprep.subr.bf16.mxu0 %v1253
        %1552 = vmatpush1.bf16.msra.mxu0 %v1252
        %1553 = vmatprep.subr.bf16.mxu0 %v1255
        %1554 = vmatpush1.bf16.msra.mxu0 %v1254
        %1555 = vmatprep.subr.bf16.mxu0 %v1257
        %1556 = vmatpush1.bf16.msra.mxu0 %v1256
        %1557 = vmatprep.subr.bf16.mxu0 %v1259
        %1558 = vmatpush1.bf16.msra.mxu0 %v1258
        %1559 = vmatprep.subr.bf16.mxu0 %v1261
        %1560 = vmatpush1.bf16.msra.mxu0 %v1260
        %1561 = vmatprep.subr.bf16.mxu0 %v1263
        %1562 = vmatpush1.bf16.msra.mxu0 %v1262
        %1563 = vmatprep.subr.bf16.mxu0 %v1265
        %1564 = vmatpush1.bf16.msra.mxu0 %v1264
        %1565 = vmatprep.subr.bf16.mxu0 %v1267
        %1566 = vmatpush1.bf16.msra.mxu0 %v1266
        %1567 = vmatprep.subr.bf16.mxu0 %v1269
        %1568 = vmatpush1.bf16.msra.mxu0 %v1268
        %1569 = vmatprep.subr.bf16.mxu0 %v1271
        %1570 = vmatpush1.bf16.msra.mxu0 %v1270
        %1571 = vmatprep.subr.bf16.mxu0 %v1273
        %1572 = vmatpush1.bf16.msra.mxu0 %v1272
        %1573 = vmatprep.subr.bf16.mxu0 %v1275
        %1574 = vmatpush1.bf16.msra.mxu0 %v1274
        %1575 = vmatprep.subr.bf16.mxu0 %v1277
        %1576 = vmatpush1.bf16.msra.mxu0 %v1276
        %1577 = vmatprep.subr.bf16.mxu0 %v1279
        %1578 = vmatpush1.bf16.msra.mxu0 %v1278
        %1579 = vmatprep.mubr.bf16.mxu0 %v759
        %1580 = vmatmul.mubr.bf16.gmra.mrb[0].mxu0 %v756
        %v1581 = vpop.f32.mrb[0].mxu0
        %v1582 = vadd.f32 %v1539, %v1581
        %v1583 = vpop.f32.mrb[0].mxu0
        %v1584 = vadd.f32 %v1541, %v1583
        %v1585 = vpop.f32.mrb[0].mxu0
        %v1586 = vadd.f32 %v1543, %v1585
        %v1587 = vpop.f32.mrb[0].mxu0
        %v1588 = vadd.f32 %v1545, %v1587
        %1589 = vdwg.mxu0
        %1590 = vmatprep.subr.bf16.mxu0 %v1281
        %1591 = vmatpush1.bf16.msra.mxu0 %v1280
        %1592 = vmatprep.subr.bf16.mxu0 %v1283
        %1593 = vmatpush1.bf16.msra.mxu0 %v1282
        %1594 = vmatprep.subr.bf16.mxu0 %v1285
        %1595 = vmatpush1.bf16.msra.mxu0 %v1284
        %1596 = vmatprep.subr.bf16.mxu0 %v1287
        %1597 = vmatpush1.bf16.msra.mxu0 %v1286
        %1598 = vmatprep.subr.bf16.mxu0 %v1289
        %1599 = vmatpush1.bf16.msra.mxu0 %v1288
        %1600 = vmatprep.subr.bf16.mxu0 %v1291
        %1601 = vmatpush1.bf16.msra.mxu0 %v1290
        %1602 = vmatprep.subr.bf16.mxu0 %v1293
        %1603 = vmatpush1.bf16.msra.mxu0 %v1292
        %1604 = vmatprep.subr.bf16.mxu0 %v1295
        %1605 = vmatpush1.bf16.msra.mxu0 %v1294
        %1606 = vmatprep.subr.bf16.mxu0 %v1297
        %1607 = vmatpush1.bf16.msra.mxu0 %v1296
        %1608 = vmatprep.subr.bf16.mxu0 %v1299
        %1609 = vmatpush1.bf16.msra.mxu0 %v1298
        %1610 = vmatprep.subr.bf16.mxu0 %v1301
        %1611 = vmatpush1.bf16.msra.mxu0 %v1300
        %1612 = vmatprep.subr.bf16.mxu0 %v1303
        %1613 = vmatpush1.bf16.msra.mxu0 %v1302
        %1614 = vmatprep.subr.bf16.mxu0 %v1305
        %1615 = vmatpush1.bf16.msra.mxu0 %v1304
        %1616 = vmatprep.subr.bf16.mxu0 %v1307
        %1617 = vmatpush1.bf16.msra.mxu0 %v1306
        %1618 = vmatprep.subr.bf16.mxu0 %v1309
        %1619 = vmatpush1.bf16.msra.mxu0 %v1308
        %1620 = vmatprep.subr.bf16.mxu0 %v1311
        %1621 = vmatpush1.bf16.msra.mxu0 %v1310
        %1622 = vmatprep.mubr.bf16.mxu0 %v765
        %1623 = vmatmul.mubr.bf16.gmra.mrb[0].mxu0 %v762
        %v1624 = vpop.f32.mrb[0].mxu0
        %v1625 = vadd.f32 %v1582, %v1624
        %v1626 = vpop.f32.mrb[0].mxu0
        %v1627 = vadd.f32 %v1584, %v1626
        %v1628 = vpop.f32.mrb[0].mxu0
        %v1629 = vadd.f32 %v1586, %v1628
        %v1630 = vpop.f32.mrb[0].mxu0
        %v1631 = vadd.f32 %v1588, %v1630
        %1632 = vdwg.mxu0
        %1633 = vmatprep.subr.bf16.mxu0 %v1313
        %1634 = vmatpush1.bf16.msra.mxu0 %v1312
        %1635 = vmatprep.subr.bf16.mxu0 %v1315
        %1636 = vmatpush1.bf16.msra.mxu0 %v1314
        %1637 = vmatprep.subr.bf16.mxu0 %v1317
        %1638 = vmatpush1.bf16.msra.mxu0 %v1316
        %1639 = vmatprep.subr.bf16.mxu0 %v1319
        %1640 = vmatpush1.bf16.msra.mxu0 %v1318
        %1641 = vmatprep.subr.bf16.mxu0 %v1321
        %1642 = vmatpush1.bf16.msra.mxu0 %v1320
        %1643 = vmatprep.subr.bf16.mxu0 %v1323
        %1644 = vmatpush1.bf16.msra.mxu0 %v1322
        %1645 = vmatprep.subr.bf16.mxu0 %v1325
        %1646 = vmatpush1.bf16.msra.mxu0 %v1324
        %1647 = vmatprep.subr.bf16.mxu0 %v1327
        %1648 = vmatpush1.bf16.msra.mxu0 %v1326
        %1649 = vmatprep.subr.bf16.mxu0 %v1329
        %1650 = vmatpush1.bf16.msra.mxu0 %v1328
        %1651 = vmatprep.subr.bf16.mxu0 %v1331
        %1652 = vmatpush1.bf16.msra.mxu0 %v1330
        %1653 = vmatprep.subr.bf16.mxu0 %v1333
        %1654 = vmatpush1.bf16.msra.mxu0 %v1332
        %1655 = vmatprep.subr.bf16.mxu0 %v1335
        %1656 = vmatpush1.bf16.msra.mxu0 %v1334
        %1657 = vmatprep.subr.bf16.mxu0 %v1337
        %1658 = vmatpush1.bf16.msra.mxu0 %v1336
        %1659 = vmatprep.subr.bf16.mxu0 %v1339
        %1660 = vmatpush1.bf16.msra.mxu0 %v1338
        %1661 = vmatprep.subr.bf16.mxu0 %v1341
        %1662 = vmatpush1.bf16.msra.mxu0 %v1340
        %1663 = vmatprep.subr.bf16.mxu0 %v1343
        %1664 = vmatpush1.bf16.msra.mxu0 %v1342
        %1665 = vmatprep.mubr.bf16.mxu0 %v771
        %1666 = vmatmul.mubr.bf16.gmra.mrb[0].mxu0 %v768
        %v1667 = vpop.f32.mrb[0].mxu0
        %v1668 = vadd.f32 %v1625, %v1667
        %v1669 = vpop.f32.mrb[0].mxu0
        %v1670 = vadd.f32 %v1627, %v1669
        %v1671 = vpop.f32.mrb[0].mxu0
        %v1672 = vadd.f32 %v1629, %v1671
        %v1673 = vpop.f32.mrb[0].mxu0
        %v1674 = vadd.f32 %v1631, %v1673
        %1675 = vdwg.mxu0
        %1676 = vmatprep.subr.bf16.mxu0 %v1345
        %1677 = vmatpush1.bf16.msra.mxu0 %v1344
        %1678 = vmatprep.subr.bf16.mxu0 %v1347
        %1679 = vmatpush1.bf16.msra.mxu0 %v1346
        %1680 = vmatprep.subr.bf16.mxu0 %v1349
        %1681 = vmatpush1.bf16.msra.mxu0 %v1348
        %1682 = vmatprep.subr.bf16.mxu0 %v1351
        %1683 = vmatpush1.bf16.msra.mxu0 %v1350
        %1684 = vmatprep.subr.bf16.mxu0 %v1353
        %1685 = vmatpush1.bf16.msra.mxu0 %v1352
        %1686 = vmatprep.subr.bf16.mxu0 %v1355
        %1687 = vmatpush1.bf16.msra.mxu0 %v1354
        %1688 = vmatprep.subr.bf16.mxu0 %v1357
        %1689 = vmatpush1.bf16.msra.mxu0 %v1356
        %1690 = vmatprep.subr.bf16.mxu0 %v1359
        %1691 = vmatpush1.bf16.msra.mxu0 %v1358
        %1692 = vmatprep.subr.bf16.mxu0 0
        %1693 = vmatpush1.bf16.msra.mxu0 0
        %1694 = vmatprep.subr.bf16.mxu0 0
        %1695 = vmatpush1.bf16.msra.mxu0 0
        %1696 = vmatprep.subr.bf16.mxu0 0
        %1697 = vmatpush1.bf16.msra.mxu0 0
        %1698 = vmatprep.subr.bf16.mxu0 0
        %1699 = vmatpush1.bf16.msra.mxu0 0
        %1700 = vmatprep.subr.bf16.mxu0 0
        %1701 = vmatpush1.bf16.msra.mxu0 0
        %1702 = vmatprep.subr.bf16.mxu0 0
        %1703 = vmatpush1.bf16.msra.mxu0 0
        %1704 = vmatprep.subr.bf16.mxu0 0
        %1705 = vmatpush1.bf16.msra.mxu0 0
        %1706 = vmatprep.subr.bf16.mxu0 0
        %1707 = vmatpush1.bf16.msra.mxu0 0
        %1708 = vmatprep.mubr.bf16.mxu0 0
        %1709 = vmatmul.mubr.bf16.gmra.mrb[0].mxu0 %v774
        %v1710 = vpop.f32.mrb[0].mxu0
        %v1711 = vadd.f32 %v1668, %v1710
        %v1712 = vpop.f32.mrb[0].mxu0
        %v1713 = vadd.f32 %v1670, %v1712
        %v1714 = vpop.f32.mrb[0].mxu0
        %v1715 = vadd.f32 %v1672, %v1714
        %v1716 = vpop.f32.mrb[0].mxu0
        %v1717 = vadd.f32 %v1674, %v1716
        %1718 = vdwg.mxu0
        %v1719 = vmax.f32 %v1711, 0.0
        %v1720 = vmax.f32 %v1713, 0.0
        %v1721 = vmax.f32 %v1715, 0.0
        %v1722 = vmax.f32 %v1717, 0.0
        %v1723 = vpack.c.bf16 %v1721, %v1719
        %v1724 = vpack.c.bf16 %v1722, %v1720
        %v1725 = vld [vmem:[#allocation10] sm:$0xf]
        %v1726 = vld [vmem:[#allocation10 + $0x4] sm:$0xf]
        %v1727 = vld [vmem:[#allocation10 + $0x8] sm:$0xf]
        %v1728 = vld [vmem:[#allocation10 + $0xc] sm:$0xf]
        %v1729 = vld [vmem:[#allocation10 + $0x10] sm:$0xf]
        %v1730 = vld [vmem:[#allocation10 + $0x14] sm:$0xf]
        %v1731 = vld [vmem:[#allocation10 + $0x18] sm:$0xf]
        %v1732 = vld [vmem:[#allocation10 + $0x1c] sm:$0xf]
        %v1733 = vld [vmem:[#allocation10 + $0x20] sm:$0xf]
        %v1734 = vld [vmem:[#allocation10 + $0x24] sm:$0xf]
        %v1735 = vld [vmem:[#allocation10 + $0x28] sm:$0xf]
        %v1736 = vld [vmem:[#allocation10 + $0x2c] sm:$0xf]
        %v1737 = vld [vmem:[#allocation10 + $0x30] sm:$0xf]
        %v1738 = vld [vmem:[#allocation10 + $0x34] sm:$0xf]
        %v1739 = vld [vmem:[#allocation10 + $0x38] sm:$0xf]
        %v1740 = vld [vmem:[#allocation10 + $0x3c] sm:$0xf]
        %v1741 = vld [vmem:[#allocation10 + $0x40] sm:$0xf]
        %v1742 = vld [vmem:[#allocation10 + $0x44] sm:$0xf]
        %v1743 = vld [vmem:[#allocation10 + $0x48] sm:$0xf]
        %v1744 = vld [vmem:[#allocation10 + $0x4c] sm:$0xf]
        %v1745 = vld [vmem:[#allocation10 + $0x50] sm:$0xf]
        %v1746 = vld [vmem:[#allocation10 + $0x54] sm:$0xf]
        %v1747 = vld [vmem:[#allocation10 + $0x58] sm:$0xf]
        %v1748 = vld [vmem:[#allocation10 + $0x5c] sm:$0xf]
        %v1749 = vld [vmem:[#allocation10 + $0x60] sm:$0xf]
        %v1750 = vld [vmem:[#allocation10 + $0x64] sm:$0xf]
        %v1751 = vld [vmem:[#allocation10 + $0x68] sm:$0xf]
        %v1752 = vld [vmem:[#allocation10 + $0x6c] sm:$0xf]
        %v1753 = vld [vmem:[#allocation10 + $0x70] sm:$0xf]
        %v1754 = vld [vmem:[#allocation10 + $0x74] sm:$0xf]
        %v1755 = vld [vmem:[#allocation10 + $0x78] sm:$0xf]
        %v1756 = vld [vmem:[#allocation10 + $0x7c] sm:$0xf]
        %v1757 = vld [vmem:[%s6] sm:$0x1]
        %v1759 = vlaneseq
        %v1760 = vshrl.u32 %v1759, 7
        %v1761 = vsub.s32 0, %v1760
        %v1762 = vrot.slane %v1757, %v1761
        %v1796 = vunpack.c.l.b16 %v1725
        %v1797 = vunpack.c.l.b16 %v1726
        %v1798 = vunpack.c.l.b16 %v1727
        %v1799 = vunpack.c.l.b16 %v1728
        %v1800 = vunpack.c.l.b16 %v1729
        %v1801 = vunpack.c.l.b16 %v1730
        %v1802 = vunpack.c.l.b16 %v1731
        %v1803 = vunpack.c.l.b16 %v1732
        %v1804 = vunpack.c.l.b16 %v1733
        %v1805 = vunpack.c.l.b16 %v1734
        %v1806 = vunpack.c.l.b16 %v1735
        %v1807 = vunpack.c.l.b16 %v1736
        %v1808 = vunpack.c.l.b16 %v1737
        %v1809 = vunpack.c.l.b16 %v1738
        %v1810 = vunpack.c.l.b16 %v1739
        %v1811 = vunpack.c.l.b16 %v1740
        %v1812 = vunpack.c.l.b16 %v1741
        %v1813 = vunpack.c.l.b16 %v1742
        %v1814 = vunpack.c.l.b16 %v1743
        %v1815 = vunpack.c.l.b16 %v1744
        %v1816 = vunpack.c.l.b16 %v1745
        %v1817 = vunpack.c.l.b16 %v1746
        %v1818 = vunpack.c.l.b16 %v1747
        %v1819 = vunpack.c.l.b16 %v1748
        %v1820 = vunpack.c.l.b16 %v1749
        %v1821 = vunpack.c.l.b16 %v1750
        %v1822 = vunpack.c.l.b16 %v1751
        %v1823 = vunpack.c.l.b16 %v1752
        %v1824 = vunpack.c.l.b16 %v1753
        %v1825 = vunpack.c.l.b16 %v1754
        %v1826 = vunpack.c.l.b16 %v1755
        %v1827 = vunpack.c.l.b16 %v1756
        %v1828 = vpack.c.b16 %v1797, %v1796
        %v1829 = vpack.c.b16 %v1799, %v1798
        %v1830 = vpack.c.b16 %v1801, %v1800
        %v1831 = vpack.c.b16 %v1803, %v1802
        %v1832 = vpack.c.b16 %v1805, %v1804
        %v1833 = vpack.c.b16 %v1807, %v1806
        %v1834 = vpack.c.b16 %v1809, %v1808
        %v1835 = vpack.c.b16 %v1811, %v1810
        %v1836 = vpack.c.b16 %v1813, %v1812
        %v1837 = vpack.c.b16 %v1815, %v1814
        %v1838 = vpack.c.b16 %v1817, %v1816
        %v1839 = vpack.c.b16 %v1819, %v1818
        %v1840 = vpack.c.b16 %v1821, %v1820
        %v1841 = vpack.c.b16 %v1823, %v1822
        %v1842 = vpack.c.b16 %v1825, %v1824
        %v1843 = vpack.c.b16 %v1827, %v1826
        %1860 = vmatprep.subr.bf16.mxu0 0
        %1861 = vmatpush1.bf16.msra.mxu0 %v1828
        %1862 = vmatprep.subr.bf16.mxu0 0
        %1863 = vmatpush1.bf16.msra.mxu0 %v1829
        %1864 = vmatprep.subr.bf16.mxu0 0
        %1865 = vmatpush1.bf16.msra.mxu0 %v1830
        %1866 = vmatprep.subr.bf16.mxu0 0
        %1867 = vmatpush1.bf16.msra.mxu0 %v1831
        %1868 = vmatprep.subr.bf16.mxu0 0
        %1869 = vmatpush1.bf16.msra.mxu0 %v1832
        %1870 = vmatprep.subr.bf16.mxu0 0
        %1871 = vmatpush1.bf16.msra.mxu0 %v1833
        %1872 = vmatprep.subr.bf16.mxu0 0
        %1873 = vmatpush1.bf16.msra.mxu0 %v1834
        %1874 = vmatprep.subr.bf16.mxu0 0
        %1875 = vmatpush1.bf16.msra.mxu0 %v1835
        %1876 = vmatprep.subr.bf16.mxu0 0
        %1877 = vmatpush1.bf16.msra.mxu0 %v1836
        %1878 = vmatprep.subr.bf16.mxu0 0
        %1879 = vmatpush1.bf16.msra.mxu0 %v1837
        %1880 = vmatprep.subr.bf16.mxu0 0
        %1881 = vmatpush1.bf16.msra.mxu0 %v1838
        %1882 = vmatprep.subr.bf16.mxu0 0
        %1883 = vmatpush1.bf16.msra.mxu0 %v1839
        %1884 = vmatprep.subr.bf16.mxu0 0
        %1885 = vmatpush1.bf16.msra.mxu0 %v1840
        %1886 = vmatprep.subr.bf16.mxu0 0
        %1887 = vmatpush1.bf16.msra.mxu0 %v1841
        %1888 = vmatprep.subr.bf16.mxu0 0
        %1889 = vmatpush1.bf16.msra.mxu0 %v1842
        %1890 = vmatprep.subr.bf16.mxu0 0
        %1891 = vmatpush1.bf16.msra.mxu0 %v1843
        %1892 = vmatprep.mubr.bf16.mxu0 %v1724
        %1893 = vmatmul.mubr.bf16.gmra.mrb[0].mxu0 %v1723
        %v1894 = vpop.f32.mrb[0].mxu0
        %v1895 = vadd.f32 %v1762, %v1894
        %v1896 = vpop.f32.mrb[0].mxu0
        %v1897 = vpop.f32.mrb[0].mxu0
        %v1898 = vadd.f32 %v1762, %v1897
        %v1899 = vpop.f32.mrb[0].mxu0
        %1900 = vdwg.mxu0
        %v1901 = vadd.f32 %v1895, %v524
        %v1902 = vadd.f32 %v1898, %v525
        %1903 = vadd.xlane.f32.xlu0 %v1901
        %v1904 = vpop.xlane.xlu0 %1903
        %1905 = vadd.xlane.f32.xlu0 %v1902
        %v1906 = vpop.xlane.xlu0 %1905
        %v1907 = vrcp.pop 128.0
        %v1908 = vmul.f32 %v1904, %v1907
        %v1909 = vmul.f32 %v1906, %v1907
        %v1910 = vsub.f32 %v1901, %v1908
        %v1911 = vsub.f32 %v1902, %v1909
        %v1912 = vmul.f32 %v1910, %v1910
        %v1913 = vmul.f32 %v1911, %v1911
        %1914 = vadd.xlane.f32.xlu0 %v1912
        %v1915 = vpop.xlane.xlu0 %1914
        %1916 = vadd.xlane.f32.xlu0 %v1913
        %v1917 = vpop.xlane.xlu0 %1916
        %v1918 = vmul.f32 %v1915, %v1907
        %v1919 = vmul.f32 %v1917, %v1907
        %v1920 = vadd.f32 %v1918, 1e-05
        %v1921 = vadd.f32 %v1919, 1e-05
        %v1922 = vrsqrt.pop %v1920
        %v1923 = vrsqrt.pop %v1921
        %v1924 = vmul.f32 %v1910, %v1922
        %v1925 = vmul.f32 %v1911, %v1923
        %v1926 = vld [vmem:[%s7] sm:$0x1]
        %v1928 = vlaneseq
        %v1929 = vshrl.u32 %v1928, 7
        %v1930 = vsub.s32 0, %v1929
        %v1931 = vrot.slane %v1926, %v1930
        %v1933 = vmul.f32 %v1924, %v1931
        %v1934 = vmul.f32 %v1925, %v1931
        %v1935 = vld [vmem:[%s8] sm:$0x1]
        %v1937 = vlaneseq
        %v1938 = vshrl.u32 %v1937, 7
        %v1939 = vsub.s32 0, %v1938
        %v1940 = vrot.slane %v1935, %v1939
        %v1942 = vadd.f32 %v1933, %v1940
        %v1943 = vadd.f32 %v1934, %v1940
        %1944 = vst [vmem:[%s500] sm:$0xff] %v1942
        %1945 = vst [vmem:[%s500 + $0x8] sm:$0xff] %v1943
        %s1946 = sand.u32 %s278, 1
        %s1947 = scalar_lea.sflag [#allocation4], %s1946
        %s1948 = sand.u32 %s278, 1
        %s1949 = smul.addr %s1948, 16
        %s1950 = scalar_lea.vmem [#allocation11], %s1949
        // Predicated region
        $region77: #{tpu_custom_call.1} parent=55 // pred_check
          %p1951 = pneg %p288
        $region78: #{tpu_custom_call.1} parent=55 // pred_check_branch
          %1953 = sbr.rel (%p1951) target = $region80
        $region79: #{tpu_custom_call.1} parent=55 // pred_region
          %s1954 = smul.u32 2, %s35
          %s1956 = ssub.s32 256, 256
          %1957 = vsyncadd %s1947, %s1956
          %s1958 = smul.addr %s34, 4
          %s1959 = sadd.s32 %s1954, %s1958
          %s1960 = smul.addr %s1959, 128
          %s1961 = scalar_lea.hbm %s9, %s1960
          %s1962 = sshll.u32 %s1950, 4
          %s1963 = int_to_ptr.vmem [resolvable:$true] %s1962
          %1968 = dma.vmem_to_hbm [thread:$0]  %s1963, 256, %s1961, %s1947, 128, 128, 8
        $region80: #{tpu_custom_call.1} parent=55 // pred_fallthru
          _
      $region56: #{tpu_custom_call.1} parent=5 // pred_fallthru
        _
      %p1969 = scmp.le.s32.totalorder 2, %s25
      // Predicated region
      $region81: #{tpu_custom_call.1} parent=5 // pred_check
        %p1970 = pneg %p1969
      $region82: #{tpu_custom_call.1} parent=5 // pred_check_branch
        %1972 = sbr.rel (%p1970) target = $region84
      $region83: #{tpu_custom_call.1} parent=5 // pred_region
        %s1973 = ssub.s32 %s25, 2
        // Predicated region
        $region85: #{tpu_custom_call.1} parent=83 // pred_check
          %p1974 = pneg %p294
        $region86: #{tpu_custom_call.1} parent=83 // pred_check_branch
          %1976 = sbr.rel (%p1974) target = $region88
        $region87: #{tpu_custom_call.1} parent=83 // pred_region
          %s1977 = sand.u32 %s279, 1
          %s1978 = scalar_lea.sflag [#allocation4], %s1977
          %s1979 = sand.u32 %s279, 1
          %s1980 = smul.addr %s1979, 16
          %s1981 = scalar_lea.vmem [#allocation11], %s1980
          %1982 = dma.done %s1978, 256
        $region88: #{tpu_custom_call.1} parent=83 // pred_fallthru
          _
      $region84: #{tpu_custom_call.1} parent=5 // pred_fallthru
        _
    $region6: #{tpu_custom_call.1} parent=1 // loop_footer
      %s29 = sadd.s32 1, %s25
    $region7: #{tpu_custom_call.1} parent=1 // loop_footer_branch
      %24 = sbr.rel target = $region3
    $region8: #{tpu_custom_call.1} parent=1 // loop_exit
      _
    %1983 = vsyncpa [#allocation3], 1
    %s1984 = scalar_lea.sflag [#allocation3], 1
    %1985 = vsyncpa %s1984, 1
    %1986 = vsyncpa [#allocation6], 1
    %s1987 = scalar_lea.sflag [#allocation6], 1
    %1988 = vsyncpa %s1987, 1
    %1989 = vsyncpa [#allocation9], 1
    %1990 = vsyncpa [#allocation4], 1
    %s1991 = scalar_lea.sflag [#allocation4], 1
    %1992 = vsyncpa %s1991, 1

// kernel: tpu_custom_call.1
$region0: #{tpu_custom_call.1}
  #allocation0 [shape = 'u32[]', space=smem, size = 0x4, offset = 0x4, fixed_abs, tag = 'smem constant byte address 0x4 - core index']
  #allocation1 [shape = 'u32[144,128]{1,0:T(1,128)}', space=vmem, size = 0x12000, scoped, tag = 'internal scratch']
  %s0 = inlined_call_operand.hbm [shape: f32[2,32,128], index: 0, kind: input, shape index: {}]
  %s1 = inlined_call_operand.hbm [shape: f32[2,32,128], index: 1, kind: input, shape index: {}]
  %s2 = inlined_call_operand.hbm [shape: f32[2,32,128], index: 2, kind: input, shape index: {}]
  %s3 = inlined_call_operand.hbm [shape: bf16[1152,256], index: 3, kind: input, shape index: {}]
  %s4 = inlined_call_operand.vmem [shape: f32[1,256], index: 4, kind: input, shape index: {}]
  %s5 = inlined_call_operand.hbm [shape: bf16[256,128], index: 5, kind: input, shape index: {}]
  %s6 = inlined_call_operand.vmem [shape: f32[1,128], index: 6, kind: input, shape index: {}]
  %s7 = inlined_call_operand.vmem [shape: f32[1,128], index: 7, kind: input, shape index: {}]
  %s8 = inlined_call_operand.vmem [shape: f32[1,128], index: 8, kind: input, shape index: {}]
  %s9 = inlined_call_operand.hbm [shape: f32[2,32,128], index: 9, kind: output, shape index: {}]
  %s10 = sld [smem:[#allocation0]]
  $region89: #{tpu_custom_call.1} parent=0
    _
  %s12 = ssub.s32 1, %s10
  %s13 = scalar_select 0, %s12, %s10
  $region1: #{tpu_custom_call.1} parent=0
    #allocation2 [shape = 'u8[8192]{0}', space=vmem, size = 0x2000, scoped, tag = 'input window, operand 0']
    #allocation3 [shape = 's32[2]{0}', space=sflag, size = 0x8, scoped, tag = 'scoped memory for tpu_custom_call.1']
    #allocation4 [shape = 's32[2]{0}', space=sflag, size = 0x8, scoped, tag = 'scoped memory for tpu_custom_call.1']
    #allocation5 [shape = 'u8[16384]{0}', space=vmem, size = 0x4000, scoped, tag = 'input window, operand 1']
    #allocation6 [shape = 's32[2]{0}', space=sflag, size = 0x8, scoped, tag = 'scoped memory for tpu_custom_call.1']
    #allocation7 [shape = 'u8[8192]{0}', space=vmem, size = 0x2000, scoped, tag = 'input window, operand 2']
    #allocation8 [shape = 'u8[589824]{0}', space=vmem, size = 0x90000, scoped, tag = 'input window, operand 3, single buffered']
    #allocation9 [shape = 's32[1]{0}', space=sflag, size = 0x4, scoped, tag = 'scoped memory for tpu_custom_call.1']
    #allocation10 [shape = 'u8[65536]{0}', space=vmem, size = 0x10000, scoped, tag = 'input window, operand 5, single buffered']
    #allocation11 [shape = 'u8[16384]{0}', space=vmem, size = 0x4000, scoped, tag = 'output window, operand 0']
    %14 = vsyncpa [#allocation3], 0
    %s15 = scalar_lea.sflag [#allocation3], 1
    %16 = vsyncpa %s15, 0
    %17 = vsyncpa [#allocation6], 0
    %s18 = scalar_lea.sflag [#allocation6], 1
    %19 = vsyncpa %s18, 0
    %20 = vsyncpa [#allocation9], 0
    %21 = vsyncpa [#allocation4], 0
    %s22 = scalar_lea.sflag [#allocation4], 1
    %23 = vsyncpa %s22, 0
    loop: start=0, step=1, limit=6
    $region2: #{tpu_custom_call.1} parent=1 // loop_pre_header
      _
    $region3: #{tpu_custom_call.1} parent=1 // loop_header
      %s25 = sphi 0, %s29
      %p26 = scmp.ge.s32.totalorder %s25, 6
      %s32 = sphi 0, %s44
      %s33 = sphi 0, %s40
      %s34 = sphi 0, %s32
      %s35 = sphi 0, %s33
      %s36 = sphi 0, %s34
      %s37 = sphi 0, %s35
      %s57 = sphi 0, %s59
      %s60 = sphi 0, %s57
      %s61 = sphi 0, %s60
      %s77 = sphi 0, %s61
      %s85 = sphi 0, %s87
      %s88 = sphi 0, %s85
      %s89 = sphi 0, %s88
      %s105 = sphi 0, %s89
      %s121 = sphi 0, %s123
      %s124 = sphi 0, %s121
      %s125 = sphi 0, %s124
      %s141 = sphi 0, %s125
      %s145 = sphi 0, %s145
      %s147 = sphi 0, %s145
      %s148 = sphi 0, %s147
      %s162 = sphi 0, %s148
      %s166 = sphi 0, %s166
      %s168 = sphi 0, %s166
      %s169 = sphi 0, %s168
      %s183 = sphi 0, %s169
      %s187 = sphi 0, %s187
      %s189 = sphi 0, %s187
      %s190 = sphi 0, %s189
      %s204 = sphi 0, %s190
      %s208 = sphi 0, %s208
      %s210 = sphi 0, %s208
      %s211 = sphi 0, %s210
      %s225 = sphi 0, %s211
      %s229 = sphi 0, %s229
      %s231 = sphi 0, %s229
      %s232 = sphi 0, %s231
      %s246 = sphi 0, %s232
      %s250 = sphi 0, %s250
      %s252 = sphi 0, %s250
      %s253 = sphi 0, %s252
      %s267 = sphi 0, %s253
      %s275 = sphi 0, %s277
      %s278 = sphi 0, %s275
      %s279 = sphi 0, %s278
      %s295 = sphi 0, %s279
    $region4: #{tpu_custom_call.1} parent=1 // loop_header_branch
      %28 = sbr.rel (%p26) target = $region8
    $region5: #{tpu_custom_call.1} parent=1 // loop_body
      %s30 = ssub.s32 %s25, 1
      %s31 = ssub.s32 %s25, 2
      %s38 = sadd.s32 1, %s33
      %p39 = scmp.ge.s32.totalorder %s38, 2
      %s40 = scalar_select %p39, 0, %s38
      %s41 = sadd.s32 1, %s32
      %s42 = scalar_select %p39, %s41, %s32
      %p43 = scmp.ge.s32.totalorder %s42, 2
      %s44 = scalar_select %p43, 0, %s42
      %s45 = smul.u32 %s33, 2
      %s46 = ssub.s32 %s45, 1
      %p47 = scmp.gt.s32.totalorder %s46, 0
      %s48 = scalar_select %p47, %s46, 0
      %s49 = smul.u32 %s40, 2
      %s50 = ssub.s32 %s49, 1
      %p51 = scmp.gt.s32.totalorder %s50, 0
      %s52 = scalar_select %p51, %s50, 0
      %s53 = ssub.s32 %s32, %s44
      %s54 = ssub.s32 %s48, %s52
      %s55 = sor.u32 %s53, %s54
      %p56 = scmp.eq.s32.totalorder %s55, 0
      %s58 = sadd.s32 %s57, 1
      %s59 = scalar_select %p56, %s57, %s58
      %p62 = pneg %p56
      %p63 = scmp.eq.s32.totalorder %s25, 3
      %p64 = por %p62, %p63
      %p65 = scmp.ne.s32.totalorder %s57, %s60
      %p66 = scmp.eq.s32.totalorder %s25, 0
      %p67 = por %p65, %p66
      %p68 = scmp.ne.s32.totalorder %s57, %s60
      %p69 = scmp.eq.s32.totalorder %s30, 3
      %p70 = por %p68, %p69
      %p71 = scmp.ne.s32.totalorder %s60, %s61
      %p72 = scmp.eq.s32.totalorder %s30, 0
      %p73 = por %p71, %p72
      %p74 = scmp.ne.s32.totalorder %s60, %s61
      %p75 = scmp.eq.s32.totalorder %s31, 3
      %p76 = por %p74, %p75
      %p78 = scmp.ne.s32.totalorder %s61, %s77
      %p79 = scmp.eq.s32.totalorder %s31, 0
      %p80 = por %p78, %p79
      %s81 = ssub.s32 %s32, %s44
      %s82 = ssub.s32 %s33, %s40
      %s83 = sor.u32 %s81, %s82
      %p84 = scmp.eq.s32.totalorder %s83, 0
      %s86 = sadd.s32 %s85, 1
      %s87 = scalar_select %p84, %s85, %s86
      %p90 = pneg %p84
      %p91 = scmp.eq.s32.totalorder %s25, 3
      %p92 = por %p90, %p91
      %p93 = scmp.ne.s32.totalorder %s85, %s88
      %p94 = scmp.eq.s32.totalorder %s25, 0
      %p95 = por %p93, %p94
      %p96 = scmp.ne.s32.totalorder %s85, %s88
      %p97 = scmp.eq.s32.totalorder %s30, 3
      %p98 = por %p96, %p97
      %p99 = scmp.ne.s32.totalorder %s88, %s89
      %p100 = scmp.eq.s32.totalorder %s30, 0
      %p101 = por %p99, %p100
      %p102 = scmp.ne.s32.totalorder %s88, %s89
      %p103 = scmp.eq.s32.totalorder %s31, 3
      %p104 = por %p102, %p103
      %p106 = scmp.ne.s32.totalorder %s89, %s105
      %p107 = scmp.eq.s32.totalorder %s31, 0
      %p108 = por %p106, %p107
      %s109 = sadd.s32 %s33, 1
      %s110 = smul.u32 %s109, 2
      %p111 = scmp.lt.s32.totalorder %s110, 3
      %s112 = scalar_select %p111, %s110, 3
      %s113 = sadd.s32 %s40, 1
      %s114 = smul.u32 %s113, 2
      %p115 = scmp.lt.s32.totalorder %s114, 3
      %s116 = scalar_select %p115, %s114, 3
      %s117 = ssub.s32 %s32, %s44
      %s118 = ssub.s32 %s112, %s116
      %s119 = sor.u32 %s117, %s118
      %p120 = scmp.eq.s32.totalorder %s119, 0
      %s122 = sadd.s32 %s121, 1
      %s123 = scalar_select %p120, %s121, %s122
      %p126 = pneg %p120
      %p127 = scmp.eq.s32.totalorder %s25, 3
      %p128 = por %p126, %p127
      %p129 = scmp.ne.s32.totalorder %s121, %s124
      %p130 = scmp.eq.s32.totalorder %s25, 0
      %p131 = por %p129, %p130
      %p132 = scmp.ne.s32.totalorder %s121, %s124
      %p133 = scmp.eq.s32.totalorder %s30, 3
      %p134 = por %p132, %p133
      %p135 = scmp.ne.s32.totalorder %s124, %s125
      %p136 = scmp.eq.s32.totalorder %s30, 0
      %p137 = por %p135, %p136
      %p138 = scmp.ne.s32.totalorder %s124, %s125
      %p139 = scmp.eq.s32.totalorder %s31, 3
      %p140 = por %p138, %p139
      %p142 = scmp.ne.s32.totalorder %s125, %s141
      %p143 = scmp.eq.s32.totalorder %s31, 0
      %p144 = por %p142, %p143
      %s146 = sadd.s32 %s145, 1
      %p149 = scmp.eq.s32.totalorder %s25, 3
      %p150 = scmp.ne.s32.totalorder %s145, %s147
      %p151 = scmp.eq.s32.totalorder %s25, 0
      %p152 = por %p150, %p151
      %p153 = scmp.ne.s32.totalorder %s145, %s147
      %p154 = scmp.eq.s32.totalorder %s30, 3
      %p155 = por %p153, %p154
      %p156 = scmp.ne.s32.totalorder %s147, %s148
      %p157 = scmp.eq.s32.totalorder %s30, 0
      %p158 = por %p156, %p157
      %p159 = scmp.ne.s32.totalorder %s147, %s148
      %p160 = scmp.eq.s32.totalorder %s31, 3
      %p161 = por %p159, %p160
      %p163 = scmp.ne.s32.totalorder %s148, %s162
      %p164 = scmp.eq.s32.totalorder %s31, 0
      %p165 = por %p163, %p164
      %s167 = sadd.s32 %s166, 1
      %p170 = scmp.eq.s32.totalorder %s25, 3
      %p171 = scmp.ne.s32.totalorder %s166, %s168
      %p172 = scmp.eq.s32.totalorder %s25, 0
      %p173 = por %p171, %p172
      %p174 = scmp.ne.s32.totalorder %s166, %s168
      %p175 = scmp.eq.s32.totalorder %s30, 3
      %p176 = por %p174, %p175
      %p177 = scmp.ne.s32.totalorder %s168, %s169
      %p178 = scmp.eq.s32.totalorder %s30, 0
      %p179 = por %p177, %p178
      %p180 = scmp.ne.s32.totalorder %s168, %s169
      %p181 = scmp.eq.s32.totalorder %s31, 3
      %p182 = por %p180, %p181
      %p184 = scmp.ne.s32.totalorder %s169, %s183
      %p185 = scmp.eq.s32.totalorder %s31, 0
      %p186 = por %p184, %p185
      %s188 = sadd.s32 %s187, 1
      %p191 = scmp.eq.s32.totalorder %s25, 3
      %p192 = scmp.ne.s32.totalorder %s187, %s189
      %p193 = scmp.eq.s32.totalorder %s25, 0
      %p194 = por %p192, %p193
      %p195 = scmp.ne.s32.totalorder %s187, %s189
      %p196 = scmp.eq.s32.totalorder %s30, 3
      %p197 = por %p195, %p196
      %p198 = scmp.ne.s32.totalorder %s189, %s190
      %p199 = scmp.eq.s32.totalorder %s30, 0
      %p200 = por %p198, %p199
      %p201 = scmp.ne.s32.totalorder %s189, %s190
      %p202 = scmp.eq.s32.totalorder %s31, 3
      %p203 = por %p201, %p202
      %p205 = scmp.ne.s32.totalorder %s190, %s204
      %p206 = scmp.eq.s32.totalorder %s31, 0
      %p207 = por %p205, %p206
      %s209 = sadd.s32 %s208, 1
      %p212 = scmp.eq.s32.totalorder %s25, 3
      %p213 = scmp.ne.s32.totalorder %s208, %s210
      %p214 = scmp.eq.s32.totalorder %s25, 0
      %p215 = por %p213, %p214
      %p216 = scmp.ne.s32.totalorder %s208, %s210
      %p217 = scmp.eq.s32.totalorder %s30, 3
      %p218 = por %p216, %p217
      %p219 = scmp.ne.s32.totalorder %s210, %s211
      %p220 = scmp.eq.s32.totalorder %s30, 0
      %p221 = por %p219, %p220
      %p222 = scmp.ne.s32.totalorder %s210, %s211
      %p223 = scmp.eq.s32.totalorder %s31, 3
      %p224 = por %p222, %p223
      %p226 = scmp.ne.s32.totalorder %s211, %s225
      %p227 = scmp.eq.s32.totalorder %s31, 0
      %p228 = por %p226, %p227
      %s230 = sadd.s32 %s229, 1
      %p233 = scmp.eq.s32.totalorder %s25, 3
      %p234 = scmp.ne.s32.totalorder %s229, %s231
      %p235 = scmp.eq.s32.totalorder %s25, 0
      %p236 = por %p234, %p235
      %p237 = scmp.ne.s32.totalorder %s229, %s231
      %p238 = scmp.eq.s32.totalorder %s30, 3
      %p239 = por %p237, %p238
      %p240 = scmp.ne.s32.totalorder %s231, %s232
      %p241 = scmp.eq.s32.totalorder %s30, 0
      %p242 = por %p240, %p241
      %p243 = scmp.ne.s32.totalorder %s231, %s232
      %p244 = scmp.eq.s32.totalorder %s31, 3
      %p245 = por %p243, %p244
      %p247 = scmp.ne.s32.totalorder %s232, %s246
      %p248 = scmp.eq.s32.totalorder %s31, 0
      %p249 = por %p247, %p248
      %s251 = sadd.s32 %s250, 1
      %p254 = scmp.eq.s32.totalorder %s25, 3
      %p255 = scmp.ne.s32.totalorder %s250, %s252
      %p256 = scmp.eq.s32.totalorder %s25, 0
      %p257 = por %p255, %p256
      %p258 = scmp.ne.s32.totalorder %s250, %s252
      %p259 = scmp.eq.s32.totalorder %s30, 3
      %p260 = por %p258, %p259
      %p261 = scmp.ne.s32.totalorder %s252, %s253
      %p262 = scmp.eq.s32.totalorder %s30, 0
      %p263 = por %p261, %p262
      %p264 = scmp.ne.s32.totalorder %s252, %s253
      %p265 = scmp.eq.s32.totalorder %s31, 3
      %p266 = por %p264, %p265
      %p268 = scmp.ne.s32.totalorder %s253, %s267
      %p269 = scmp.eq.s32.totalorder %s31, 0
      %p270 = por %p268, %p269
      %s271 = ssub.s32 %s32, %s44
      %s272 = ssub.s32 %s33, %s40
      %s273 = sor.u32 %s271, %s272
      %p274 = scmp.eq.s32.totalorder %s273, 0
      %s276 = sadd.s32 %s275, 1
      %s277 = scalar_select %p274, %s275, %s276
      %p280 = pneg %p274
      %p281 = scmp.eq.s32.totalorder %s25, 3
      %p282 = por %p280, %p281
      %p283 = scmp.ne.s32.totalorder %s275, %s278
      %p284 = scmp.eq.s32.totalorder %s25, 0
      %p285 = por %p283, %p284
      %p286 = scmp.ne.s32.totalorder %s275, %s278
      %p287 = scmp.eq.s32.totalorder %s30, 3
      %p288 = por %p286, %p287
      %p289 = scmp.ne.s32.totalorder %s278, %s279
      %p290 = scmp.eq.s32.totalorder %s30, 0
      %p291 = por %p289, %p290
      %p292 = scmp.ne.s32.totalorder %s278, %s279
      %p293 = scmp.eq.s32.totalorder %s31, 3
      %p294 = por %p292, %p293
      %p296 = scmp.ne.s32.totalorder %s279, %s295
      %p297 = scmp.eq.s32.totalorder %s31, 0
      %p298 = por %p296, %p297
      %p299 = scmp.le.s32.totalorder 1, %s25
      %p300 = scmp.lt.s32.totalorder %s25, 5
      %p301 = pnand %p299, %p300
      %p302 = pneg %p301
      // Predicated region
      $region9: #{tpu_custom_call.1} parent=5 // pred_check
        _
      $region10: #{tpu_custom_call.1} parent=5 // pred_check_branch
        %304 = sbr.rel (%p301) target = $region12
      $region11: #{tpu_custom_call.1} parent=5 // pred_region
        %s305 = ssub.s32 %s25, 1
        // Predicated region
        $region13: #{tpu_custom_call.1} parent=11 // pred_check
          %p306 = pneg %p158
        $region14: #{tpu_custom_call.1} parent=11 // pred_check_branch
          %308 = sbr.rel (%p306) target = $region16
        $region15: #{tpu_custom_call.1} parent=11 // pred_region
          %s310 = ssub.s32 18432, 18432
          %311 = vsyncadd [#allocation9], %s310
          %s312 = sshll.u32 [#allocation8], 4
          %s313 = int_to_ptr.vmem [resolvable:$true] %s312
          %318 = dma.hbm_to_vmem [thread:$0]  %s3, 18432, %s313, [#allocation9], 128, 128, 8
        $region16: #{tpu_custom_call.1} parent=11 // pred_fallthru
          _
        // Predicated region
        $region17: #{tpu_custom_call.1} parent=11 // pred_check
          %p319 = pneg %p179
        $region18: #{tpu_custom_call.1} parent=11 // pred_check_branch
          %321 = sbr.rel (%p319) target = $region20
        $region19: #{tpu_custom_call.1} parent=11 // pred_region
          _
        $region20: #{tpu_custom_call.1} parent=11 // pred_fallthru
          _
        // Predicated region
        $region21: #{tpu_custom_call.1} parent=11 // pred_check
          %p322 = pneg %p200
        $region22: #{tpu_custom_call.1} parent=11 // pred_check_branch
          %324 = sbr.rel (%p322) target = $region24
        $region23: #{tpu_custom_call.1} parent=11 // pred_region
          %s326 = ssub.s32 2048, 2048
          %327 = vsyncadd [#allocation9], %s326
          %s328 = sshll.u32 [#allocation10], 4
          %s329 = int_to_ptr.vmem [resolvable:$true] %s328
          %334 = dma.hbm_to_vmem [thread:$0]  %s5, 2048, %s329, [#allocation9], 64, 64, 4
        $region24: #{tpu_custom_call.1} parent=11 // pred_fallthru
          _
        // Predicated region
        $region25: #{tpu_custom_call.1} parent=11 // pred_check
          %p335 = pneg %p221
        $region26: #{tpu_custom_call.1} parent=11 // pred_check_branch
          %337 = sbr.rel (%p335) target = $region28
        $region27: #{tpu_custom_call.1} parent=11 // pred_region
          _
        $region28: #{tpu_custom_call.1} parent=11 // pred_fallthru
          _
        // Predicated region
        $region29: #{tpu_custom_call.1} parent=11 // pred_check
          %p338 = pneg %p242
        $region30: #{tpu_custom_call.1} parent=11 // pred_check_branch
          %340 = sbr.rel (%p338) target = $region32
        $region31: #{tpu_custom_call.1} parent=11 // pred_region
          _
        $region32: #{tpu_custom_call.1} parent=11 // pred_fallthru
          _
        // Predicated region
        $region33: #{tpu_custom_call.1} parent=11 // pred_check
          %p341 = pneg %p263
        $region34: #{tpu_custom_call.1} parent=11 // pred_check_branch
          %343 = sbr.rel (%p341) target = $region36
        $region35: #{tpu_custom_call.1} parent=11 // pred_region
          _
        $region36: #{tpu_custom_call.1} parent=11 // pred_fallthru
          _
      $region12: #{tpu_custom_call.1} parent=5 // pred_fallthru
        _
      %p344 = scmp.lt.s32.totalorder %s25, 4
      // Predicated region
      $region37: #{tpu_custom_call.1} parent=5 // pred_check
        %p345 = pneg %p344
      $region38: #{tpu_custom_call.1} parent=5 // pred_check_branch
        %347 = sbr.rel (%p345) target = $region40
      $region39: #{tpu_custom_call.1} parent=5 // pred_region
        // Predicated region
        $region41: #{tpu_custom_call.1} parent=39 // pred_check
          %p348 = pneg %p67
        $region42: #{tpu_custom_call.1} parent=39 // pred_check_branch
          %350 = sbr.rel (%p348) target = $region44
        $region43: #{tpu_custom_call.1} parent=39 // pred_region
          %s351 = sand.u32 %s57, 1
          %s352 = scalar_lea.sflag [#allocation3], %s351
          %s353 = sand.u32 %s57, 1
          %s354 = smul.addr %s353, 8
          %s355 = scalar_lea.vmem [#allocation2], %s354
          %s356 = smul.u32 %s33, 2
          %s357 = ssub.s32 %s356, 1
          %p358 = scmp.gt.s32.totalorder %s357, 0
          %s359 = scalar_select %p358, %s357, 0
          %s361 = ssub.s32 128, 128
          %362 = vsyncadd %s352, %s361
          %s363 = smul.addr %s32, 4
          %s364 = sadd.s32 %s359, %s363
          %s365 = smul.addr %s364, 128
          %s366 = scalar_lea.hbm %s0, %s365
          %s368 = sshll.u32 %s355, 4
          %s369 = int_to_ptr.vmem [resolvable:$true] %s368
          %371 = dma.hbm_to_vmem [thread:$0]  %s366, 128, %s369, %s352
        $region44: #{tpu_custom_call.1} parent=39 // pred_fallthru
          _
        // Predicated region
        $region45: #{tpu_custom_call.1} parent=39 // pred_check
          %p372 = pneg %p95
        $region46: #{tpu_custom_call.1} parent=39 // pred_check_branch
          %374 = sbr.rel (%p372) target = $region48
        $region47: #{tpu_custom_call.1} parent=39 // pred_region
          %s375 = sand.u32 %s25, 1
          %s376 = scalar_lea.sflag [#allocation6], %s375
          %s377 = sand.u32 %s85, 1
          %s378 = smul.addr %s377, 16
          %s379 = scalar_lea.vmem [#allocation5], %s378
          %s380 = smul.u32 2, %s33
          %s382 = ssub.s32 256, 256
          %383 = vsyncadd %s376, %s382
          %s384 = smul.addr %s32, 4
          %s385 = sadd.s32 %s380, %s384
          %s386 = smul.addr %s385, 128
          %s387 = scalar_lea.hbm %s1, %s386
          %s388 = sshll.u32 %s379, 4
          %s389 = int_to_ptr.vmem [resolvable:$true] %s388
          %394 = dma.hbm_to_vmem [thread:$0]  %s387, 256, %s389, %s376, 128, 128, 8
        $region48: #{tpu_custom_call.1} parent=39 // pred_fallthru
          _
        // Predicated region
        $region49: #{tpu_custom_call.1} parent=39 // pred_check
          %p395 = pneg %p131
        $region50: #{tpu_custom_call.1} parent=39 // pred_check_branch
          %397 = sbr.rel (%p395) target = $region52
        $region51: #{tpu_custom_call.1} parent=39 // pred_region
          %s398 = sand.u32 %s25, 1
          %s399 = scalar_lea.sflag [#allocation6], %s398
          %s400 = sand.u32 %s121, 1
          %s401 = smul.addr %s400, 8
          %s402 = scalar_lea.vmem [#allocation7], %s401
          %s403 = sadd.s32 %s33, 1
          %s404 = smul.u32 %s403, 2
          %p405 = scmp.lt.s32.totalorder %s404, 3
          %s406 = scalar_select %p405, %s404, 3
          %s408 = ssub.s32 128, 128
          %409 = vsyncadd %s399, %s408
          %s410 = smul.addr %s32, 4
          %s411 = sadd.s32 %s406, %s410
          %s412 = smul.addr %s411, 128
          %s413 = scalar_lea.hbm %s2, %s412
          %s415 = sshll.u32 %s402, 4
          %s416 = int_to_ptr.vmem [resolvable:$true] %s415
          %418 = dma.hbm_to_vmem [thread:$0]  %s413, 128, %s416, %s399
        $region52: #{tpu_custom_call.1} parent=39 // pred_fallthru
          _
      $region40: #{tpu_custom_call.1} parent=5 // pred_fallthru
        _
      %p419 = scmp.le.s32.totalorder 1, %s25
      %p420 = scmp.lt.s32.totalorder %s25, 5
      %p421 = pnand %p419, %p420
      %p422 = pneg %p421
      // Predicated region
      $region53: #{tpu_custom_call.1} parent=5 // pred_check
        _
      $region54: #{tpu_custom_call.1} parent=5 // pred_check_branch
        %424 = sbr.rel (%p421) target = $region56
      $region55: #{tpu_custom_call.1} parent=5 // pred_region
        %s425 = ssub.s32 %s25, 1
        %s426 = sand.u32 %s60, 1
        %s427 = scalar_lea.sflag [#allocation3], %s426
        %s428 = sand.u32 %s60, 1
        %s429 = smul.addr %s428, 8
        %s430 = scalar_lea.vmem [#allocation2], %s429
        // Predicated region
        $region57: #{tpu_custom_call.1} parent=55 // pred_check
          %p431 = pneg %p73
        $region58: #{tpu_custom_call.1} parent=55 // pred_check_branch
          %433 = sbr.rel (%p431) target = $region60
        $region59: #{tpu_custom_call.1} parent=55 // pred_region
          %434 = dma.done %s427, 128
        $region60: #{tpu_custom_call.1} parent=55 // pred_fallthru
          _
        %s435 = sand.u32 %s30, 1
        %s436 = scalar_lea.sflag [#allocation6], %s435
        %s437 = sand.u32 %s88, 1
        %s438 = smul.addr %s437, 16
        %s439 = scalar_lea.vmem [#allocation5], %s438
        // Predicated region
        $region61: #{tpu_custom_call.1} parent=55 // pred_check
          %p440 = pneg %p101
        $region62: #{tpu_custom_call.1} parent=55 // pred_check_branch
          %442 = sbr.rel (%p440) target = $region64
        $region63: #{tpu_custom_call.1} parent=55 // pred_region
          %443 = dma.done %s436, 256
        $region64: #{tpu_custom_call.1} parent=55 // pred_fallthru
          _
        %s444 = sand.u32 %s30, 1
        %s445 = scalar_lea.sflag [#allocation6], %s444
        %s446 = sand.u32 %s124, 1
        %s447 = smul.addr %s446, 8
        %s448 = scalar_lea.vmem [#allocation7], %s447
        // Predicated region
        $region65: #{tpu_custom_call.1} parent=55 // pred_check
          %p449 = pneg %p137
        $region66: #{tpu_custom_call.1} parent=55 // pred_check_branch
          %451 = sbr.rel (%p449) target = $region68
        $region67: #{tpu_custom_call.1} parent=55 // pred_region
          %452 = dma.done %s445, 128
        $region68: #{tpu_custom_call.1} parent=55 // pred_fallthru
          _
        // Predicated region
        $region69: #{tpu_custom_call.1} parent=55 // pred_check
          %p453 = pneg %p158
        $region70: #{tpu_custom_call.1} parent=55 // pred_check_branch
          %455 = sbr.rel (%p453) target = $region72
        $region71: #{tpu_custom_call.1} parent=55 // pred_region
          %456 = dma.done [#allocation9], 18432
        $region72: #{tpu_custom_call.1} parent=55 // pred_fallthru
          _
        // Predicated region
        $region73: #{tpu_custom_call.1} parent=55 // pred_check
          %p457 = pneg %p200
        $region74: #{tpu_custom_call.1} parent=55 // pred_check_branch
          %459 = sbr.rel (%p457) target = $region76
        $region75: #{tpu_custom_call.1} parent=55 // pred_region
          %460 = dma.done [#allocation9], 2048
        $region76: #{tpu_custom_call.1} parent=55 // pred_fallthru
          _
        %s461 = sand.u32 %s60, 1
        %s462 = scalar_lea.sflag [#allocation3], %s461
        %s463 = sand.u32 %s60, 1
        %s464 = smul.addr %s463, 8
        %s465 = scalar_lea.vmem [#allocation2], %s464
        %p466 = pneg %p73
        %p467 = pneg %p70
        %s468 = sand.u32 %s30, 1
        %s469 = scalar_lea.sflag [#allocation6], %s468
        %s470 = sand.u32 %s88, 1
        %s471 = smul.addr %s470, 16
        %s472 = scalar_lea.vmem [#allocation5], %s471
        %p473 = pneg %p101
        %p474 = pneg %p98
        %s475 = sand.u32 %s30, 1
        %s476 = scalar_lea.sflag [#allocation6], %s475
        %s477 = sand.u32 %s124, 1
        %s478 = smul.addr %s477, 8
        %s479 = scalar_lea.vmem [#allocation7], %s478
        %p480 = pneg %p137
        %p481 = pneg %p134
        %p482 = pneg %p158
        %p483 = pneg %p155
        %p484 = pneg %p179
        %p485 = pneg %p176
        %p486 = pneg %p200
        %p487 = pneg %p197
        %p488 = pneg %p221
        %p489 = pneg %p218
        %p490 = pneg %p242
        %p491 = pneg %p239
        %p492 = pneg %p263
        %p493 = pneg %p260
        %p494 = pneg %p291
        %p495 = pneg %p288
        %s496 = sand.u32 %s278, 1
        %s497 = scalar_lea.sflag [#allocation4], %s496
        %s498 = sand.u32 %s278, 1
        %s499 = smul.addr %s498, 16
        %s500 = scalar_lea.vmem [#allocation11], %s499
        %s501 = smul.u32 %s35, 2
        %s502 = ssub.s32 %s501, 1
        %p503 = scmp.gt.s32.totalorder %s502, 0
        %s504 = scalar_select %p503, %s502, 0
        %s505 = smul.u32 2, %s35
        %s506 = sadd.s32 %s35, 1
        %s507 = smul.u32 %s506, 2
        %p508 = scmp.lt.s32.totalorder %s507, 3
        %s509 = scalar_select %p508, %s507, 3
        %s510 = smul.u32 2, %s35
        %v512 = vld [vmem:[%s430] sm:$0xff]
        %p513 = scmp.eq.s32.totalorder %s35, 0
        %s514 = scalar_select %p513, 1, 0
        %v515 = vstv %s514
        %vm516 = vcmp.eq.s32.totalorder %v515, 1
        %v517 = vsel %vm516, 0.0, %v512
        %v518 = vld [vmem:[%s448] sm:$0xff]
        %p519 = scmp.eq.s32.totalorder %s35, 1
        %s520 = scalar_select %p519, 1, 0
        %v521 = vstv %s520
        %vm522 = vcmp.eq.s32.totalorder %v521, 1
        %v523 = vsel %vm522, 0.0, %v518
        %v524 = vld [vmem:[%s439] sm:$0xff]
        %v525 = vld [vmem:[%s439 + $0x8] sm:$0xff]
        %v526 = vpack.c.bf16 %v517, %v517
        %v527 = vpack.c.bf16 %v525, %v524
        %v528 = vpack.c.bf16 %v523, %v523
        %v530 = vrot.slane %v527, 4
        %v532 = vrot.slane %v528, 4
        %vm533 = vcmask 1043456
        %v536 = vsel %vm533, %v526, %v530
        %v538 = vsel %vm533, %v530, %v532
        %vm539 = vsmask.f32 7424
        %v540 = vshrl.u32 %v536, 16
        %v542 = vshll.u32 %v536, 16
        %v544 = vrot.slane %v542, 1
        %v545 = vor.u32 %v540, %v544
        %v546 = vshll.u32 %v538, 16
        %v548 = vrot.slane %v546, 1
        %v549 = vsel %vm539, %v545, %v548
        %v550 = vshrl.u32 %v538, 16
        %v552 = vor.u32 %v550, %v548
        %vm555 = vcmask 1046528
        %v556 = vrot.slane %v536, 1
        %v557 = vrot.slane %v538, 1
        %v558 = vsel %vm555, %v556, %v557
        %vm559 = vsmask.f32 6400
        %v560 = vrot.slane %v540, 1
        %v561 = vrot.slane %v542, 2
        %v562 = vor.u32 %v560, %v561
        %v563 = vrot.slane %v550, 1
        %v564 = vrot.slane %v546, 2
        %v565 = vor.u32 %v563, %v564
        %v566 = vsel %vm559, %v562, %v565
        %vm567 = vcmask 1045504
        %v568 = vrot.slane %v536, 2
        %v569 = vrot.slane %v538, 2
        %v570 = vsel %vm567, %v568, %v569
        %vm571 = vsmask.f32 5376
        %v572 = vrot.slane %v540, 2
        %v573 = vrot.slane %v542, 3
        %v574 = vor.u32 %v572, %v573
        %v575 = vrot.slane %v550, 2
        %v576 = vrot.slane %v546, 3
        %v577 = vor.u32 %v575, %v576
        %v578 = vsel %vm571, %v574, %v577
        %vm579 = vcmask 1044480
        %v580 = vrot.slane %v536, 3
        %v581 = vrot.slane %v538, 3
        %v582 = vsel %vm579, %v580, %v581
        %vm583 = vsmask.f32 4352
        %v584 = vrot.slane %v540, 3
        %v585 = vrot.slane %v542, 4
        %v586 = vor.u32 %v584, %v585
        %v587 = vrot.slane %v550, 3
        %v588 = vrot.slane %v546, 4
        %v589 = vor.u32 %v587, %v588
        %v590 = vsel %vm583, %v586, %v589
        %vm591 = vcmask 1043456
        %v592 = vrot.slane %v536, 4
        %v593 = vrot.slane %v538, 4
        %v594 = vsel %vm591, %v592, %v593
        %v595 = vld [vmem:[#allocation8] sm:$0xff]
        %v596 = vld [vmem:[#allocation8 + $0x8] sm:$0xff]
        %v597 = vld [vmem:[#allocation8 + $0x10] sm:$0xff]
        %v598 = vld [vmem:[#allocation8 + $0x18] sm:$0xff]
        %v599 = vld [vmem:[#allocation8 + $0x20] sm:$0xff]
        %v600 = vld [vmem:[#allocation8 + $0x28] sm:$0xff]
        %v601 = vld [vmem:[#allocation8 + $0x30] sm:$0xff]
        %v602 = vld [vmem:[#allocation8 + $0x38] sm:$0xff]
        %v603 = vld [vmem:[#allocation8 + $0x40] sm:$0xff]
        %v604 = vld [vmem:[#allocation8 + $0x48] sm:$0xff]
        %v605 = vld [vmem:[#allocation8 + $0x50] sm:$0xff]
        %v606 = vld [vmem:[#allocation8 + $0x58] sm:$0xff]
        %v607 = vld [vmem:[#allocation8 + $0x60] sm:$0xff]
        %v608 = vld [vmem:[#allocation8 + $0x68] sm:$0xff]
        %v609 = vld [vmem:[#allocation8 + $0x70] sm:$0xff]
        %v610 = vld [vmem:[#allocation8 + $0x78] sm:$0xff]
        %v611 = vld [vmem:[#allocation8 + $0x80] sm:$0xff]
        %v612 = vld [vmem:[#allocation8 + $0x88] sm:$0xff]
        %v613 = vld [vmem:[#allocation8 + $0x90] sm:$0xff]
        %v614 = vld [vmem:[#allocation8 + $0x98] sm:$0xff]
        %v615 = vld [vmem:[#allocation8 + $0xa0] sm:$0xff]
        %v616 = vld [vmem:[#allocation8 + $0xa8] sm:$0xff]
        %v617 = vld [vmem:[#allocation8 + $0xb0] sm:$0xff]
        %v618 = vld [vmem:[#allocation8 + $0xb8] sm:$0xff]
        %v619 = vld [vmem:[#allocation8 + $0xc0] sm:$0xff]
        %v620 = vld [vmem:[#allocation8 + $0xc8] sm:$0xff]
        %v621 = vld [vmem:[#allocation8 + $0xd0] sm:$0xff]
        %v622 = vld [vmem:[#allocation8 + $0xd8] sm:$0xff]
        %v623 = vld [vmem:[#allocation8 + $0xe0] sm:$0xff]
        %v624 = vld [vmem:[#allocation8 + $0xe8] sm:$0xff]
        %v625 = vld [vmem:[#allocation8 + $0xf0] sm:$0xff]
        %v626 = vld [vmem:[#allocation8 + $0xf8] sm:$0xff]
        %v627 = vld [vmem:[#allocation8 + $0x100] sm:$0xff]
        %v628 = vld [vmem:[#allocation8 + $0x108] sm:$0xff]
        %v629 = vld [vmem:[#allocation8 + $0x110] sm:$0xff]
        %v630 = vld [vmem:[#allocation8 + $0x118] sm:$0xff]
        %v631 = vld [vmem:[#allocation8 + $0x120] sm:$0xff]
        %v632 = vld [vmem:[#allocation8 + $0x128] sm:$0xff]
        %v633 = vld [vmem:[#allocation8 + $0x130] sm:$0xff]
        %v634 = vld [vmem:[#allocation8 + $0x138] sm:$0xff]
        %v635 = vld [vmem:[#allocation8 + $0x140] sm:$0xff]
        %v636 = vld [vmem:[#allocation8 + $0x148] sm:$0xff]
        %v637 = vld [vmem:[#allocation8 + $0x150] sm:$0xff]
        %v638 = vld [vmem:[#allocation8 + $0x158] sm:$0xff]
        %v639 = vld [vmem:[#allocation8 + $0x160] sm:$0xff]
        %v640 = vld [vmem:[#allocation8 + $0x168] sm:$0xff]
        %v641 = vld [vmem:[#allocation8 + $0x170] sm:$0xff]
        %v642 = vld [vmem:[#allocation8 + $0x178] sm:$0xff]
        %v643 = vld [vmem:[#allocation8 + $0x180] sm:$0xff]
        %v644 = vld [vmem:[#allocation8 + $0x188] sm:$0xff]
        %v645 = vld [vmem:[#allocation8 + $0x190] sm:$0xff]
        %v646 = vld [vmem:[#allocation8 + $0x198] sm:$0xff]
        %v647 = vld [vmem:[#allocation8 + $0x1a0] sm:$0xff]
        %v648 = vld [vmem:[#allocation8 + $0x1a8] sm:$0xff]
        %v649 = vld [vmem:[#allocation8 + $0x1b0] sm:$0xff]
        %v650 = vld [vmem:[#allocation8 + $0x1b8] sm:$0xff]
        %v651 = vld [vmem:[#allocation8 + $0x1c0] sm:$0xff]
        %v652 = vld [vmem:[#allocation8 + $0x1c8] sm:$0xff]
        %v653 = vld [vmem:[#allocation8 + $0x1d0] sm:$0xff]
        %v654 = vld [vmem:[#allocation8 + $0x1d8] sm:$0xff]
        %v655 = vld [vmem:[#allocation8 + $0x1e0] sm:$0xff]
        %v656 = vld [vmem:[#allocation8 + $0x1e8] sm:$0xff]
        %v657 = vld [vmem:[#allocation8 + $0x1f0] sm:$0xff]
        %v658 = vld [vmem:[#allocation8 + $0x1f8] sm:$0xff]
        %v659 = vld [vmem:[#allocation8 + $0x200] sm:$0xff]
        %v660 = vld [vmem:[#allocation8 + $0x208] sm:$0xff]
        %v661 = vld [vmem:[#allocation8 + $0x210] sm:$0xff]
        %v662 = vld [vmem:[#allocation8 + $0x218] sm:$0xff]
        %v663 = vld [vmem:[#allocation8 + $0x220] sm:$0xff]
        %v664 = vld [vmem:[#allocation8 + $0x228] sm:$0xff]
        %v665 = vld [vmem:[#allocation8 + $0x230] sm:$0xff]
        %v666 = vld [vmem:[#allocation8 + $0x238] sm:$0xff]
        %v667 = vld [vmem:[#allocation8 + $0x240] sm:$0xff]
        %v668 = vld [vmem:[#allocation8 + $0x248] sm:$0xff]
        %v669 = vld [vmem:[#allocation8 + $0x250] sm:$0xff]
        %v670 = vld [vmem:[#allocation8 + $0x258] sm:$0xff]
        %v671 = vld [vmem:[#allocation8 + $0x260] sm:$0xff]
        %v672 = vld [vmem:[#allocation8 + $0x268] sm:$0xff]
        %v673 = vld [vmem:[#allocation8 + $0x270] sm:$0xff]
        %v674 = vld [vmem:[#allocation8 + $0x278] sm:$0xff]
        %v675 = vld [vmem:[#allocation8 + $0x280] sm:$0xff]
        %v676 = vld [vmem:[#allocation8 + $0x288] sm:$0xff]
        %v677 = vld [vmem:[#allocation8 + $0x290] sm:$0xff]
        %v678 = vld [vmem:[#allocation8 + $0x298] sm:$0xff]
        %v679 = vld [vmem:[#allocation8 + $0x2a0] sm:$0xff]
        %v680 = vld [vmem:[#allocation8 + $0x2a8] sm:$0xff]
        %v681 = vld [vmem:[#allocation8 + $0x2b0] sm:$0xff]
        %v682 = vld [vmem:[#allocation8 + $0x2b8] sm:$0xff]
        %v683 = vld [vmem:[#allocation8 + $0x2c0] sm:$0xff]
        %v684 = vld [vmem:[#allocation8 + $0x2c8] sm:$0xff]
        %v685 = vld [vmem:[#allocation8 + $0x2d0] sm:$0xff]
        %v686 = vld [vmem:[#allocation8 + $0x2d8] sm:$0xff]
        %v687 = vld [vmem:[#allocation8 + $0x2e0] sm:$0xff]
        %v688 = vld [vmem:[#allocation8 + $0x2e8] sm:$0xff]
        %v689 = vld [vmem:[#allocation8 + $0x2f0] sm:$0xff]
        %v690 = vld [vmem:[#allocation8 + $0x2f8] sm:$0xff]
        %v691 = vld [vmem:[#allocation8 + $0x300] sm:$0xff]
        %v692 = vld [vmem:[#allocation8 + $0x308] sm:$0xff]
        %v693 = vld [vmem:[#allocation8 + $0x310] sm:$0xff]
        %v694 = vld [vmem:[#allocation8 + $0x318] sm:$0xff]
        %v695 = vld [vmem:[#allocation8 + $0x320] sm:$0xff]
        %v696 = vld [vmem:[#allocation8 + $0x328] sm:$0xff]
        %v697 = vld [vmem:[#allocation8 + $0x330] sm:$0xff]
        %v698 = vld [vmem:[#allocation8 + $0x338] sm:$0xff]
        %v699 = vld [vmem:[#allocation8 + $0x340] sm:$0xff]
        %v700 = vld [vmem:[#allocation8 + $0x348] sm:$0xff]
        %v701 = vld [vmem:[#allocation8 + $0x350] sm:$0xff]
        %v702 = vld [vmem:[#allocation8 + $0x358] sm:$0xff]
        %v703 = vld [vmem:[#allocation8 + $0x360] sm:$0xff]
        %v704 = vld [vmem:[#allocation8 + $0x368] sm:$0xff]
        %v705 = vld [vmem:[#allocation8 + $0x370] sm:$0xff]
        %v706 = vld [vmem:[#allocation8 + $0x378] sm:$0xff]
        %v707 = vld [vmem:[#allocation8 + $0x380] sm:$0xff]
        %v708 = vld [vmem:[#allocation8 + $0x388] sm:$0xff]
        %v709 = vld [vmem:[#allocation8 + $0x390] sm:$0xff]
        %v710 = vld [vmem:[#allocation8 + $0x398] sm:$0xff]
        %v711 = vld [vmem:[#allocation8 + $0x3a0] sm:$0xff]
        %v712 = vld [vmem:[#allocation8 + $0x3a8] sm:$0xff]
        %v713 = vld [vmem:[#allocation8 + $0x3b0] sm:$0xff]
        %v714 = vld [vmem:[#allocation8 + $0x3b8] sm:$0xff]
        %v715 = vld [vmem:[#allocation8 + $0x3c0] sm:$0xff]
        %v716 = vld [vmem:[#allocation8 + $0x3c8] sm:$0xff]
        %v717 = vld [vmem:[#allocation8 + $0x3d0] sm:$0xff]
        %v718 = vld [vmem:[#allocation8 + $0x3d8] sm:$0xff]
        %v719 = vld [vmem:[#allocation8 + $0x3e0] sm:$0xff]
        %v720 = vld [vmem:[#allocation8 + $0x3e8] sm:$0xff]
        %v721 = vld [vmem:[#allocation8 + $0x3f0] sm:$0xff]
        %v722 = vld [vmem:[#allocation8 + $0x3f8] sm:$0xff]
        %v723 = vld [vmem:[#allocation8 + $0x400] sm:$0xff]
        %v724 = vld [vmem:[#allocation8 + $0x408] sm:$0xff]
        %v725 = vld [vmem:[#allocation8 + $0x410] sm:$0xff]
        %v726 = vld [vmem:[#allocation8 + $0x418] sm:$0xff]
        %v727 = vld [vmem:[#allocation8 + $0x420] sm:$0xff]
        %v728 = vld [vmem:[#allocation8 + $0x428] sm:$0xff]
        %v729 = vld [vmem:[#allocation8 + $0x430] sm:$0xff]
        %v730 = vld [vmem:[#allocation8 + $0x438] sm:$0xff]
        %v731 = vld [vmem:[#allocation8 + $0x440] sm:$0xff]
        %v732 = vld [vmem:[#allocation8 + $0x448] sm:$0xff]
        %v733 = vld [vmem:[#allocation8 + $0x450] sm:$0xff]
        %v734 = vld [vmem:[#allocation8 + $0x458] sm:$0xff]
        %v735 = vld [vmem:[#allocation8 + $0x460] sm:$0xff]
        %v736 = vld [vmem:[#allocation8 + $0x468] sm:$0xff]
        %v737 = vld [vmem:[#allocation8 + $0x470] sm:$0xff]
        %v738 = vld [vmem:[#allocation8 + $0x478] sm:$0xff]
        %v739 = vld [vmem:[%s4] sm:$0x3]
        %v741 = vlaneseq
        %v742 = vshrl.u32 %v741, 7
        %v743 = vsub.s32 0, %v742
        %v744 = vrot.slane %v739, %v743
        %v745 = vlaneseq
        %v746 = vshrl.u32 %v745, 7
        %v747 = vsub.s32 1, %v746
        %v748 = vrot.slane %v739, %v747
        %v751 = vrot.slane %v549, 2
        %v752 = vrot.slane %v552, 2
        %v753 = vsel %vm567, %v751, %v752
        %v754 = vrot.slane %v558, 2
        %v755 = vrot.slane %v557, 2
        %v756 = vsel %vm567, %v754, %v755
        %v757 = vrot.slane %v566, 2
        %v758 = vrot.slane %v565, 2
        %v759 = vsel %vm567, %v757, %v758
        %v760 = vrot.slane %v570, 2
        %v761 = vrot.slane %v569, 2
        %v762 = vsel %vm567, %v760, %v761
        %v763 = vrot.slane %v578, 2
        %v764 = vrot.slane %v577, 2
        %v765 = vsel %vm567, %v763, %v764
        %v766 = vrot.slane %v582, 2
        %v767 = vrot.slane %v581, 2
        %v768 = vsel %vm567, %v766, %v767
        %v769 = vrot.slane %v590, 2
        %v770 = vrot.slane %v589, 2
        %v771 = vsel %vm567, %v769, %v770
        %v772 = vrot.slane %v594, 2
        %v773 = vrot.slane %v593, 2
        %v774 = vsel %vm567, %v772, %v773
        %v928 = vunpack.c.l.b16 %v595
        %v929 = vunpack.c.h.b16 %v595
        %v930 = vunpack.c.l.b16 %v596
        %v931 = vunpack.c.h.b16 %v596
        %v932 = vunpack.c.l.b16 %v597
        %v933 = vunpack.c.h.b16 %v597
        %v934 = vunpack.c.l.b16 %v598
        %v935 = vunpack.c.h.b16 %v598
        %v936 = vunpack.c.l.b16 %v599
        %v937 = vunpack.c.h.b16 %v599
        %v938 = vunpack.c.l.b16 %v600
        %v939 = vunpack.c.h.b16 %v600
        %v940 = vunpack.c.l.b16 %v601
        %v941 = vunpack.c.h.b16 %v601
        %v942 = vunpack.c.l.b16 %v602
        %v943 = vunpack.c.h.b16 %v602
        %v944 = vunpack.c.l.b16 %v603
        %v945 = vunpack.c.h.b16 %v603
        %v946 = vunpack.c.l.b16 %v604
        %v947 = vunpack.c.h.b16 %v604
        %v948 = vunpack.c.l.b16 %v605
        %v949 = vunpack.c.h.b16 %v605
        %v950 = vunpack.c.l.b16 %v606
        %v951 = vunpack.c.h.b16 %v606
        %v952 = vunpack.c.l.b16 %v607
        %v953 = vunpack.c.h.b16 %v607
        %v954 = vunpack.c.l.b16 %v608
        %v955 = vunpack.c.h.b16 %v608
        %v956 = vunpack.c.l.b16 %v609
        %v957 = vunpack.c.h.b16 %v609
        %v958 = vunpack.c.l.b16 %v610
        %v959 = vunpack.c.h.b16 %v610
        %v960 = vunpack.c.l.b16 %v611
        %v961 = vunpack.c.h.b16 %v611
        %v962 = vunpack.c.l.b16 %v612
        %v963 = vunpack.c.h.b16 %v612
        %v964 = vunpack.c.l.b16 %v613
        %v965 = vunpack.c.h.b16 %v613
        %v966 = vunpack.c.l.b16 %v614
        %v967 = vunpack.c.h.b16 %v614
        %v968 = vunpack.c.l.b16 %v615
        %v969 = vunpack.c.h.b16 %v615
        %v970 = vunpack.c.l.b16 %v616
        %v971 = vunpack.c.h.b16 %v616
        %v972 = vunpack.c.l.b16 %v617
        %v973 = vunpack.c.h.b16 %v617
        %v974 = vunpack.c.l.b16 %v618
        %v975 = vunpack.c.h.b16 %v618
        %v976 = vunpack.c.l.b16 %v619
        %v977 = vunpack.c.h.b16 %v619
        %v978 = vunpack.c.l.b16 %v620
        %v979 = vunpack.c.h.b16 %v620
        %v980 = vunpack.c.l.b16 %v621
        %v981 = vunpack.c.h.b16 %v621
        %v982 = vunpack.c.l.b16 %v622
        %v983 = vunpack.c.h.b16 %v622
        %v984 = vunpack.c.l.b16 %v623
        %v985 = vunpack.c.h.b16 %v623
        %v986 = vunpack.c.l.b16 %v624
        %v987 = vunpack.c.h.b16 %v624
        %v988 = vunpack.c.l.b16 %v625
        %v989 = vunpack.c.h.b16 %v625
        %v990 = vunpack.c.l.b16 %v626
        %v991 = vunpack.c.h.b16 %v626
        %v992 = vunpack.c.l.b16 %v627
        %v993 = vunpack.c.h.b16 %v627
        %v994 = vunpack.c.l.b16 %v628
        %v995 = vunpack.c.h.b16 %v628
        %v996 = vunpack.c.l.b16 %v629
        %v997 = vunpack.c.h.b16 %v629
        %v998 = vunpack.c.l.b16 %v630
        %v999 = vunpack.c.h.b16 %v630
        %v1000 = vunpack.c.l.b16 %v631
        %v1001 = vunpack.c.h.b16 %v631
        %v1002 = vunpack.c.l.b16 %v632
        %v1003 = vunpack.c.h.b16 %v632
        %v1004 = vunpack.c.l.b16 %v633
        %v1005 = vunpack.c.h.b16 %v633
        %v1006 = vunpack.c.l.b16 %v634
        %v1007 = vunpack.c.h.b16 %v634
        %v1008 = vunpack.c.l.b16 %v635
        %v1009 = vunpack.c.h.b16 %v635
        %v1010 = vunpack.c.l.b16 %v636
        %v1011 = vunpack.c.h.b16 %v636
        %v1012 = vunpack.c.l.b16 %v637
        %v1013 = vunpack.c.h.b16 %v637
        %v1014 = vunpack.c.l.b16 %v638
        %v1015 = vunpack.c.h.b16 %v638
        %v1016 = vunpack.c.l.b16 %v639
        %v1017 = vunpack.c.h.b16 %v639
        %v1018 = vunpack.c.l.b16 %v640
        %v1019 = vunpack.c.h.b16 %v640
        %v1020 = vunpack.c.l.b16 %v641
        %v1021 = vunpack.c.h.b16 %v641
        %v1022 = vunpack.c.l.b16 %v642
        %v1023 = vunpack.c.h.b16 %v642
        %v1024 = vunpack.c.l.b16 %v643
        %v1025 = vunpack.c.h.b16 %v643
        %v1026 = vunpack.c.l.b16 %v644
        %v1027 = vunpack.c.h.b16 %v644
        %v1028 = vunpack.c.l.b16 %v645
        %v1029 = vunpack.c.h.b16 %v645
        %v1030 = vunpack.c.l.b16 %v646
        %v1031 = vunpack.c.h.b16 %v646
        %v1032 = vunpack.c.l.b16 %v647
        %v1033 = vunpack.c.h.b16 %v647
        %v1034 = vunpack.c.l.b16 %v648
        %v1035 = vunpack.c.h.b16 %v648
        %v1036 = vunpack.c.l.b16 %v649
        %v1037 = vunpack.c.h.b16 %v649
        %v1038 = vunpack.c.l.b16 %v650
        %v1039 = vunpack.c.h.b16 %v650
        %v1040 = vunpack.c.l.b16 %v651
        %v1041 = vunpack.c.h.b16 %v651
        %v1042 = vunpack.c.l.b16 %v652
        %v1043 = vunpack.c.h.b16 %v652
        %v1044 = vunpack.c.l.b16 %v653
        %v1045 = vunpack.c.h.b16 %v653
        %v1046 = vunpack.c.l.b16 %v654
        %v1047 = vunpack.c.h.b16 %v654
        %v1048 = vunpack.c.l.b16 %v655
        %v1049 = vunpack.c.h.b16 %v655
        %v1050 = vunpack.c.l.b16 %v656
        %v1051 = vunpack.c.h.b16 %v656
        %v1052 = vunpack.c.l.b16 %v657
        %v1053 = vunpack.c.h.b16 %v657
        %v1054 = vunpack.c.l.b16 %v658
        %v1055 = vunpack.c.h.b16 %v658
        %v1056 = vunpack.c.l.b16 %v659
        %v1057 = vunpack.c.h.b16 %v659
        %v1058 = vunpack.c.l.b16 %v660
        %v1059 = vunpack.c.h.b16 %v660
        %v1060 = vunpack.c.l.b16 %v661
        %v1061 = vunpack.c.h.b16 %v661
        %v1062 = vunpack.c.l.b16 %v662
        %v1063 = vunpack.c.h.b16 %v662
        %v1064 = vunpack.c.l.b16 %v663
        %v1065 = vunpack.c.h.b16 %v663
        %v1066 = vunpack.c.l.b16 %v664
        %v1067 = vunpack.c.h.b16 %v664
        %v1068 = vunpack.c.l.b16 %v665
        %v1069 = vunpack.c.h.b16 %v665
        %v1070 = vunpack.c.l.b16 %v666
        %v1071 = vunpack.c.h.b16 %v666
        %v1072 = vunpack.c.l.b16 %v667
        %v1073 = vunpack.c.h.b16 %v667
        %v1074 = vunpack.c.l.b16 %v668
        %v1075 = vunpack.c.h.b16 %v668
        %v1076 = vunpack.c.l.b16 %v669
        %v1077 = vunpack.c.h.b16 %v669
        %v1078 = vunpack.c.l.b16 %v670
        %v1079 = vunpack.c.h.b16 %v670
        %v1080 = vunpack.c.l.b16 %v671
        %v1081 = vunpack.c.h.b16 %v671
        %v1082 = vunpack.c.l.b16 %v672
        %v1083 = vunpack.c.h.b16 %v672
        %v1084 = vunpack.c.l.b16 %v673
        %v1085 = vunpack.c.h.b16 %v673
        %v1086 = vunpack.c.l.b16 %v674
        %v1087 = vunpack.c.h.b16 %v674
        %v1088 = vunpack.c.l.b16 %v675
        %v1089 = vunpack.c.h.b16 %v675
        %v1090 = vunpack.c.l.b16 %v676
        %v1091 = vunpack.c.h.b16 %v676
        %v1092 = vunpack.c.l.b16 %v677
        %v1093 = vunpack.c.h.b16 %v677
        %v1094 = vunpack.c.l.b16 %v678
        %v1095 = vunpack.c.h.b16 %v678
        %v1096 = vunpack.c.l.b16 %v679
        %v1097 = vunpack.c.h.b16 %v679
        %v1098 = vunpack.c.l.b16 %v680
        %v1099 = vunpack.c.h.b16 %v680
        %v1100 = vunpack.c.l.b16 %v681
        %v1101 = vunpack.c.h.b16 %v681
        %v1102 = vunpack.c.l.b16 %v682
        %v1103 = vunpack.c.h.b16 %v682
        %v1104 = vunpack.c.l.b16 %v683
        %v1105 = vunpack.c.h.b16 %v683
        %v1106 = vunpack.c.l.b16 %v684
        %v1107 = vunpack.c.h.b16 %v684
        %v1108 = vunpack.c.l.b16 %v685
        %v1109 = vunpack.c.h.b16 %v685
        %v1110 = vunpack.c.l.b16 %v686
        %v1111 = vunpack.c.h.b16 %v686
        %v1112 = vunpack.c.l.b16 %v687
        %v1113 = vunpack.c.h.b16 %v687
        %v1114 = vunpack.c.l.b16 %v688
        %v1115 = vunpack.c.h.b16 %v688
        %v1116 = vunpack.c.l.b16 %v689
        %v1117 = vunpack.c.h.b16 %v689
        %v1118 = vunpack.c.l.b16 %v690
        %v1119 = vunpack.c.h.b16 %v690
        %v1120 = vunpack.c.l.b16 %v691
        %v1121 = vunpack.c.h.b16 %v691
        %v1122 = vunpack.c.l.b16 %v692
        %v1123 = vunpack.c.h.b16 %v692
        %v1124 = vunpack.c.l.b16 %v693
        %v1125 = vunpack.c.h.b16 %v693
        %v1126 = vunpack.c.l.b16 %v694
        %v1127 = vunpack.c.h.b16 %v694
        %v1128 = vunpack.c.l.b16 %v695
        %v1129 = vunpack.c.h.b16 %v695
        %v1130 = vunpack.c.l.b16 %v696
        %v1131 = vunpack.c.h.b16 %v696
        %v1132 = vunpack.c.l.b16 %v697
        %v1133 = vunpack.c.h.b16 %v697
        %v1134 = vunpack.c.l.b16 %v698
        %v1135 = vunpack.c.h.b16 %v698
        %v1136 = vunpack.c.l.b16 %v699
        %v1137 = vunpack.c.h.b16 %v699
        %v1138 = vunpack.c.l.b16 %v700
        %v1139 = vunpack.c.h.b16 %v700
        %v1140 = vunpack.c.l.b16 %v701
        %v1141 = vunpack.c.h.b16 %v701
        %v1142 = vunpack.c.l.b16 %v702
        %v1143 = vunpack.c.h.b16 %v702
        %v1144 = vunpack.c.l.b16 %v703
        %v1145 = vunpack.c.h.b16 %v703
        %v1146 = vunpack.c.l.b16 %v704
        %v1147 = vunpack.c.h.b16 %v704
        %v1148 = vunpack.c.l.b16 %v705
        %v1149 = vunpack.c.h.b16 %v705
        %v1150 = vunpack.c.l.b16 %v706
        %v1151 = vunpack.c.h.b16 %v706
        %v1152 = vunpack.c.l.b16 %v707
        %v1153 = vunpack.c.h.b16 %v707
        %v1154 = vunpack.c.l.b16 %v708
        %v1155 = vunpack.c.h.b16 %v708
        %v1156 = vunpack.c.l.b16 %v709
        %v1157 = vunpack.c.h.b16 %v709
        %v1158 = vunpack.c.l.b16 %v710
        %v1159 = vunpack.c.h.b16 %v710
        %v1160 = vunpack.c.l.b16 %v711
        %v1161 = vunpack.c.h.b16 %v711
        %v1162 = vunpack.c.l.b16 %v712
        %v1163 = vunpack.c.h.b16 %v712
        %v1164 = vunpack.c.l.b16 %v713
        %v1165 = vunpack.c.h.b16 %v713
        %v1166 = vunpack.c.l.b16 %v714
        %v1167 = vunpack.c.h.b16 %v714
        %v1168 = vunpack.c.l.b16 %v715
        %v1169 = vunpack.c.h.b16 %v715
        %v1170 = vunpack.c.l.b16 %v716
        %v1171 = vunpack.c.h.b16 %v716
        %v1172 = vunpack.c.l.b16 %v717
        %v1173 = vunpack.c.h.b16 %v717
        %v1174 = vunpack.c.l.b16 %v718
        %v1175 = vunpack.c.h.b16 %v718
        %v1176 = vunpack.c.l.b16 %v719
        %v1177 = vunpack.c.h.b16 %v719
        %v1178 = vunpack.c.l.b16 %v720
        %v1179 = vunpack.c.h.b16 %v720
        %v1180 = vunpack.c.l.b16 %v721
        %v1181 = vunpack.c.h.b16 %v721
        %v1182 = vunpack.c.l.b16 %v722
        %v1183 = vunpack.c.h.b16 %v722
        %v1184 = vunpack.c.l.b16 %v723
        %v1185 = vunpack.c.h.b16 %v723
        %v1186 = vunpack.c.l.b16 %v724
        %v1187 = vunpack.c.h.b16 %v724
        %v1188 = vunpack.c.l.b16 %v725
        %v1189 = vunpack.c.h.b16 %v725
        %v1190 = vunpack.c.l.b16 %v726
        %v1191 = vunpack.c.h.b16 %v726
        %v1192 = vunpack.c.l.b16 %v727
        %v1193 = vunpack.c.h.b16 %v727
        %v1194 = vunpack.c.l.b16 %v728
        %v1195 = vunpack.c.h.b16 %v728
        %v1196 = vunpack.c.l.b16 %v729
        %v1197 = vunpack.c.h.b16 %v729
        %v1198 = vunpack.c.l.b16 %v730
        %v1199 = vunpack.c.h.b16 %v730
        %v1200 = vunpack.c.l.b16 %v731
        %v1201 = vunpack.c.h.b16 %v731
        %v1202 = vunpack.c.l.b16 %v732
        %v1203 = vunpack.c.h.b16 %v732
        %v1204 = vunpack.c.l.b16 %v733
        %v1205 = vunpack.c.h.b16 %v733
        %v1206 = vunpack.c.l.b16 %v734
        %v1207 = vunpack.c.h.b16 %v734
        %v1208 = vunpack.c.l.b16 %v735
        %v1209 = vunpack.c.h.b16 %v735
        %v1210 = vunpack.c.l.b16 %v736
        %v1211 = vunpack.c.h.b16 %v736
        %v1212 = vunpack.c.l.b16 %v737
        %v1213 = vunpack.c.h.b16 %v737
        %v1214 = vunpack.c.l.b16 %v738
        %v1215 = vunpack.c.h.b16 %v738
        %v1216 = vpack.c.b16 %v930, %v928
        %v1217 = vpack.c.b16 %v931, %v929
        %v1218 = vpack.c.b16 %v934, %v932
        %v1219 = vpack.c.b16 %v935, %v933
        %v1220 = vpack.c.b16 %v938, %v936
        %v1221 = vpack.c.b16 %v939, %v937
        %v1222 = vpack.c.b16 %v942, %v940
        %v1223 = vpack.c.b16 %v943, %v941
        %v1224 = vpack.c.b16 %v946, %v944
        %v1225 = vpack.c.b16 %v947, %v945
        %v1226 = vpack.c.b16 %v950, %v948
        %v1227 = vpack.c.b16 %v951, %v949
        %v1228 = vpack.c.b16 %v954, %v952
        %v1229 = vpack.c.b16 %v955, %v953
        %v1230 = vpack.c.b16 %v958, %v956
        %v1231 = vpack.c.b16 %v959, %v957
        %v1232 = vpack.c.b16 %v962, %v960
        %v1233 = vpack.c.b16 %v963, %v961
        %v1234 = vpack.c.b16 %v966, %v964
        %v1235 = vpack.c.b16 %v967, %v965
        %v1236 = vpack.c.b16 %v970, %v968
        %v1237 = vpack.c.b16 %v971, %v969
        %v1238 = vpack.c.b16 %v974, %v972
        %v1239 = vpack.c.b16 %v975, %v973
        %v1240 = vpack.c.b16 %v978, %v976
        %v1241 = vpack.c.b16 %v979, %v977
        %v1242 = vpack.c.b16 %v982, %v980
        %v1243 = vpack.c.b16 %v983, %v981
        %v1244 = vpack.c.b16 %v986, %v984
        %v1245 = vpack.c.b16 %v987, %v985
        %v1246 = vpack.c.b16 %v990, %v988
        %v1247 = vpack.c.b16 %v991, %v989
        %v1248 = vpack.c.b16 %v994, %v992
        %v1249 = vpack.c.b16 %v995, %v993
        %v1250 = vpack.c.b16 %v998, %v996
        %v1251 = vpack.c.b16 %v999, %v997
        %v1252 = vpack.c.b16 %v1002, %v1000
        %v1253 = vpack.c.b16 %v1003, %v1001
        %v1254 = vpack.c.b16 %v1006, %v1004
        %v1255 = vpack.c.b16 %v1007, %v1005
        %v1256 = vpack.c.b16 %v1010, %v1008
        %v1257 = vpack.c.b16 %v1011, %v1009
        %v1258 = vpack.c.b16 %v1014, %v1012
        %v1259 = vpack.c.b16 %v1015, %v1013
        %v1260 = vpack.c.b16 %v1018, %v1016
        %v1261 = vpack.c.b16 %v1019, %v1017
        %v1262 = vpack.c.b16 %v1022, %v1020
        %v1263 = vpack.c.b16 %v1023, %v1021
        %v1264 = vpack.c.b16 %v1026, %v1024
        %v1265 = vpack.c.b16 %v1027, %v1025
        %v1266 = vpack.c.b16 %v1030, %v1028
        %v1267 = vpack.c.b16 %v1031, %v1029
        %v1268 = vpack.c.b16 %v1034, %v1032
        %v1269 = vpack.c.b16 %v1035, %v1033
        %v1270 = vpack.c.b16 %v1038, %v1036
        %v1271 = vpack.c.b16 %v1039, %v1037
        %v1272 = vpack.c.b16 %v1042, %v1040
        %v1273 = vpack.c.b16 %v1043, %v1041
        %v1274 = vpack.c.b16 %v1046, %v1044
        %v1275 = vpack.c.b16 %v1047, %v1045
        %v1276 = vpack.c.b16 %v1050, %v1048
        %v1277 = vpack.c.b16 %v1051, %v1049
        %v1278 = vpack.c.b16 %v1054, %v1052
        %v1279 = vpack.c.b16 %v1055, %v1053
        %v1280 = vpack.c.b16 %v1058, %v1056
        %v1281 = vpack.c.b16 %v1059, %v1057
        %v1282 = vpack.c.b16 %v1062, %v1060
        %v1283 = vpack.c.b16 %v1063, %v1061
        %v1284 = vpack.c.b16 %v1066, %v1064
        %v1285 = vpack.c.b16 %v1067, %v1065
        %v1286 = vpack.c.b16 %v1070, %v1068
        %v1287 = vpack.c.b16 %v1071, %v1069
        %v1288 = vpack.c.b16 %v1074, %v1072
        %v1289 = vpack.c.b16 %v1075, %v1073
        %v1290 = vpack.c.b16 %v1078, %v1076
        %v1291 = vpack.c.b16 %v1079, %v1077
        %v1292 = vpack.c.b16 %v1082, %v1080
        %v1293 = vpack.c.b16 %v1083, %v1081
        %v1294 = vpack.c.b16 %v1086, %v1084
        %v1295 = vpack.c.b16 %v1087, %v1085
        %v1296 = vpack.c.b16 %v1090, %v1088
        %v1297 = vpack.c.b16 %v1091, %v1089
        %v1298 = vpack.c.b16 %v1094, %v1092
        %v1299 = vpack.c.b16 %v1095, %v1093
        %v1300 = vpack.c.b16 %v1098, %v1096
        %v1301 = vpack.c.b16 %v1099, %v1097
        %v1302 = vpack.c.b16 %v1102, %v1100
        %v1303 = vpack.c.b16 %v1103, %v1101
        %v1304 = vpack.c.b16 %v1106, %v1104
        %v1305 = vpack.c.b16 %v1107, %v1105
        %v1306 = vpack.c.b16 %v1110, %v1108
        %v1307 = vpack.c.b16 %v1111, %v1109
        %v1308 = vpack.c.b16 %v1114, %v1112
        %v1309 = vpack.c.b16 %v1115, %v1113
        %v1310 = vpack.c.b16 %v1118, %v1116
        %v1311 = vpack.c.b16 %v1119, %v1117
        %v1312 = vpack.c.b16 %v1122, %v1120
        %v1313 = vpack.c.b16 %v1123, %v1121
        %v1314 = vpack.c.b16 %v1126, %v1124
        %v1315 = vpack.c.b16 %v1127, %v1125
        %v1316 = vpack.c.b16 %v1130, %v1128
        %v1317 = vpack.c.b16 %v1131, %v1129
        %v1318 = vpack.c.b16 %v1134, %v1132
        %v1319 = vpack.c.b16 %v1135, %v1133
        %v1320 = vpack.c.b16 %v1138, %v1136
        %v1321 = vpack.c.b16 %v1139, %v1137
        %v1322 = vpack.c.b16 %v1142, %v1140
        %v1323 = vpack.c.b16 %v1143, %v1141
        %v1324 = vpack.c.b16 %v1146, %v1144
        %v1325 = vpack.c.b16 %v1147, %v1145
        %v1326 = vpack.c.b16 %v1150, %v1148
        %v1327 = vpack.c.b16 %v1151, %v1149
        %v1328 = vpack.c.b16 %v1154, %v1152
        %v1329 = vpack.c.b16 %v1155, %v1153
        %v1330 = vpack.c.b16 %v1158, %v1156
        %v1331 = vpack.c.b16 %v1159, %v1157
        %v1332 = vpack.c.b16 %v1162, %v1160
        %v1333 = vpack.c.b16 %v1163, %v1161
        %v1334 = vpack.c.b16 %v1166, %v1164
        %v1335 = vpack.c.b16 %v1167, %v1165
        %v1336 = vpack.c.b16 %v1170, %v1168
        %v1337 = vpack.c.b16 %v1171, %v1169
        %v1338 = vpack.c.b16 %v1174, %v1172
        %v1339 = vpack.c.b16 %v1175, %v1173
        %v1340 = vpack.c.b16 %v1178, %v1176
        %v1341 = vpack.c.b16 %v1179, %v1177
        %v1342 = vpack.c.b16 %v1182, %v1180
        %v1343 = vpack.c.b16 %v1183, %v1181
        %v1344 = vpack.c.b16 %v1186, %v1184
        %v1345 = vpack.c.b16 %v1187, %v1185
        %v1346 = vpack.c.b16 %v1190, %v1188
        %v1347 = vpack.c.b16 %v1191, %v1189
        %v1348 = vpack.c.b16 %v1194, %v1192
        %v1349 = vpack.c.b16 %v1195, %v1193
        %v1350 = vpack.c.b16 %v1198, %v1196
        %v1351 = vpack.c.b16 %v1199, %v1197
        %v1352 = vpack.c.b16 %v1202, %v1200
        %v1353 = vpack.c.b16 %v1203, %v1201
        %v1354 = vpack.c.b16 %v1206, %v1204
        %v1355 = vpack.c.b16 %v1207, %v1205
        %v1356 = vpack.c.b16 %v1210, %v1208
        %v1357 = vpack.c.b16 %v1211, %v1209
        %v1358 = vpack.c.b16 %v1214, %v1212
        %v1359 = vpack.c.b16 %v1215, %v1213
        %1504 = vmatprep.subr.bf16.mxu0 %v1217
        %1505 = vmatpush1.bf16.msra.mxu0 %v1216
        %1506 = vmatprep.subr.bf16.mxu0 %v1219
        %1507 = vmatpush1.bf16.msra.mxu0 %v1218
        %1508 = vmatprep.subr.bf16.mxu0 %v1221
        %1509 = vmatpush1.bf16.msra.mxu0 %v1220
        %1510 = vmatprep.subr.bf16.mxu0 %v1223
        %1511 = vmatpush1.bf16.msra.mxu0 %v1222
        %1512 = vmatprep.subr.bf16.mxu0 %v1225
        %1513 = vmatpush1.bf16.msra.mxu0 %v1224
        %1514 = vmatprep.subr.bf16.mxu0 %v1227
        %1515 = vmatpush1.bf16.msra.mxu0 %v1226
        %1516 = vmatprep.subr.bf16.mxu0 %v1229
        %1517 = vmatpush1.bf16.msra.mxu0 %v1228
        %1518 = vmatprep.subr.bf16.mxu0 %v1231
        %1519 = vmatpush1.bf16.msra.mxu0 %v1230
        %1520 = vmatprep.subr.bf16.mxu0 %v1233
        %1521 = vmatpush1.bf16.msra.mxu0 %v1232
        %1522 = vmatprep.subr.bf16.mxu0 %v1235
        %1523 = vmatpush1.bf16.msra.mxu0 %v1234
        %1524 = vmatprep.subr.bf16.mxu0 %v1237
        %1525 = vmatpush1.bf16.msra.mxu0 %v1236
        %1526 = vmatprep.subr.bf16.mxu0 %v1239
        %1527 = vmatpush1.bf16.msra.mxu0 %v1238
        %1528 = vmatprep.subr.bf16.mxu0 %v1241
        %1529 = vmatpush1.bf16.msra.mxu0 %v1240
        %1530 = vmatprep.subr.bf16.mxu0 %v1243
        %1531 = vmatpush1.bf16.msra.mxu0 %v1242
        %1532 = vmatprep.subr.bf16.mxu0 %v1245
        %1533 = vmatpush1.bf16.msra.mxu0 %v1244
        %1534 = vmatprep.subr.bf16.mxu0 %v1247
        %1535 = vmatpush1.bf16.msra.mxu0 %v1246
        %1536 = vmatprep.mubr.bf16.mxu0 %v753
        %1537 = vmatmul.mubr.bf16.gmra.mrb[0].mxu0 %v570
        %v1538 = vpop.f32.mrb[0].mxu0
        %v1539 = vadd.f32 %v744, %v1538
        %v1540 = vpop.f32.mrb[0].mxu0
        %v1541 = vadd.f32 %v748, %v1540
        %v1542 = vpop.f32.mrb[0].mxu0
        %v1543 = vadd.f32 %v744, %v1542
        %v1544 = vpop.f32.mrb[0].mxu0
        %v1545 = vadd.f32 %v748, %v1544
        %1546 = vdwg.mxu0
        %1547 = vmatprep.subr.bf16.mxu0 %v1249
        %1548 = vmatpush1.bf16.msra.mxu0 %v1248
        %1549 = vmatprep.subr.bf16.mxu0 %v1251
        %1550 = vmatpush1.bf16.msra.mxu0 %v1250
        %1551 = vmatprep.subr.bf16.mxu0 %v1253
        %1552 = vmatpush1.bf16.msra.mxu0 %v1252
        %1553 = vmatprep.subr.bf16.mxu0 %v1255
        %1554 = vmatpush1.bf16.msra.mxu0 %v1254
        %1555 = vmatprep.subr.bf16.mxu0 %v1257
        %1556 = vmatpush1.bf16.msra.mxu0 %v1256
        %1557 = vmatprep.subr.bf16.mxu0 %v1259
        %1558 = vmatpush1.bf16.msra.mxu0 %v1258
        %1559 = vmatprep.subr.bf16.mxu0 %v1261
        %1560 = vmatpush1.bf16.msra.mxu0 %v1260
        %1561 = vmatprep.subr.bf16.mxu0 %v1263
        %1562 = vmatpush1.bf16.msra.mxu0 %v1262
        %1563 = vmatprep.subr.bf16.mxu0 %v1265
        %1564 = vmatpush1.bf16.msra.mxu0 %v1264
        %1565 = vmatprep.subr.bf16.mxu0 %v1267
        %1566 = vmatpush1.bf16.msra.mxu0 %v1266
        %1567 = vmatprep.subr.bf16.mxu0 %v1269
        %1568 = vmatpush1.bf16.msra.mxu0 %v1268
        %1569 = vmatprep.subr.bf16.mxu0 %v1271
        %1570 = vmatpush1.bf16.msra.mxu0 %v1270
        %1571 = vmatprep.subr.bf16.mxu0 %v1273
        %1572 = vmatpush1.bf16.msra.mxu0 %v1272
        %1573 = vmatprep.subr.bf16.mxu0 %v1275
        %1574 = vmatpush1.bf16.msra.mxu0 %v1274
        %1575 = vmatprep.subr.bf16.mxu0 %v1277
        %1576 = vmatpush1.bf16.msra.mxu0 %v1276
        %1577 = vmatprep.subr.bf16.mxu0 %v1279
        %1578 = vmatpush1.bf16.msra.mxu0 %v1278
        %1579 = vmatprep.mubr.bf16.mxu0 %v759
        %1580 = vmatmul.mubr.bf16.gmra.mrb[0].mxu0 %v756
        %v1581 = vpop.f32.mrb[0].mxu0
        %v1582 = vadd.f32 %v1539, %v1581
        %v1583 = vpop.f32.mrb[0].mxu0
        %v1584 = vadd.f32 %v1541, %v1583
        %v1585 = vpop.f32.mrb[0].mxu0
        %v1586 = vadd.f32 %v1543, %v1585
        %v1587 = vpop.f32.mrb[0].mxu0
        %v1588 = vadd.f32 %v1545, %v1587
        %1589 = vdwg.mxu0
        %1590 = vmatprep.subr.bf16.mxu0 %v1281
        %1591 = vmatpush1.bf16.msra.mxu0 %v1280
        %1592 = vmatprep.subr.bf16.mxu0 %v1283
        %1593 = vmatpush1.bf16.msra.mxu0 %v1282
        %1594 = vmatprep.subr.bf16.mxu0 %v1285
        %1595 = vmatpush1.bf16.msra.mxu0 %v1284
        %1596 = vmatprep.subr.bf16.mxu0 %v1287
        %1597 = vmatpush1.bf16.msra.mxu0 %v1286
        %1598 = vmatprep.subr.bf16.mxu0 %v1289
        %1599 = vmatpush1.bf16.msra.mxu0 %v1288
        %1600 = vmatprep.subr.bf16.mxu0 %v1291
        %1601 = vmatpush1.bf16.msra.mxu0 %v1290
        %1602 = vmatprep.subr.bf16.mxu0 %v1293
        %1603 = vmatpush1.bf16.msra.mxu0 %v1292
        %1604 = vmatprep.subr.bf16.mxu0 %v1295
        %1605 = vmatpush1.bf16.msra.mxu0 %v1294
        %1606 = vmatprep.subr.bf16.mxu0 %v1297
        %1607 = vmatpush1.bf16.msra.mxu0 %v1296
        %1608 = vmatprep.subr.bf16.mxu0 %v1299
        %1609 = vmatpush1.bf16.msra.mxu0 %v1298
        %1610 = vmatprep.subr.bf16.mxu0 %v1301
        %1611 = vmatpush1.bf16.msra.mxu0 %v1300
        %1612 = vmatprep.subr.bf16.mxu0 %v1303
        %1613 = vmatpush1.bf16.msra.mxu0 %v1302
        %1614 = vmatprep.subr.bf16.mxu0 %v1305
        %1615 = vmatpush1.bf16.msra.mxu0 %v1304
        %1616 = vmatprep.subr.bf16.mxu0 %v1307
        %1617 = vmatpush1.bf16.msra.mxu0 %v1306
        %1618 = vmatprep.subr.bf16.mxu0 %v1309
        %1619 = vmatpush1.bf16.msra.mxu0 %v1308
        %1620 = vmatprep.subr.bf16.mxu0 %v1311
        %1621 = vmatpush1.bf16.msra.mxu0 %v1310
        %1622 = vmatprep.mubr.bf16.mxu0 %v765
        %1623 = vmatmul.mubr.bf16.gmra.mrb[0].mxu0 %v762
        %v1624 = vpop.f32.mrb[0].mxu0
        %v1625 = vadd.f32 %v1582, %v1624
        %v1626 = vpop.f32.mrb[0].mxu0
        %v1627 = vadd.f32 %v1584, %v1626
        %v1628 = vpop.f32.mrb[0].mxu0
        %v1629 = vadd.f32 %v1586, %v1628
        %v1630 = vpop.f32.mrb[0].mxu0
        %v1631 = vadd.f32 %v1588, %v1630
        %1632 = vdwg.mxu0
        %1633 = vmatprep.subr.bf16.mxu0 %v1313
        %1634 = vmatpush1.bf16.msra.mxu0 %v1312
        %1635 = vmatprep.subr.bf16.mxu0 %v1315
        %1636 = vmatpush1.bf16.msra.mxu0 %v1314
        %1637 = vmatprep.subr.bf16.mxu0 %v1317
        %1638 = vmatpush1.bf16.msra.mxu0 %v1316
        %1639 = vmatprep.subr.bf16.mxu0 %v1319
        %1640 = vmatpush1.bf16.msra.mxu0 %v1318
        %1641 = vmatprep.subr.bf16.mxu0 %v1321
        %1642 = vmatpush1.bf16.msra.mxu0 %v1320
        %1643 = vmatprep.subr.bf16.mxu0 %v1323
        %1644 = vmatpush1.bf16.msra.mxu0 %v1322
        %1645 = vmatprep.subr.bf16.mxu0 %v1325
        %1646 = vmatpush1.bf16.msra.mxu0 %v1324
        %1647 = vmatprep.subr.bf16.mxu0 %v1327
        %1648 = vmatpush1.bf16.msra.mxu0 %v1326
        %1649 = vmatprep.subr.bf16.mxu0 %v1329
        %1650 = vmatpush1.bf16.msra.mxu0 %v1328
        %1651 = vmatprep.subr.bf16.mxu0 %v1331
        %1652 = vmatpush1.bf16.msra.mxu0 %v1330
        %1653 = vmatprep.subr.bf16.mxu0 %v1333
        %1654 = vmatpush1.bf16.msra.mxu0 %v1332
        %1655 = vmatprep.subr.bf16.mxu0 %v1335
        %1656 = vmatpush1.bf16.msra.mxu0 %v1334
        %1657 = vmatprep.subr.bf16.mxu0 %v1337
        %1658 = vmatpush1.bf16.msra.mxu0 %v1336
        %1659 = vmatprep.subr.bf16.mxu0 %v1339
        %1660 = vmatpush1.bf16.msra.mxu0 %v1338
        %1661 = vmatprep.subr.bf16.mxu0 %v1341
        %1662 = vmatpush1.bf16.msra.mxu0 %v1340
        %1663 = vmatprep.subr.bf16.mxu0 %v1343
        %1664 = vmatpush1.bf16.msra.mxu0 %v1342
        %1665 = vmatprep.mubr.bf16.mxu0 %v771
        %1666 = vmatmul.mubr.bf16.gmra.mrb[0].mxu0 %v768
        %v1667 = vpop.f32.mrb[0].mxu0
        %v1668 = vadd.f32 %v1625, %v1667
        %v1669 = vpop.f32.mrb[0].mxu0
        %v1670 = vadd.f32 %v1627, %v1669
        %v1671 = vpop.f32.mrb[0].mxu0
        %v1672 = vadd.f32 %v1629, %v1671
        %v1673 = vpop.f32.mrb[0].mxu0
        %v1674 = vadd.f32 %v1631, %v1673
        %1675 = vdwg.mxu0
        %1676 = vmatprep.subr.bf16.mxu0 %v1345
        %1677 = vmatpush1.bf16.msra.mxu0 %v1344
        %1678 = vmatprep.subr.bf16.mxu0 %v1347
        %1679 = vmatpush1.bf16.msra.mxu0 %v1346
        %1680 = vmatprep.subr.bf16.mxu0 %v1349
        %1681 = vmatpush1.bf16.msra.mxu0 %v1348
        %1682 = vmatprep.subr.bf16.mxu0 %v1351
        %1683 = vmatpush1.bf16.msra.mxu0 %v1350
        %1684 = vmatprep.subr.bf16.mxu0 %v1353
        %1685 = vmatpush1.bf16.msra.mxu0 %v1352
        %1686 = vmatprep.subr.bf16.mxu0 %v1355
        %1687 = vmatpush1.bf16.msra.mxu0 %v1354
        %1688 = vmatprep.subr.bf16.mxu0 %v1357
        %1689 = vmatpush1.bf16.msra.mxu0 %v1356
        %1690 = vmatprep.subr.bf16.mxu0 %v1359
        %1691 = vmatpush1.bf16.msra.mxu0 %v1358
        %1692 = vmatprep.subr.bf16.mxu0 0
        %1693 = vmatpush1.bf16.msra.mxu0 0
        %1694 = vmatprep.subr.bf16.mxu0 0
        %1695 = vmatpush1.bf16.msra.mxu0 0
        %1696 = vmatprep.subr.bf16.mxu0 0
        %1697 = vmatpush1.bf16.msra.mxu0 0
        %1698 = vmatprep.subr.bf16.mxu0 0
        %1699 = vmatpush1.bf16.msra.mxu0 0
        %1700 = vmatprep.subr.bf16.mxu0 0
        %1701 = vmatpush1.bf16.msra.mxu0 0
        %1702 = vmatprep.subr.bf16.mxu0 0
        %1703 = vmatpush1.bf16.msra.mxu0 0
        %1704 = vmatprep.subr.bf16.mxu0 0
        %1705 = vmatpush1.bf16.msra.mxu0 0
        %1706 = vmatprep.subr.bf16.mxu0 0
        %1707 = vmatpush1.bf16.msra.mxu0 0
        %1708 = vmatprep.mubr.bf16.mxu0 0
        %1709 = vmatmul.mubr.bf16.gmra.mrb[0].mxu0 %v774
        %v1710 = vpop.f32.mrb[0].mxu0
        %v1711 = vadd.f32 %v1668, %v1710
        %v1712 = vpop.f32.mrb[0].mxu0
        %v1713 = vadd.f32 %v1670, %v1712
        %v1714 = vpop.f32.mrb[0].mxu0
        %v1715 = vadd.f32 %v1672, %v1714
        %v1716 = vpop.f32.mrb[0].mxu0
        %v1717 = vadd.f32 %v1674, %v1716
        %1718 = vdwg.mxu0
        %v1719 = vmax.f32 %v1711, 0.0
        %v1720 = vmax.f32 %v1713, 0.0
        %v1721 = vmax.f32 %v1715, 0.0
        %v1722 = vmax.f32 %v1717, 0.0
        %v1723 = vpack.c.bf16 %v1721, %v1719
        %v1724 = vpack.c.bf16 %v1722, %v1720
        %v1725 = vld [vmem:[#allocation10] sm:$0xf]
        %v1726 = vld [vmem:[#allocation10 + $0x4] sm:$0xf]
        %v1727 = vld [vmem:[#allocation10 + $0x8] sm:$0xf]
        %v1728 = vld [vmem:[#allocation10 + $0xc] sm:$0xf]
        %v1729 = vld [vmem:[#allocation10 + $0x10] sm:$0xf]
        %v1730 = vld [vmem:[#allocation10 + $0x14] sm:$0xf]
        %v1731 = vld [vmem:[#allocation10 + $0x18] sm:$0xf]
        %v1732 = vld [vmem:[#allocation10 + $0x1c] sm:$0xf]
        %v1733 = vld [vmem:[#allocation10 + $0x20] sm:$0xf]
        %v1734 = vld [vmem:[#allocation10 + $0x24] sm:$0xf]
        %v1735 = vld [vmem:[#allocation10 + $0x28] sm:$0xf]
        %v1736 = vld [vmem:[#allocation10 + $0x2c] sm:$0xf]
        %v1737 = vld [vmem:[#allocation10 + $0x30] sm:$0xf]
        %v1738 = vld [vmem:[#allocation10 + $0x34] sm:$0xf]
        %v1739 = vld [vmem:[#allocation10 + $0x38] sm:$0xf]
        %v1740 = vld [vmem:[#allocation10 + $0x3c] sm:$0xf]
        %v1741 = vld [vmem:[#allocation10 + $0x40] sm:$0xf]
        %v1742 = vld [vmem:[#allocation10 + $0x44] sm:$0xf]
        %v1743 = vld [vmem:[#allocation10 + $0x48] sm:$0xf]
        %v1744 = vld [vmem:[#allocation10 + $0x4c] sm:$0xf]
        %v1745 = vld [vmem:[#allocation10 + $0x50] sm:$0xf]
        %v1746 = vld [vmem:[#allocation10 + $0x54] sm:$0xf]
        %v1747 = vld [vmem:[#allocation10 + $0x58] sm:$0xf]
        %v1748 = vld [vmem:[#allocation10 + $0x5c] sm:$0xf]
        %v1749 = vld [vmem:[#allocation10 + $0x60] sm:$0xf]
        %v1750 = vld [vmem:[#allocation10 + $0x64] sm:$0xf]
        %v1751 = vld [vmem:[#allocation10 + $0x68] sm:$0xf]
        %v1752 = vld [vmem:[#allocation10 + $0x6c] sm:$0xf]
        %v1753 = vld [vmem:[#allocation10 + $0x70] sm:$0xf]
        %v1754 = vld [vmem:[#allocation10 + $0x74] sm:$0xf]
        %v1755 = vld [vmem:[#allocation10 + $0x78] sm:$0xf]
        %v1756 = vld [vmem:[#allocation10 + $0x7c] sm:$0xf]
        %v1757 = vld [vmem:[%s6] sm:$0x1]
        %v1759 = vlaneseq
        %v1760 = vshrl.u32 %v1759, 7
        %v1761 = vsub.s32 0, %v1760
        %v1762 = vrot.slane %v1757, %v1761
        %v1796 = vunpack.c.l.b16 %v1725
        %v1797 = vunpack.c.l.b16 %v1726
        %v1798 = vunpack.c.l.b16 %v1727
        %v1799 = vunpack.c.l.b16 %v1728
        %v1800 = vunpack.c.l.b16 %v1729
        %v1801 = vunpack.c.l.b16 %v1730
        %v1802 = vunpack.c.l.b16 %v1731
        %v1803 = vunpack.c.l.b16 %v1732
        %v1804 = vunpack.c.l.b16 %v1733
        %v1805 = vunpack.c.l.b16 %v1734
        %v1806 = vunpack.c.l.b16 %v1735
        %v1807 = vunpack.c.l.b16 %v1736
        %v1808 = vunpack.c.l.b16 %v1737
        %v1809 = vunpack.c.l.b16 %v1738
        %v1810 = vunpack.c.l.b16 %v1739
        %v1811 = vunpack.c.l.b16 %v1740
        %v1812 = vunpack.c.l.b16 %v1741
        %v1813 = vunpack.c.l.b16 %v1742
        %v1814 = vunpack.c.l.b16 %v1743
        %v1815 = vunpack.c.l.b16 %v1744
        %v1816 = vunpack.c.l.b16 %v1745
        %v1817 = vunpack.c.l.b16 %v1746
        %v1818 = vunpack.c.l.b16 %v1747
        %v1819 = vunpack.c.l.b16 %v1748
        %v1820 = vunpack.c.l.b16 %v1749
        %v1821 = vunpack.c.l.b16 %v1750
        %v1822 = vunpack.c.l.b16 %v1751
        %v1823 = vunpack.c.l.b16 %v1752
        %v1824 = vunpack.c.l.b16 %v1753
        %v1825 = vunpack.c.l.b16 %v1754
        %v1826 = vunpack.c.l.b16 %v1755
        %v1827 = vunpack.c.l.b16 %v1756
        %v1828 = vpack.c.b16 %v1797, %v1796
        %v1829 = vpack.c.b16 %v1799, %v1798
        %v1830 = vpack.c.b16 %v1801, %v1800
        %v1831 = vpack.c.b16 %v1803, %v1802
        %v1832 = vpack.c.b16 %v1805, %v1804
        %v1833 = vpack.c.b16 %v1807, %v1806
        %v1834 = vpack.c.b16 %v1809, %v1808
        %v1835 = vpack.c.b16 %v1811, %v1810
        %v1836 = vpack.c.b16 %v1813, %v1812
        %v1837 = vpack.c.b16 %v1815, %v1814
        %v1838 = vpack.c.b16 %v1817, %v1816
        %v1839 = vpack.c.b16 %v1819, %v1818
        %v1840 = vpack.c.b16 %v1821, %v1820
        %v1841 = vpack.c.b16 %v1823, %v1822
        %v1842 = vpack.c.b16 %v1825, %v1824
        %v1843 = vpack.c.b16 %v1827, %v1826
        %1860 = vmatprep.subr.bf16.mxu0 0
        %1861 = vmatpush1.bf16.msra.mxu0 %v1828
        %1862 = vmatprep.subr.bf16.mxu0 0
        %1863 = vmatpush1.bf16.msra.mxu0 %v1829
        %1864 = vmatprep.subr.bf16.mxu0 0
        %1865 = vmatpush1.bf16.msra.mxu0 %v1830
        %1866 = vmatprep.subr.bf16.mxu0 0
        %1867 = vmatpush1.bf16.msra.mxu0 %v1831
        %1868 = vmatprep.subr.bf16.mxu0 0
        %1869 = vmatpush1.bf16.msra.mxu0 %v1832
        %1870 = vmatprep.subr.bf16.mxu0 0
        %1871 = vmatpush1.bf16.msra.mxu0 %v1833
        %1872 = vmatprep.subr.bf16.mxu0 0
        %1873 = vmatpush1.bf16.msra.mxu0 %v1834
        %1874 = vmatprep.subr.bf16.mxu0 0
        %1875 = vmatpush1.bf16.msra.mxu0 %v1835
        %1876 = vmatprep.subr.bf16.mxu0 0
        %1877 = vmatpush1.bf16.msra.mxu0 %v1836
        %1878 = vmatprep.subr.bf16.mxu0 0
        %1879 = vmatpush1.bf16.msra.mxu0 %v1837
        %1880 = vmatprep.subr.bf16.mxu0 0
        %1881 = vmatpush1.bf16.msra.mxu0 %v1838
        %1882 = vmatprep.subr.bf16.mxu0 0
        %1883 = vmatpush1.bf16.msra.mxu0 %v1839
        %1884 = vmatprep.subr.bf16.mxu0 0
        %1885 = vmatpush1.bf16.msra.mxu0 %v1840
        %1886 = vmatprep.subr.bf16.mxu0 0
        %1887 = vmatpush1.bf16.msra.mxu0 %v1841
        %1888 = vmatprep.subr.bf16.mxu0 0
        %1889 = vmatpush1.bf16.msra.mxu0 %v1842
        %1890 = vmatprep.subr.bf16.mxu0 0
        %1891 = vmatpush1.bf16.msra.mxu0 %v1843
        %1892 = vmatprep.mubr.bf16.mxu0 %v1724
        %1893 = vmatmul.mubr.bf16.gmra.mrb[0].mxu0 %v1723
        %v1894 = vpop.f32.mrb[0].mxu0
        %v1895 = vadd.f32 %v1762, %v1894
        %v1896 = vpop.f32.mrb[0].mxu0
        %v1897 = vpop.f32.mrb[0].mxu0
        %v1898 = vadd.f32 %v1762, %v1897
        %v1899 = vpop.f32.mrb[0].mxu0
        %1900 = vdwg.mxu0
        %v1901 = vadd.f32 %v1895, %v524
        %v1902 = vadd.f32 %v1898, %v525
        %1903 = vadd.xlane.f32.xlu0 %v1901
        %v1904 = vpop.xlane.xlu0 %1903
        %1905 = vadd.xlane.f32.xlu0 %v1902
        %v1906 = vpop.xlane.xlu0 %1905
        %v1907 = vrcp.pop 128.0
        %v1908 = vmul.f32 %v1904, %v1907
        %v1909 = vmul.f32 %v1906, %v1907
        %v1910 = vsub.f32 %v1901, %v1908
        %v1911 = vsub.f32 %v1902, %v1909
        %v1912 = vmul.f32 %v1910, %v1910
        %v1913 = vmul.f32 %v1911, %v1911
        %1914 = vadd.xlane.f32.xlu0 %v1912
        %v1915 = vpop.xlane.xlu0 %1914
        %1916 = vadd.xlane.f32.xlu0 %v1913
        %v1917 = vpop.xlane.xlu0 %1916
        %v1918 = vmul.f32 %v1915, %v1907
        %v1919 = vmul.f32 %v1917, %v1907
        %v1920 = vadd.f32 %v1918, 1e-05
        %v1921 = vadd.f32 %v1919, 1e-05
        %v1922 = vrsqrt.pop %v1920
        %v1923 = vrsqrt.pop %v1921
        %v1924 = vmul.f32 %v1910, %v1922
        %v1925 = vmul.f32 %v1911, %v1923
        %v1926 = vld [vmem:[%s7] sm:$0x1]
        %v1928 = vlaneseq
        %v1929 = vshrl.u32 %v1928, 7
        %v1930 = vsub.s32 0, %v1929
        %v1931 = vrot.slane %v1926, %v1930
        %v1933 = vmul.f32 %v1924, %v1931
        %v1934 = vmul.f32 %v1925, %v1931
        %v1935 = vld [vmem:[%s8] sm:$0x1]
        %v1937 = vlaneseq
        %v1938 = vshrl.u32 %v1937, 7
        %v1939 = vsub.s32 0, %v1938
        %v1940 = vrot.slane %v1935, %v1939
        %v1942 = vadd.f32 %v1933, %v1940
        %v1943 = vadd.f32 %v1934, %v1940
        %1944 = vst [vmem:[%s500] sm:$0xff] %v1942
        %1945 = vst [vmem:[%s500 + $0x8] sm:$0xff] %v1943
        %s1946 = sand.u32 %s278, 1
        %s1947 = scalar_lea.sflag [#allocation4], %s1946
        %s1948 = sand.u32 %s278, 1
        %s1949 = smul.addr %s1948, 16
        %s1950 = scalar_lea.vmem [#allocation11], %s1949
        // Predicated region
        $region77: #{tpu_custom_call.1} parent=55 // pred_check
          %p1951 = pneg %p288
        $region78: #{tpu_custom_call.1} parent=55 // pred_check_branch
          %1953 = sbr.rel (%p1951) target = $region80
        $region79: #{tpu_custom_call.1} parent=55 // pred_region
          %s1954 = smul.u32 2, %s35
          %s1956 = ssub.s32 256, 256
          %1957 = vsyncadd %s1947, %s1956
          %s1958 = smul.addr %s34, 4
          %s1959 = sadd.s32 %s1954, %s1958
          %s1960 = smul.addr %s1959, 128
          %s1961 = scalar_lea.hbm %s9, %s1960
          %s1962 = sshll.u32 %s1950, 4
          %s1963 = int_to_ptr.vmem [resolvable:$true] %s1962
          %1968 = dma.vmem_to_hbm [thread:$0]  %s1963, 256, %s1961, %s1947, 128, 128, 8
        $region80: #{tpu_custom_call.1} parent=55 // pred_fallthru
          _
      $region56: #{tpu_custom_call.1} parent=5 // pred_fallthru
        _
      %p1969 = scmp.le.s32.totalorder 2, %s25
      // Predicated region
      $region81: #{tpu_custom_call.1} parent=5 // pred_check
        %p1970 = pneg %p1969
      $region82: #{tpu_custom_call.1} parent=5 // pred_check_branch
        %1972 = sbr.rel (%p1970) target = $region84
      $region83: #{tpu_custom_call.1} parent=5 // pred_region
        %s1973 = ssub.s32 %s25, 2
        // Predicated region
        $region85: #{tpu_custom_call.1} parent=83 // pred_check
          %p1974 = pneg %p294
        $region86: #{tpu_custom_call.1} parent=83 // pred_check_branch
          %1976 = sbr.rel (%p1974) target = $region88
        $region87: #{tpu_custom_call.1} parent=83 // pred_region
          %s1977 = sand.u32 %s279, 1
          %s1978 = scalar_lea.sflag [#allocation4], %s1977
          %s1979 = sand.u32 %s279, 1
          %s1980 = smul.addr %s1979, 16
          %s1981 = scalar_lea.vmem [#allocation11], %s1980
          %1982 = dma.done %s1978, 256
        $region88: #{tpu_custom_call.1} parent=83 // pred_fallthru
          _
      $region84: #{tpu_custom_call.1} parent=5 // pred_fallthru
        _
    $region6: #{tpu_custom_call.1} parent=1 // loop_footer
      %s29 = sadd.s32 1, %s25
    $region7: #{tpu_custom_call.1} parent=1 // loop_footer_branch
      %24 = sbr.rel target = $region3
    $region8: #{tpu_custom_call.1} parent=1 // loop_exit
      _
    %1983 = vsyncpa [#allocation3], 1
    %s1984 = scalar_lea.sflag [#allocation3], 1
    %1985 = vsyncpa %s1984, 1
    %1986 = vsyncpa [#allocation6], 1
    %s1987 = scalar_lea.sflag [#allocation6], 1
    %1988 = vsyncpa %s1987, 1
    %1989 = vsyncpa [#allocation9], 1
    %1990 = vsyncpa [#allocation4], 1
    %s1991 = scalar_lea.sflag [#allocation4], 1
    %1992 = vsyncpa %s1991, 1

</llo_original>
